<compile_context>
chip_gen: v7x
topology: tpu7x:2x2x1
jax: 0.10.0
libtpu: 0.0.40
codegen_flags: <defaults>
</compile_context>

<pallas_src>
import functools

import jax
import jax.numpy as jnp
from jax.experimental import pallas as pl
from jax.experimental.pallas import tpu as pltpu

HIDDEN = 64
FC_HIDDEN = 32
NUM_LAYERS = 3
INPUT_SIZE = 1
SUBLANE = 8  # f32 sublane tile


# ---------------------------------------------------------------------------
# One LSTM layer, fully unrolled over T steps (runs inside the fused kernel).
# PyTorch gate order (i, f, g, o); gx already contains x@W_ih + b_ih + b_hh.
# h0 = c0 = 0.
# ---------------------------------------------------------------------------
def _run_lstm_layer(gx, w_hh, *, T, BP, H, collect_seq):
    h = jnp.zeros((BP, H), jnp.float32)
    c = jnp.zeros((BP, H), jnp.float32)
    hs = []
    for t in range(T):                               # static T -> unrolled
        gates = (gx[t * BP:(t + 1) * BP, :]          # aligned 8-row slice
                 + jnp.dot(h, w_hh, preferred_element_type=jnp.float32))
        sig = jax.nn.sigmoid(gates)                  # full-width EUP work
        tnh = jnp.tanh(gates)
        i_g = sig[:, 0 * H:1 * H]
        f_g = sig[:, 1 * H:2 * H]
        g_g = tnh[:, 2 * H:3 * H]
        o_g = sig[:, 3 * H:4 * H]
        c = f_g * c + i_g * g_g
        h = o_g * jnp.tanh(c)
        if collect_seq:
            hs.append(h)
    return h, hs


# ---------------------------------------------------------------------------
# Fused kernel: 3 stacked LSTM layers + Linear(64->32)+ReLU+Linear(32->1).
# ---------------------------------------------------------------------------
def _fused_lstm_fc_kernel(x_ref,
                          wih0_ref, whh0_ref, b0_ref,
                          wih1_ref, whh1_ref, b1_ref,
                          wih2_ref, whh2_ref, b2_ref,
                          fw1_ref, fb1_ref, fw2_ref, fb2_ref,
                          o_ref, *, T, BP, H):
    # Biases broadcast once per layer over all T*BP rows (hoisted out of the
    # recurrence; JAX does not CSE broadcast_in_dim inside unrolled loops).
    # Layer 0: input_size == 1 -> x @ W_ih is an outer product (VPU broadcast,
    # keeps the degenerate K=1 matmul off the MXU).
    gx0 = x_ref[...] * wih0_ref[...] + b0_ref[...]   # (T*BP,1)*(1,4H) -> (T*BP,4H)
    _, hs0 = _run_lstm_layer(gx0, whh0_ref[...],
                             T=T, BP=BP, H=H, collect_seq=True)

    # Layer 1: hoisted input projection, one (T*BP, H) @ (H, 4H) MXU matmul.
    s0 = jnp.concatenate(hs0, axis=0)                # (T*BP, H), aligned pieces
    gx1 = jnp.dot(s0, wih1_ref[...],
                  preferred_element_type=jnp.float32) + b1_ref[...]
    _, hs1 = _run_lstm_layer(gx1, whh1_ref[...],
                             T=T, BP=BP, H=H, collect_seq=True)

    # Layer 2: only the final hidden state is consumed by the FC head,
    # so the output sequence is not materialized.
    s1 = jnp.concatenate(hs1, axis=0)
    gx2 = jnp.dot(s1, wih2_ref[...],
                  preferred_element_type=jnp.float32) + b2_ref[...]
    h_last, _ = _run_lstm_layer(gx2, whh2_ref[...],
                                T=T, BP=BP, H=H, collect_seq=False)

    # FC head (fused; no separate pallas_call).
    hid = (jnp.dot(h_last, fw1_ref[...], preferred_element_type=jnp.float32)
           + fb1_ref[...])
    hid = jnp.maximum(hid, 0.0)
    o_ref[...] = (jnp.dot(hid, fw2_ref[...], preferred_element_type=jnp.float32)
                  + fb2_ref[...])


# ---------------------------------------------------------------------------
# Forward pass equivalent to LSTMPredictor.forward
# ---------------------------------------------------------------------------
@jax.jit
def lstm_predictor_forward(params, x_bti):
    # x_bti: (B, T, input_size), batch_first like PyTorch. h0 = c0 = 0.
    B, T, I = x_bti.shape
    BP = ((B + SUBLANE - 1) // SUBLANE) * SUBLANE   # pad batch to sublane tile

    # Wrapper-side layout plumbing: time-major + zero-padded batch rows, so
    # every in-kernel tile is sublane-aligned. Padded rows are sliced off below.
    x_tbi = jnp.transpose(x_bti, (1, 0, 2))                    # (T, B, I)
    x_pad = jnp.pad(x_tbi, ((0, 0), (0, BP - B), (0, 0)))      # (T, BP, I)
    x_col = x_pad.reshape(T * BP, I)                           # rows = t*BP + b

    vmem = pltpu.MemorySpace.VMEM
    out = pl.pallas_call(
        functools.partial(_fused_lstm_fc_kernel, T=T, BP=BP, H=HIDDEN),
        out_shape=jax.ShapeDtypeStruct((BP, 1), jnp.float32),
        in_specs=[pl.BlockSpec(memory_space=vmem) for _ in range(14)],
        out_specs=pl.BlockSpec(memory_space=vmem),
    )(x_col,
      params["w_ih_0"], params["w_hh_0"], params["b_0"],
      params["w_ih_1"], params["w_hh_1"], params["b_1"],
      params["w_ih_2"], params["w_hh_2"], params["b_2"],
      params["fc_w1"], params["fc_b1"], params["fc_w2"], params["fc_b2"])
    return out[:B]                                             # (B, 1)


# ---------------------------------------------------------------------------
# Pure-JAX reference (same math, layer-by-layer) for a correctness check.
# ---------------------------------------------------------------------------
def lstm_predictor_reference(params, x_bti):
    B, T, _ = x_bti.shape
    H = HIDDEN
    seq = x_bti
    for layer in range(NUM_LAYERS):
        w_ih = params[f"w_ih_{layer}"]
        w_hh = params[f"w_hh_{layer}"]
        b = params[f"b_{layer}"]
        h = jnp.zeros((B, H), jnp.float32)
        c = jnp.zeros((B, H), jnp.float32)
        outs = []
        for t in range(T):
            gates = seq[:, t, :] @ w_ih + h @ w_hh + b
            i_g = jax.nn.sigmoid(gates[:, 0 * H:1 * H])
            f_g = jax.nn.sigmoid(gates[:, 1 * H:2 * H])
            g_g = jnp.tanh(gates[:, 2 * H:3 * H])
            o_g = jax.nn.sigmoid(gates[:, 3 * H:4 * H])
            c = f_g * c + i_g * g_g
            h = o_g * jnp.tanh(c)
            outs.append(h)
        seq = jnp.stack(outs, axis=1)
    hid = jnp.maximum(seq[:, -1, :] @ params["fc_w1"] + params["fc_b1"], 0.0)
    return hid @ params["fc_w2"] + params["fc_b2"]


# ---------------------------------------------------------------------------
# Parameter init (deterministic, PyTorch-style uniform(-1/sqrt(fan), 1/sqrt(fan)))
# Weights are stored pre-transposed (in_features, 4H) so kernels do x @ W.
# ---------------------------------------------------------------------------
def init_params(key):
    params = {}
    k_lstm = 1.0 / jnp.sqrt(float(HIDDEN))
    for layer in range(NUM_LAYERS):
        in_dim = INPUT_SIZE if layer == 0 else HIDDEN
        key, k1, k2, k3, k4 = jax.random.split(key, 5)
        params[f"w_ih_{layer}"] = jax.random.uniform(
            k1, (in_dim, 4 * HIDDEN), jnp.float32, -k_lstm, k_lstm)
        params[f"w_hh_{layer}"] = jax.random.uniform(
            k2, (HIDDEN, 4 * HIDDEN), jnp.float32, -k_lstm, k_lstm)
        b_ih = jax.random.uniform(k3, (4 * HIDDEN,), jnp.float32, -k_lstm, k_lstm)
        b_hh = jax.random.uniform(k4, (4 * HIDDEN,), jnp.float32, -k_lstm, k_lstm)
        params[f"b_{layer}"] = (b_ih + b_hh).reshape(1, 4 * HIDDEN)

    key, k1, k2, k3, k4 = jax.random.split(key, 5)
    kf1 = 1.0 / jnp.sqrt(float(HIDDEN))
    kf2 = 1.0 / jnp.sqrt(float(FC_HIDDEN))
    params["fc_w1"] = jax.random.uniform(k1, (HIDDEN, FC_HIDDEN), jnp.float32, -kf1, kf1)
    params["fc_b1"] = jax.random.uniform(k2, (1, FC_HIDDEN), jnp.float32, -kf1, kf1)
    params["fc_w2"] = jax.random.uniform(k3, (FC_HIDDEN, 1), jnp.float32, -kf2, kf2)
    params["fc_b2"] = jax.random.uniform(k4, (1, 1), jnp.float32, -kf2, kf2)
    return params


if __name__ == "__main__":
    key = jax.random.PRNGKey(0)
    key, xkey, pkey = jax.random.split(key, 3)

    B, T = 2, 8
    x = jax.random.normal(xkey, (B, T, INPUT_SIZE), jnp.float32)
    params = init_params(pkey)

    out = lstm_predictor_forward(params, x)
    out = jax.block_until_ready(out)
    assert out.shape == (B, 1), out.shape
    assert out.dtype == jnp.float32
    assert bool(jnp.all(jnp.isfinite(out)))

    ref = lstm_predictor_reference(params, x)
    assert bool(jnp.allclose(out, ref, rtol=1e-3, atol=1e-3)), (out, ref)

    print("KERNEL_OK")
</pallas_src>

<mosaic_0001>
module attributes {stable_mosaic.version = 11 : i64} {
  func.func @_fused_lstm_fc_kernel(%arg0: memref<64x1xf32, #tpu.memory_space<vmem>>, %arg1: memref<1x256xf32, #tpu.memory_space<vmem>>, %arg2: memref<64x256xf32, #tpu.memory_space<vmem>>, %arg3: memref<1x256xf32, #tpu.memory_space<vmem>>, %arg4: memref<64x256xf32, #tpu.memory_space<vmem>>, %arg5: memref<64x256xf32, #tpu.memory_space<vmem>>, %arg6: memref<1x256xf32, #tpu.memory_space<vmem>>, %arg7: memref<64x256xf32, #tpu.memory_space<vmem>>, %arg8: memref<64x256xf32, #tpu.memory_space<vmem>>, %arg9: memref<1x256xf32, #tpu.memory_space<vmem>>, %arg10: memref<64x32xf32, #tpu.memory_space<vmem>>, %arg11: memref<1x32xf32, #tpu.memory_space<vmem>>, %arg12: memref<32x1xf32, #tpu.memory_space<vmem>>, %arg13: memref<1x1xf32, #tpu.memory_space<vmem>>, %arg14: memref<8x1xf32, #tpu.memory_space<vmem>>) attributes {dimension_semantics = [], scalar_prefetch = 0 : i64, scratch_operands = 0 : i64, tpu.core_type = #tpu.core_type<tc>} {
    %c0 = arith.constant 0 : index
    %c0_0 = arith.constant 0 : index
    %0 = vector.load %arg0[%c0, %c0_0] : memref<64x1xf32, #tpu.memory_space<vmem>>, vector<64x1xf32>
    %c0_1 = arith.constant 0 : index
    %c0_2 = arith.constant 0 : index
    %1 = vector.load %arg1[%c0_1, %c0_2] : memref<1x256xf32, #tpu.memory_space<vmem>>, vector<1x256xf32>
    %2 = vector.broadcast %0 : vector<64x1xf32> to vector<64x256xf32>
    %3 = vector.broadcast %1 : vector<1x256xf32> to vector<64x256xf32>
    %4 = arith.mulf %2, %3 : vector<64x256xf32>
    %c0_3 = arith.constant 0 : index
    %c0_4 = arith.constant 0 : index
    %5 = vector.load %arg3[%c0_3, %c0_4] : memref<1x256xf32, #tpu.memory_space<vmem>>, vector<1x256xf32>
    %6 = vector.broadcast %5 : vector<1x256xf32> to vector<64x256xf32>
    %7 = arith.addf %4, %6 : vector<64x256xf32>
    %c0_5 = arith.constant 0 : index
    %c0_6 = arith.constant 0 : index
    %8 = vector.load %arg2[%c0_5, %c0_6] : memref<64x256xf32, #tpu.memory_space<vmem>>, vector<64x256xf32>
    %cst = arith.constant 0.000000e+00 : f32
    %9 = vector.broadcast %cst : f32 to vector<8x64xf32>
    %cst_7 = arith.constant 0.000000e+00 : f32
    %10 = vector.broadcast %cst_7 : f32 to vector<8x64xf32>
    %11 = vector.extract_strided_slice %7 {offsets = [0, 0], sizes = [8, 256], strides = [1, 1]} : vector<64x256xf32> to vector<8x256xf32>
    %cst_8 = arith.constant dense<0.000000e+00> : vector<8x256xf32>
    %12 = tpu.matmul %9, %8, %cst_8 {dimension_numbers = #tpu.dot_dimension_numbers<[1], [0], [0], [1], [0, 0, 1, 1], [], []>} : vector<8x64xf32>, vector<64x256xf32>, vector<8x256xf32> -> vector<8x256xf32>
    %13 = arith.addf %11, %12 : vector<8x256xf32>
    %14 = arith.negf %13 : vector<8x256xf32>
    %15 = math.exp %14 : vector<8x256xf32>
    %cst_9 = arith.constant 1.000000e+00 : f32
    %16 = vector.broadcast %cst_9 : f32 to vector<8x256xf32>
    %17 = arith.addf %16, %15 : vector<8x256xf32>
    %18 = arith.divf %16, %17 : vector<8x256xf32>
    %19 = math.tanh %13 : vector<8x256xf32>
    %20 = vector.extract_strided_slice %18 {offsets = [0, 0], sizes = [8, 64], strides = [1, 1]} : vector<8x256xf32> to vector<8x64xf32>
    %21 = vector.extract_strided_slice %18 {offsets = [0, 64], sizes = [8, 64], strides = [1, 1]} : vector<8x256xf32> to vector<8x64xf32>
    %22 = vector.extract_strided_slice %19 {offsets = [0, 128], sizes = [8, 64], strides = [1, 1]} : vector<8x256xf32> to vector<8x64xf32>
    %23 = vector.extract_strided_slice %18 {offsets = [0, 192], sizes = [8, 64], strides = [1, 1]} : vector<8x256xf32> to vector<8x64xf32>
    %24 = arith.mulf %21, %10 : vector<8x64xf32>
    %25 = arith.mulf %20, %22 : vector<8x64xf32>
    %26 = arith.addf %24, %25 : vector<8x64xf32>
    %27 = math.tanh %26 : vector<8x64xf32>
    %28 = arith.mulf %23, %27 : vector<8x64xf32>
    %29 = vector.extract_strided_slice %7 {offsets = [8, 0], sizes = [8, 256], strides = [1, 1]} : vector<64x256xf32> to vector<8x256xf32>
    %cst_10 = arith.constant dense<0.000000e+00> : vector<8x256xf32>
    %30 = tpu.matmul %28, %8, %cst_10 {dimension_numbers = #tpu.dot_dimension_numbers<[1], [0], [0], [1], [0, 0, 1, 1], [], []>} : vector<8x64xf32>, vector<64x256xf32>, vector<8x256xf32> -> vector<8x256xf32>
    %31 = arith.addf %29, %30 : vector<8x256xf32>
    %32 = arith.negf %31 : vector<8x256xf32>
    %33 = math.exp %32 : vector<8x256xf32>
    %cst_11 = arith.constant 1.000000e+00 : f32
    %34 = vector.broadcast %cst_11 : f32 to vector<8x256xf32>
    %35 = arith.addf %34, %33 : vector<8x256xf32>
    %36 = arith.divf %34, %35 : vector<8x256xf32>
    %37 = math.tanh %31 : vector<8x256xf32>
    %38 = vector.extract_strided_slice %36 {offsets = [0, 0], sizes = [8, 64], strides = [1, 1]} : vector<8x256xf32> to vector<8x64xf32>
    %39 = vector.extract_strided_slice %36 {offsets = [0, 64], sizes = [8, 64], strides = [1, 1]} : vector<8x256xf32> to vector<8x64xf32>
    %40 = vector.extract_strided_slice %37 {offsets = [0, 128], sizes = [8, 64], strides = [1, 1]} : vector<8x256xf32> to vector<8x64xf32>
    %41 = vector.extract_strided_slice %36 {offsets = [0, 192], sizes = [8, 64], strides = [1, 1]} : vector<8x256xf32> to vector<8x64xf32>
    %42 = arith.mulf %39, %26 : vector<8x64xf32>
    %43 = arith.mulf %38, %40 : vector<8x64xf32>
    %44 = arith.addf %42, %43 : vector<8x64xf32>
    %45 = math.tanh %44 : vector<8x64xf32>
    %46 = arith.mulf %41, %45 : vector<8x64xf32>
    %47 = vector.extract_strided_slice %7 {offsets = [16, 0], sizes = [8, 256], strides = [1, 1]} : vector<64x256xf32> to vector<8x256xf32>
    %cst_12 = arith.constant dense<0.000000e+00> : vector<8x256xf32>
    %48 = tpu.matmul %46, %8, %cst_12 {dimension_numbers = #tpu.dot_dimension_numbers<[1], [0], [0], [1], [0, 0, 1, 1], [], []>} : vector<8x64xf32>, vector<64x256xf32>, vector<8x256xf32> -> vector<8x256xf32>
    %49 = arith.addf %47, %48 : vector<8x256xf32>
    %50 = arith.negf %49 : vector<8x256xf32>
    %51 = math.exp %50 : vector<8x256xf32>
    %cst_13 = arith.constant 1.000000e+00 : f32
    %52 = vector.broadcast %cst_13 : f32 to vector<8x256xf32>
    %53 = arith.addf %52, %51 : vector<8x256xf32>
    %54 = arith.divf %52, %53 : vector<8x256xf32>
    %55 = math.tanh %49 : vector<8x256xf32>
    %56 = vector.extract_strided_slice %54 {offsets = [0, 0], sizes = [8, 64], strides = [1, 1]} : vector<8x256xf32> to vector<8x64xf32>
    %57 = vector.extract_strided_slice %54 {offsets = [0, 64], sizes = [8, 64], strides = [1, 1]} : vector<8x256xf32> to vector<8x64xf32>
    %58 = vector.extract_strided_slice %55 {offsets = [0, 128], sizes = [8, 64], strides = [1, 1]} : vector<8x256xf32> to vector<8x64xf32>
    %59 = vector.extract_strided_slice %54 {offsets = [0, 192], sizes = [8, 64], strides = [1, 1]} : vector<8x256xf32> to vector<8x64xf32>
    %60 = arith.mulf %57, %44 : vector<8x64xf32>
    %61 = arith.mulf %56, %58 : vector<8x64xf32>
    %62 = arith.addf %60, %61 : vector<8x64xf32>
    %63 = math.tanh %62 : vector<8x64xf32>
    %64 = arith.mulf %59, %63 : vector<8x64xf32>
    %65 = vector.extract_strided_slice %7 {offsets = [24, 0], sizes = [8, 256], strides = [1, 1]} : vector<64x256xf32> to vector<8x256xf32>
    %cst_14 = arith.constant dense<0.000000e+00> : vector<8x256xf32>
    %66 = tpu.matmul %64, %8, %cst_14 {dimension_numbers = #tpu.dot_dimension_numbers<[1], [0], [0], [1], [0, 0, 1, 1], [], []>} : vector<8x64xf32>, vector<64x256xf32>, vector<8x256xf32> -> vector<8x256xf32>
    %67 = arith.addf %65, %66 : vector<8x256xf32>
    %68 = arith.negf %67 : vector<8x256xf32>
    %69 = math.exp %68 : vector<8x256xf32>
    %cst_15 = arith.constant 1.000000e+00 : f32
    %70 = vector.broadcast %cst_15 : f32 to vector<8x256xf32>
    %71 = arith.addf %70, %69 : vector<8x256xf32>
    %72 = arith.divf %70, %71 : vector<8x256xf32>
    %73 = math.tanh %67 : vector<8x256xf32>
    %74 = vector.extract_strided_slice %72 {offsets = [0, 0], sizes = [8, 64], strides = [1, 1]} : vector<8x256xf32> to vector<8x64xf32>
    %75 = vector.extract_strided_slice %72 {offsets = [0, 64], sizes = [8, 64], strides = [1, 1]} : vector<8x256xf32> to vector<8x64xf32>
    %76 = vector.extract_strided_slice %73 {offsets = [0, 128], sizes = [8, 64], strides = [1, 1]} : vector<8x256xf32> to vector<8x64xf32>
    %77 = vector.extract_strided_slice %72 {offsets = [0, 192], sizes = [8, 64], strides = [1, 1]} : vector<8x256xf32> to vector<8x64xf32>
    %78 = arith.mulf %75, %62 : vector<8x64xf32>
    %79 = arith.mulf %74, %76 : vector<8x64xf32>
    %80 = arith.addf %78, %79 : vector<8x64xf32>
    %81 = math.tanh %80 : vector<8x64xf32>
    %82 = arith.mulf %77, %81 : vector<8x64xf32>
    %83 = vector.extract_strided_slice %7 {offsets = [32, 0], sizes = [8, 256], strides = [1, 1]} : vector<64x256xf32> to vector<8x256xf32>
    %cst_16 = arith.constant dense<0.000000e+00> : vector<8x256xf32>
    %84 = tpu.matmul %82, %8, %cst_16 {dimension_numbers = #tpu.dot_dimension_numbers<[1], [0], [0], [1], [0, 0, 1, 1], [], []>} : vector<8x64xf32>, vector<64x256xf32>, vector<8x256xf32> -> vector<8x256xf32>
    %85 = arith.addf %83, %84 : vector<8x256xf32>
    %86 = arith.negf %85 : vector<8x256xf32>
    %87 = math.exp %86 : vector<8x256xf32>
    %cst_17 = arith.constant 1.000000e+00 : f32
    %88 = vector.broadcast %cst_17 : f32 to vector<8x256xf32>
    %89 = arith.addf %88, %87 : vector<8x256xf32>
    %90 = arith.divf %88, %89 : vector<8x256xf32>
    %91 = math.tanh %85 : vector<8x256xf32>
    %92 = vector.extract_strided_slice %90 {offsets = [0, 0], sizes = [8, 64], strides = [1, 1]} : vector<8x256xf32> to vector<8x64xf32>
    %93 = vector.extract_strided_slice %90 {offsets = [0, 64], sizes = [8, 64], strides = [1, 1]} : vector<8x256xf32> to vector<8x64xf32>
    %94 = vector.extract_strided_slice %91 {offsets = [0, 128], sizes = [8, 64], strides = [1, 1]} : vector<8x256xf32> to vector<8x64xf32>
    %95 = vector.extract_strided_slice %90 {offsets = [0, 192], sizes = [8, 64], strides = [1, 1]} : vector<8x256xf32> to vector<8x64xf32>
    %96 = arith.mulf %93, %80 : vector<8x64xf32>
    %97 = arith.mulf %92, %94 : vector<8x64xf32>
    %98 = arith.addf %96, %97 : vector<8x64xf32>
    %99 = math.tanh %98 : vector<8x64xf32>
    %100 = arith.mulf %95, %99 : vector<8x64xf32>
    %101 = vector.extract_strided_slice %7 {offsets = [40, 0], sizes = [8, 256], strides = [1, 1]} : vector<64x256xf32> to vector<8x256xf32>
    %cst_18 = arith.constant dense<0.000000e+00> : vector<8x256xf32>
    %102 = tpu.matmul %100, %8, %cst_18 {dimension_numbers = #tpu.dot_dimension_numbers<[1], [0], [0], [1], [0, 0, 1, 1], [], []>} : vector<8x64xf32>, vector<64x256xf32>, vector<8x256xf32> -> vector<8x256xf32>
    %103 = arith.addf %101, %102 : vector<8x256xf32>
    %104 = arith.negf %103 : vector<8x256xf32>
    %105 = math.exp %104 : vector<8x256xf32>
    %cst_19 = arith.constant 1.000000e+00 : f32
    %106 = vector.broadcast %cst_19 : f32 to vector<8x256xf32>
    %107 = arith.addf %106, %105 : vector<8x256xf32>
    %108 = arith.divf %106, %107 : vector<8x256xf32>
    %109 = math.tanh %103 : vector<8x256xf32>
    %110 = vector.extract_strided_slice %108 {offsets = [0, 0], sizes = [8, 64], strides = [1, 1]} : vector<8x256xf32> to vector<8x64xf32>
    %111 = vector.extract_strided_slice %108 {offsets = [0, 64], sizes = [8, 64], strides = [1, 1]} : vector<8x256xf32> to vector<8x64xf32>
    %112 = vector.extract_strided_slice %109 {offsets = [0, 128], sizes = [8, 64], strides = [1, 1]} : vector<8x256xf32> to vector<8x64xf32>
    %113 = vector.extract_strided_slice %108 {offsets = [0, 192], sizes = [8, 64], strides = [1, 1]} : vector<8x256xf32> to vector<8x64xf32>
    %114 = arith.mulf %111, %98 : vector<8x64xf32>
    %115 = arith.mulf %110, %112 : vector<8x64xf32>
    %116 = arith.addf %114, %115 : vector<8x64xf32>
    %117 = math.tanh %116 : vector<8x64xf32>
    %118 = arith.mulf %113, %117 : vector<8x64xf32>
    %119 = vector.extract_strided_slice %7 {offsets = [48, 0], sizes = [8, 256], strides = [1, 1]} : vector<64x256xf32> to vector<8x256xf32>
    %cst_20 = arith.constant dense<0.000000e+00> : vector<8x256xf32>
    %120 = tpu.matmul %118, %8, %cst_20 {dimension_numbers = #tpu.dot_dimension_numbers<[1], [0], [0], [1], [0, 0, 1, 1], [], []>} : vector<8x64xf32>, vector<64x256xf32>, vector<8x256xf32> -> vector<8x256xf32>
    %121 = arith.addf %119, %120 : vector<8x256xf32>
    %122 = arith.negf %121 : vector<8x256xf32>
    %123 = math.exp %122 : vector<8x256xf32>
    %cst_21 = arith.constant 1.000000e+00 : f32
    %124 = vector.broadcast %cst_21 : f32 to vector<8x256xf32>
    %125 = arith.addf %124, %123 : vector<8x256xf32>
    %126 = arith.divf %124, %125 : vector<8x256xf32>
    %127 = math.tanh %121 : vector<8x256xf32>
    %128 = vector.extract_strided_slice %126 {offsets = [0, 0], sizes = [8, 64], strides = [1, 1]} : vector<8x256xf32> to vector<8x64xf32>
    %129 = vector.extract_strided_slice %126 {offsets = [0, 64], sizes = [8, 64], strides = [1, 1]} : vector<8x256xf32> to vector<8x64xf32>
    %130 = vector.extract_strided_slice %127 {offsets = [0, 128], sizes = [8, 64], strides = [1, 1]} : vector<8x256xf32> to vector<8x64xf32>
    %131 = vector.extract_strided_slice %126 {offsets = [0, 192], sizes = [8, 64], strides = [1, 1]} : vector<8x256xf32> to vector<8x64xf32>
    %132 = arith.mulf %129, %116 : vector<8x64xf32>
    %133 = arith.mulf %128, %130 : vector<8x64xf32>
    %134 = arith.addf %132, %133 : vector<8x64xf32>
    %135 = math.tanh %134 : vector<8x64xf32>
    %136 = arith.mulf %131, %135 : vector<8x64xf32>
    %137 = vector.extract_strided_slice %7 {offsets = [56, 0], sizes = [8, 256], strides = [1, 1]} : vector<64x256xf32> to vector<8x256xf32>
    %cst_22 = arith.constant dense<0.000000e+00> : vector<8x256xf32>
    %138 = tpu.matmul %136, %8, %cst_22 {dimension_numbers = #tpu.dot_dimension_numbers<[1], [0], [0], [1], [0, 0, 1, 1], [], []>} : vector<8x64xf32>, vector<64x256xf32>, vector<8x256xf32> -> vector<8x256xf32>
    %139 = arith.addf %137, %138 : vector<8x256xf32>
    %140 = arith.negf %139 : vector<8x256xf32>
    %141 = math.exp %140 : vector<8x256xf32>
    %cst_23 = arith.constant 1.000000e+00 : f32
    %142 = vector.broadcast %cst_23 : f32 to vector<8x256xf32>
    %143 = arith.addf %142, %141 : vector<8x256xf32>
    %144 = arith.divf %142, %143 : vector<8x256xf32>
    %145 = math.tanh %139 : vector<8x256xf32>
    %146 = vector.extract_strided_slice %144 {offsets = [0, 0], sizes = [8, 64], strides = [1, 1]} : vector<8x256xf32> to vector<8x64xf32>
    %147 = vector.extract_strided_slice %144 {offsets = [0, 64], sizes = [8, 64], strides = [1, 1]} : vector<8x256xf32> to vector<8x64xf32>
    %148 = vector.extract_strided_slice %145 {offsets = [0, 128], sizes = [8, 64], strides = [1, 1]} : vector<8x256xf32> to vector<8x64xf32>
    %149 = vector.extract_strided_slice %144 {offsets = [0, 192], sizes = [8, 64], strides = [1, 1]} : vector<8x256xf32> to vector<8x64xf32>
    %150 = arith.mulf %147, %134 : vector<8x64xf32>
    %151 = arith.mulf %146, %148 : vector<8x64xf32>
    %152 = arith.addf %150, %151 : vector<8x64xf32>
    %153 = math.tanh %152 : vector<8x64xf32>
    %154 = arith.mulf %149, %153 : vector<8x64xf32>
    %155 = tpu.concatenate %28, %46, %64, %82, %100, %118, %136, %154 in 0 : vector<8x64xf32>, vector<8x64xf32>, vector<8x64xf32>, vector<8x64xf32>, vector<8x64xf32>, vector<8x64xf32>, vector<8x64xf32>, vector<8x64xf32> -> vector<64x64xf32>
    %c0_24 = arith.constant 0 : index
    %c0_25 = arith.constant 0 : index
    %156 = vector.load %arg4[%c0_24, %c0_25] : memref<64x256xf32, #tpu.memory_space<vmem>>, vector<64x256xf32>
    %cst_26 = arith.constant dense<0.000000e+00> : vector<64x256xf32>
    %157 = tpu.matmul %155, %156, %cst_26 {dimension_numbers = #tpu.dot_dimension_numbers<[1], [0], [0], [1], [0, 0, 1, 1], [], []>} : vector<64x64xf32>, vector<64x256xf32>, vector<64x256xf32> -> vector<64x256xf32>
    %c0_27 = arith.constant 0 : index
    %c0_28 = arith.constant 0 : index
    %158 = vector.load %arg6[%c0_27, %c0_28] : memref<1x256xf32, #tpu.memory_space<vmem>>, vector<1x256xf32>
    %159 = vector.broadcast %158 : vector<1x256xf32> to vector<64x256xf32>
    %160 = arith.addf %157, %159 : vector<64x256xf32>
    %c0_29 = arith.constant 0 : index
    %c0_30 = arith.constant 0 : index
    %161 = vector.load %arg5[%c0_29, %c0_30] : memref<64x256xf32, #tpu.memory_space<vmem>>, vector<64x256xf32>
    %cst_31 = arith.constant 0.000000e+00 : f32
    %162 = vector.broadcast %cst_31 : f32 to vector<8x64xf32>
    %cst_32 = arith.constant 0.000000e+00 : f32
    %163 = vector.broadcast %cst_32 : f32 to vector<8x64xf32>
    %164 = vector.extract_strided_slice %160 {offsets = [0, 0], sizes = [8, 256], strides = [1, 1]} : vector<64x256xf32> to vector<8x256xf32>
    %cst_33 = arith.constant dense<0.000000e+00> : vector<8x256xf32>
    %165 = tpu.matmul %162, %161, %cst_33 {dimension_numbers = #tpu.dot_dimension_numbers<[1], [0], [0], [1], [0, 0, 1, 1], [], []>} : vector<8x64xf32>, vector<64x256xf32>, vector<8x256xf32> -> vector<8x256xf32>
    %166 = arith.addf %164, %165 : vector<8x256xf32>
    %167 = arith.negf %166 : vector<8x256xf32>
    %168 = math.exp %167 : vector<8x256xf32>
    %cst_34 = arith.constant 1.000000e+00 : f32
    %169 = vector.broadcast %cst_34 : f32 to vector<8x256xf32>
    %170 = arith.addf %169, %168 : vector<8x256xf32>
    %171 = arith.divf %169, %170 : vector<8x256xf32>
    %172 = math.tanh %166 : vector<8x256xf32>
    %173 = vector.extract_strided_slice %171 {offsets = [0, 0], sizes = [8, 64], strides = [1, 1]} : vector<8x256xf32> to vector<8x64xf32>
    %174 = vector.extract_strided_slice %171 {offsets = [0, 64], sizes = [8, 64], strides = [1, 1]} : vector<8x256xf32> to vector<8x64xf32>
    %175 = vector.extract_strided_slice %172 {offsets = [0, 128], sizes = [8, 64], strides = [1, 1]} : vector<8x256xf32> to vector<8x64xf32>
    %176 = vector.extract_strided_slice %171 {offsets = [0, 192], sizes = [8, 64], strides = [1, 1]} : vector<8x256xf32> to vector<8x64xf32>
    %177 = arith.mulf %174, %163 : vector<8x64xf32>
    %178 = arith.mulf %173, %175 : vector<8x64xf32>
    %179 = arith.addf %177, %178 : vector<8x64xf32>
    %180 = math.tanh %179 : vector<8x64xf32>
    %181 = arith.mulf %176, %180 : vector<8x64xf32>
    %182 = vector.extract_strided_slice %160 {offsets = [8, 0], sizes = [8, 256], strides = [1, 1]} : vector<64x256xf32> to vector<8x256xf32>
    %cst_35 = arith.constant dense<0.000000e+00> : vector<8x256xf32>
    %183 = tpu.matmul %181, %161, %cst_35 {dimension_numbers = #tpu.dot_dimension_numbers<[1], [0], [0], [1], [0, 0, 1, 1], [], []>} : vector<8x64xf32>, vector<64x256xf32>, vector<8x256xf32> -> vector<8x256xf32>
    %184 = arith.addf %182, %183 : vector<8x256xf32>
    %185 = arith.negf %184 : vector<8x256xf32>
    %186 = math.exp %185 : vector<8x256xf32>
    %cst_36 = arith.constant 1.000000e+00 : f32
    %187 = vector.broadcast %cst_36 : f32 to vector<8x256xf32>
    %188 = arith.addf %187, %186 : vector<8x256xf32>
    %189 = arith.divf %187, %188 : vector<8x256xf32>
    %190 = math.tanh %184 : vector<8x256xf32>
    %191 = vector.extract_strided_slice %189 {offsets = [0, 0], sizes = [8, 64], strides = [1, 1]} : vector<8x256xf32> to vector<8x64xf32>
    %192 = vector.extract_strided_slice %189 {offsets = [0, 64], sizes = [8, 64], strides = [1, 1]} : vector<8x256xf32> to vector<8x64xf32>
    %193 = vector.extract_strided_slice %190 {offsets = [0, 128], sizes = [8, 64], strides = [1, 1]} : vector<8x256xf32> to vector<8x64xf32>
    %194 = vector.extract_strided_slice %189 {offsets = [0, 192], sizes = [8, 64], strides = [1, 1]} : vector<8x256xf32> to vector<8x64xf32>
    %195 = arith.mulf %192, %179 : vector<8x64xf32>
    %196 = arith.mulf %191, %193 : vector<8x64xf32>
    %197 = arith.addf %195, %196 : vector<8x64xf32>
    %198 = math.tanh %197 : vector<8x64xf32>
    %199 = arith.mulf %194, %198 : vector<8x64xf32>
    %200 = vector.extract_strided_slice %160 {offsets = [16, 0], sizes = [8, 256], strides = [1, 1]} : vector<64x256xf32> to vector<8x256xf32>
    %cst_37 = arith.constant dense<0.000000e+00> : vector<8x256xf32>
    %201 = tpu.matmul %199, %161, %cst_37 {dimension_numbers = #tpu.dot_dimension_numbers<[1], [0], [0], [1], [0, 0, 1, 1], [], []>} : vector<8x64xf32>, vector<64x256xf32>, vector<8x256xf32> -> vector<8x256xf32>
    %202 = arith.addf %200, %201 : vector<8x256xf32>
    %203 = arith.negf %202 : vector<8x256xf32>
    %204 = math.exp %203 : vector<8x256xf32>
    %cst_38 = arith.constant 1.000000e+00 : f32
    %205 = vector.broadcast %cst_38 : f32 to vector<8x256xf32>
    %206 = arith.addf %205, %204 : vector<8x256xf32>
    %207 = arith.divf %205, %206 : vector<8x256xf32>
    %208 = math.tanh %202 : vector<8x256xf32>
    %209 = vector.extract_strided_slice %207 {offsets = [0, 0], sizes = [8, 64], strides = [1, 1]} : vector<8x256xf32> to vector<8x64xf32>
    %210 = vector.extract_strided_slice %207 {offsets = [0, 64], sizes = [8, 64], strides = [1, 1]} : vector<8x256xf32> to vector<8x64xf32>
    %211 = vector.extract_strided_slice %208 {offsets = [0, 128], sizes = [8, 64], strides = [1, 1]} : vector<8x256xf32> to vector<8x64xf32>
    %212 = vector.extract_strided_slice %207 {offsets = [0, 192], sizes = [8, 64], strides = [1, 1]} : vector<8x256xf32> to vector<8x64xf32>
    %213 = arith.mulf %210, %197 : vector<8x64xf32>
    %214 = arith.mulf %209, %211 : vector<8x64xf32>
    %215 = arith.addf %213, %214 : vector<8x64xf32>
    %216 = math.tanh %215 : vector<8x64xf32>
    %217 = arith.mulf %212, %216 : vector<8x64xf32>
    %218 = vector.extract_strided_slice %160 {offsets = [24, 0], sizes = [8, 256], strides = [1, 1]} : vector<64x256xf32> to vector<8x256xf32>
    %cst_39 = arith.constant dense<0.000000e+00> : vector<8x256xf32>
    %219 = tpu.matmul %217, %161, %cst_39 {dimension_numbers = #tpu.dot_dimension_numbers<[1], [0], [0], [1], [0, 0, 1, 1], [], []>} : vector<8x64xf32>, vector<64x256xf32>, vector<8x256xf32> -> vector<8x256xf32>
    %220 = arith.addf %218, %219 : vector<8x256xf32>
    %221 = arith.negf %220 : vector<8x256xf32>
    %222 = math.exp %221 : vector<8x256xf32>
    %cst_40 = arith.constant 1.000000e+00 : f32
    %223 = vector.broadcast %cst_40 : f32 to vector<8x256xf32>
    %224 = arith.addf %223, %222 : vector<8x256xf32>
    %225 = arith.divf %223, %224 : vector<8x256xf32>
    %226 = math.tanh %220 : vector<8x256xf32>
    %227 = vector.extract_strided_slice %225 {offsets = [0, 0], sizes = [8, 64], strides = [1, 1]} : vector<8x256xf32> to vector<8x64xf32>
    %228 = vector.extract_strided_slice %225 {offsets = [0, 64], sizes = [8, 64], strides = [1, 1]} : vector<8x256xf32> to vector<8x64xf32>
    %229 = vector.extract_strided_slice %226 {offsets = [0, 128], sizes = [8, 64], strides = [1, 1]} : vector<8x256xf32> to vector<8x64xf32>
    %230 = vector.extract_strided_slice %225 {offsets = [0, 192], sizes = [8, 64], strides = [1, 1]} : vector<8x256xf32> to vector<8x64xf32>
    %231 = arith.mulf %228, %215 : vector<8x64xf32>
    %232 = arith.mulf %227, %229 : vector<8x64xf32>
    %233 = arith.addf %231, %232 : vector<8x64xf32>
    %234 = math.tanh %233 : vector<8x64xf32>
    %235 = arith.mulf %230, %234 : vector<8x64xf32>
    %236 = vector.extract_strided_slice %160 {offsets = [32, 0], sizes = [8, 256], strides = [1, 1]} : vector<64x256xf32> to vector<8x256xf32>
    %cst_41 = arith.constant dense<0.000000e+00> : vector<8x256xf32>
    %237 = tpu.matmul %235, %161, %cst_41 {dimension_numbers = #tpu.dot_dimension_numbers<[1], [0], [0], [1], [0, 0, 1, 1], [], []>} : vector<8x64xf32>, vector<64x256xf32>, vector<8x256xf32> -> vector<8x256xf32>
    %238 = arith.addf %236, %237 : vector<8x256xf32>
    %239 = arith.negf %238 : vector<8x256xf32>
    %240 = math.exp %239 : vector<8x256xf32>
    %cst_42 = arith.constant 1.000000e+00 : f32
    %241 = vector.broadcast %cst_42 : f32 to vector<8x256xf32>
    %242 = arith.addf %241, %240 : vector<8x256xf32>
    %243 = arith.divf %241, %242 : vector<8x256xf32>
    %244 = math.tanh %238 : vector<8x256xf32>
    %245 = vector.extract_strided_slice %243 {offsets = [0, 0], sizes = [8, 64], strides = [1, 1]} : vector<8x256xf32> to vector<8x64xf32>
    %246 = vector.extract_strided_slice %243 {offsets = [0, 64], sizes = [8, 64], strides = [1, 1]} : vector<8x256xf32> to vector<8x64xf32>
    %247 = vector.extract_strided_slice %244 {offsets = [0, 128], sizes = [8, 64], strides = [1, 1]} : vector<8x256xf32> to vector<8x64xf32>
    %248 = vector.extract_strided_slice %243 {offsets = [0, 192], sizes = [8, 64], strides = [1, 1]} : vector<8x256xf32> to vector<8x64xf32>
    %249 = arith.mulf %246, %233 : vector<8x64xf32>
    %250 = arith.mulf %245, %247 : vector<8x64xf32>
    %251 = arith.addf %249, %250 : vector<8x64xf32>
    %252 = math.tanh %251 : vector<8x64xf32>
    %253 = arith.mulf %248, %252 : vector<8x64xf32>
    %254 = vector.extract_strided_slice %160 {offsets = [40, 0], sizes = [8, 256], strides = [1, 1]} : vector<64x256xf32> to vector<8x256xf32>
    %cst_43 = arith.constant dense<0.000000e+00> : vector<8x256xf32>
    %255 = tpu.matmul %253, %161, %cst_43 {dimension_numbers = #tpu.dot_dimension_numbers<[1], [0], [0], [1], [0, 0, 1, 1], [], []>} : vector<8x64xf32>, vector<64x256xf32>, vector<8x256xf32> -> vector<8x256xf32>
    %256 = arith.addf %254, %255 : vector<8x256xf32>
    %257 = arith.negf %256 : vector<8x256xf32>
    %258 = math.exp %257 : vector<8x256xf32>
    %cst_44 = arith.constant 1.000000e+00 : f32
    %259 = vector.broadcast %cst_44 : f32 to vector<8x256xf32>
    %260 = arith.addf %259, %258 : vector<8x256xf32>
    %261 = arith.divf %259, %260 : vector<8x256xf32>
    %262 = math.tanh %256 : vector<8x256xf32>
    %263 = vector.extract_strided_slice %261 {offsets = [0, 0], sizes = [8, 64], strides = [1, 1]} : vector<8x256xf32> to vector<8x64xf32>
    %264 = vector.extract_strided_slice %261 {offsets = [0, 64], sizes = [8, 64], strides = [1, 1]} : vector<8x256xf32> to vector<8x64xf32>
    %265 = vector.extract_strided_slice %262 {offsets = [0, 128], sizes = [8, 64], strides = [1, 1]} : vector<8x256xf32> to vector<8x64xf32>
    %266 = vector.extract_strided_slice %261 {offsets = [0, 192], sizes = [8, 64], strides = [1, 1]} : vector<8x256xf32> to vector<8x64xf32>
    %267 = arith.mulf %264, %251 : vector<8x64xf32>
    %268 = arith.mulf %263, %265 : vector<8x64xf32>
    %269 = arith.addf %267, %268 : vector<8x64xf32>
    %270 = math.tanh %269 : vector<8x64xf32>
    %271 = arith.mulf %266, %270 : vector<8x64xf32>
    %272 = vector.extract_strided_slice %160 {offsets = [48, 0], sizes = [8, 256], strides = [1, 1]} : vector<64x256xf32> to vector<8x256xf32>
    %cst_45 = arith.constant dense<0.000000e+00> : vector<8x256xf32>
    %273 = tpu.matmul %271, %161, %cst_45 {dimension_numbers = #tpu.dot_dimension_numbers<[1], [0], [0], [1], [0, 0, 1, 1], [], []>} : vector<8x64xf32>, vector<64x256xf32>, vector<8x256xf32> -> vector<8x256xf32>
    %274 = arith.addf %272, %273 : vector<8x256xf32>
    %275 = arith.negf %274 : vector<8x256xf32>
    %276 = math.exp %275 : vector<8x256xf32>
    %cst_46 = arith.constant 1.000000e+00 : f32
    %277 = vector.broadcast %cst_46 : f32 to vector<8x256xf32>
    %278 = arith.addf %277, %276 : vector<8x256xf32>
    %279 = arith.divf %277, %278 : vector<8x256xf32>
    %280 = math.tanh %274 : vector<8x256xf32>
    %281 = vector.extract_strided_slice %279 {offsets = [0, 0], sizes = [8, 64], strides = [1, 1]} : vector<8x256xf32> to vector<8x64xf32>
    %282 = vector.extract_strided_slice %279 {offsets = [0, 64], sizes = [8, 64], strides = [1, 1]} : vector<8x256xf32> to vector<8x64xf32>
    %283 = vector.extract_strided_slice %280 {offsets = [0, 128], sizes = [8, 64], strides = [1, 1]} : vector<8x256xf32> to vector<8x64xf32>
    %284 = vector.extract_strided_slice %279 {offsets = [0, 192], sizes = [8, 64], strides = [1, 1]} : vector<8x256xf32> to vector<8x64xf32>
    %285 = arith.mulf %282, %269 : vector<8x64xf32>
    %286 = arith.mulf %281, %283 : vector<8x64xf32>
    %287 = arith.addf %285, %286 : vector<8x64xf32>
    %288 = math.tanh %287 : vector<8x64xf32>
    %289 = arith.mulf %284, %288 : vector<8x64xf32>
    %290 = vector.extract_strided_slice %160 {offsets = [56, 0], sizes = [8, 256], strides = [1, 1]} : vector<64x256xf32> to vector<8x256xf32>
    %cst_47 = arith.constant dense<0.000000e+00> : vector<8x256xf32>
    %291 = tpu.matmul %289, %161, %cst_47 {dimension_numbers = #tpu.dot_dimension_numbers<[1], [0], [0], [1], [0, 0, 1, 1], [], []>} : vector<8x64xf32>, vector<64x256xf32>, vector<8x256xf32> -> vector<8x256xf32>
    %292 = arith.addf %290, %291 : vector<8x256xf32>
    %293 = arith.negf %292 : vector<8x256xf32>
    %294 = math.exp %293 : vector<8x256xf32>
    %cst_48 = arith.constant 1.000000e+00 : f32
    %295 = vector.broadcast %cst_48 : f32 to vector<8x256xf32>
    %296 = arith.addf %295, %294 : vector<8x256xf32>
    %297 = arith.divf %295, %296 : vector<8x256xf32>
    %298 = math.tanh %292 : vector<8x256xf32>
    %299 = vector.extract_strided_slice %297 {offsets = [0, 0], sizes = [8, 64], strides = [1, 1]} : vector<8x256xf32> to vector<8x64xf32>
    %300 = vector.extract_strided_slice %297 {offsets = [0, 64], sizes = [8, 64], strides = [1, 1]} : vector<8x256xf32> to vector<8x64xf32>
    %301 = vector.extract_strided_slice %298 {offsets = [0, 128], sizes = [8, 64], strides = [1, 1]} : vector<8x256xf32> to vector<8x64xf32>
    %302 = vector.extract_strided_slice %297 {offsets = [0, 192], sizes = [8, 64], strides = [1, 1]} : vector<8x256xf32> to vector<8x64xf32>
    %303 = arith.mulf %300, %287 : vector<8x64xf32>
    %304 = arith.mulf %299, %301 : vector<8x64xf32>
    %305 = arith.addf %303, %304 : vector<8x64xf32>
    %306 = math.tanh %305 : vector<8x64xf32>
    %307 = arith.mulf %302, %306 : vector<8x64xf32>
    %308 = tpu.concatenate %181, %199, %217, %235, %253, %271, %289, %307 in 0 : vector<8x64xf32>, vector<8x64xf32>, vector<8x64xf32>, vector<8x64xf32>, vector<8x64xf32>, vector<8x64xf32>, vector<8x64xf32>, vector<8x64xf32> -> vector<64x64xf32>
    %c0_49 = arith.constant 0 : index
    %c0_50 = arith.constant 0 : index
    %309 = vector.load %arg7[%c0_49, %c0_50] : memref<64x256xf32, #tpu.memory_space<vmem>>, vector<64x256xf32>
    %cst_51 = arith.constant dense<0.000000e+00> : vector<64x256xf32>
    %310 = tpu.matmul %308, %309, %cst_51 {dimension_numbers = #tpu.dot_dimension_numbers<[1], [0], [0], [1], [0, 0, 1, 1], [], []>} : vector<64x64xf32>, vector<64x256xf32>, vector<64x256xf32> -> vector<64x256xf32>
    %c0_52 = arith.constant 0 : index
    %c0_53 = arith.constant 0 : index
    %311 = vector.load %arg9[%c0_52, %c0_53] : memref<1x256xf32, #tpu.memory_space<vmem>>, vector<1x256xf32>
    %312 = vector.broadcast %311 : vector<1x256xf32> to vector<64x256xf32>
    %313 = arith.addf %310, %312 : vector<64x256xf32>
    %c0_54 = arith.constant 0 : index
    %c0_55 = arith.constant 0 : index
    %314 = vector.load %arg8[%c0_54, %c0_55] : memref<64x256xf32, #tpu.memory_space<vmem>>, vector<64x256xf32>
    %cst_56 = arith.constant 0.000000e+00 : f32
    %315 = vector.broadcast %cst_56 : f32 to vector<8x64xf32>
    %cst_57 = arith.constant 0.000000e+00 : f32
    %316 = vector.broadcast %cst_57 : f32 to vector<8x64xf32>
    %317 = vector.extract_strided_slice %313 {offsets = [0, 0], sizes = [8, 256], strides = [1, 1]} : vector<64x256xf32> to vector<8x256xf32>
    %cst_58 = arith.constant dense<0.000000e+00> : vector<8x256xf32>
    %318 = tpu.matmul %315, %314, %cst_58 {dimension_numbers = #tpu.dot_dimension_numbers<[1], [0], [0], [1], [0, 0, 1, 1], [], []>} : vector<8x64xf32>, vector<64x256xf32>, vector<8x256xf32> -> vector<8x256xf32>
    %319 = arith.addf %317, %318 : vector<8x256xf32>
    %320 = arith.negf %319 : vector<8x256xf32>
    %321 = math.exp %320 : vector<8x256xf32>
    %cst_59 = arith.constant 1.000000e+00 : f32
    %322 = vector.broadcast %cst_59 : f32 to vector<8x256xf32>
    %323 = arith.addf %322, %321 : vector<8x256xf32>
    %324 = arith.divf %322, %323 : vector<8x256xf32>
    %325 = math.tanh %319 : vector<8x256xf32>
    %326 = vector.extract_strided_slice %324 {offsets = [0, 0], sizes = [8, 64], strides = [1, 1]} : vector<8x256xf32> to vector<8x64xf32>
    %327 = vector.extract_strided_slice %324 {offsets = [0, 64], sizes = [8, 64], strides = [1, 1]} : vector<8x256xf32> to vector<8x64xf32>
    %328 = vector.extract_strided_slice %325 {offsets = [0, 128], sizes = [8, 64], strides = [1, 1]} : vector<8x256xf32> to vector<8x64xf32>
    %329 = vector.extract_strided_slice %324 {offsets = [0, 192], sizes = [8, 64], strides = [1, 1]} : vector<8x256xf32> to vector<8x64xf32>
    %330 = arith.mulf %327, %316 : vector<8x64xf32>
    %331 = arith.mulf %326, %328 : vector<8x64xf32>
    %332 = arith.addf %330, %331 : vector<8x64xf32>
    %333 = math.tanh %332 : vector<8x64xf32>
    %334 = arith.mulf %329, %333 : vector<8x64xf32>
    %335 = vector.extract_strided_slice %313 {offsets = [8, 0], sizes = [8, 256], strides = [1, 1]} : vector<64x256xf32> to vector<8x256xf32>
    %cst_60 = arith.constant dense<0.000000e+00> : vector<8x256xf32>
    %336 = tpu.matmul %334, %314, %cst_60 {dimension_numbers = #tpu.dot_dimension_numbers<[1], [0], [0], [1], [0, 0, 1, 1], [], []>} : vector<8x64xf32>, vector<64x256xf32>, vector<8x256xf32> -> vector<8x256xf32>
    %337 = arith.addf %335, %336 : vector<8x256xf32>
    %338 = arith.negf %337 : vector<8x256xf32>
    %339 = math.exp %338 : vector<8x256xf32>
    %cst_61 = arith.constant 1.000000e+00 : f32
    %340 = vector.broadcast %cst_61 : f32 to vector<8x256xf32>
    %341 = arith.addf %340, %339 : vector<8x256xf32>
    %342 = arith.divf %340, %341 : vector<8x256xf32>
    %343 = math.tanh %337 : vector<8x256xf32>
    %344 = vector.extract_strided_slice %342 {offsets = [0, 0], sizes = [8, 64], strides = [1, 1]} : vector<8x256xf32> to vector<8x64xf32>
    %345 = vector.extract_strided_slice %342 {offsets = [0, 64], sizes = [8, 64], strides = [1, 1]} : vector<8x256xf32> to vector<8x64xf32>
    %346 = vector.extract_strided_slice %343 {offsets = [0, 128], sizes = [8, 64], strides = [1, 1]} : vector<8x256xf32> to vector<8x64xf32>
    %347 = vector.extract_strided_slice %342 {offsets = [0, 192], sizes = [8, 64], strides = [1, 1]} : vector<8x256xf32> to vector<8x64xf32>
    %348 = arith.mulf %345, %332 : vector<8x64xf32>
    %349 = arith.mulf %344, %346 : vector<8x64xf32>
    %350 = arith.addf %348, %349 : vector<8x64xf32>
    %351 = math.tanh %350 : vector<8x64xf32>
    %352 = arith.mulf %347, %351 : vector<8x64xf32>
    %353 = vector.extract_strided_slice %313 {offsets = [16, 0], sizes = [8, 256], strides = [1, 1]} : vector<64x256xf32> to vector<8x256xf32>
    %cst_62 = arith.constant dense<0.000000e+00> : vector<8x256xf32>
    %354 = tpu.matmul %352, %314, %cst_62 {dimension_numbers = #tpu.dot_dimension_numbers<[1], [0], [0], [1], [0, 0, 1, 1], [], []>} : vector<8x64xf32>, vector<64x256xf32>, vector<8x256xf32> -> vector<8x256xf32>
    %355 = arith.addf %353, %354 : vector<8x256xf32>
    %356 = arith.negf %355 : vector<8x256xf32>
    %357 = math.exp %356 : vector<8x256xf32>
    %cst_63 = arith.constant 1.000000e+00 : f32
    %358 = vector.broadcast %cst_63 : f32 to vector<8x256xf32>
    %359 = arith.addf %358, %357 : vector<8x256xf32>
    %360 = arith.divf %358, %359 : vector<8x256xf32>
    %361 = math.tanh %355 : vector<8x256xf32>
    %362 = vector.extract_strided_slice %360 {offsets = [0, 0], sizes = [8, 64], strides = [1, 1]} : vector<8x256xf32> to vector<8x64xf32>
    %363 = vector.extract_strided_slice %360 {offsets = [0, 64], sizes = [8, 64], strides = [1, 1]} : vector<8x256xf32> to vector<8x64xf32>
    %364 = vector.extract_strided_slice %361 {offsets = [0, 128], sizes = [8, 64], strides = [1, 1]} : vector<8x256xf32> to vector<8x64xf32>
    %365 = vector.extract_strided_slice %360 {offsets = [0, 192], sizes = [8, 64], strides = [1, 1]} : vector<8x256xf32> to vector<8x64xf32>
    %366 = arith.mulf %363, %350 : vector<8x64xf32>
    %367 = arith.mulf %362, %364 : vector<8x64xf32>
    %368 = arith.addf %366, %367 : vector<8x64xf32>
    %369 = math.tanh %368 : vector<8x64xf32>
    %370 = arith.mulf %365, %369 : vector<8x64xf32>
    %371 = vector.extract_strided_slice %313 {offsets = [24, 0], sizes = [8, 256], strides = [1, 1]} : vector<64x256xf32> to vector<8x256xf32>
    %cst_64 = arith.constant dense<0.000000e+00> : vector<8x256xf32>
    %372 = tpu.matmul %370, %314, %cst_64 {dimension_numbers = #tpu.dot_dimension_numbers<[1], [0], [0], [1], [0, 0, 1, 1], [], []>} : vector<8x64xf32>, vector<64x256xf32>, vector<8x256xf32> -> vector<8x256xf32>
    %373 = arith.addf %371, %372 : vector<8x256xf32>
    %374 = arith.negf %373 : vector<8x256xf32>
    %375 = math.exp %374 : vector<8x256xf32>
    %cst_65 = arith.constant 1.000000e+00 : f32
    %376 = vector.broadcast %cst_65 : f32 to vector<8x256xf32>
    %377 = arith.addf %376, %375 : vector<8x256xf32>
    %378 = arith.divf %376, %377 : vector<8x256xf32>
    %379 = math.tanh %373 : vector<8x256xf32>
    %380 = vector.extract_strided_slice %378 {offsets = [0, 0], sizes = [8, 64], strides = [1, 1]} : vector<8x256xf32> to vector<8x64xf32>
    %381 = vector.extract_strided_slice %378 {offsets = [0, 64], sizes = [8, 64], strides = [1, 1]} : vector<8x256xf32> to vector<8x64xf32>
    %382 = vector.extract_strided_slice %379 {offsets = [0, 128], sizes = [8, 64], strides = [1, 1]} : vector<8x256xf32> to vector<8x64xf32>
    %383 = vector.extract_strided_slice %378 {offsets = [0, 192], sizes = [8, 64], strides = [1, 1]} : vector<8x256xf32> to vector<8x64xf32>
    %384 = arith.mulf %381, %368 : vector<8x64xf32>
    %385 = arith.mulf %380, %382 : vector<8x64xf32>
    %386 = arith.addf %384, %385 : vector<8x64xf32>
    %387 = math.tanh %386 : vector<8x64xf32>
    %388 = arith.mulf %383, %387 : vector<8x64xf32>
    %389 = vector.extract_strided_slice %313 {offsets = [32, 0], sizes = [8, 256], strides = [1, 1]} : vector<64x256xf32> to vector<8x256xf32>
    %cst_66 = arith.constant dense<0.000000e+00> : vector<8x256xf32>
    %390 = tpu.matmul %388, %314, %cst_66 {dimension_numbers = #tpu.dot_dimension_numbers<[1], [0], [0], [1], [0, 0, 1, 1], [], []>} : vector<8x64xf32>, vector<64x256xf32>, vector<8x256xf32> -> vector<8x256xf32>
    %391 = arith.addf %389, %390 : vector<8x256xf32>
    %392 = arith.negf %391 : vector<8x256xf32>
    %393 = math.exp %392 : vector<8x256xf32>
    %cst_67 = arith.constant 1.000000e+00 : f32
    %394 = vector.broadcast %cst_67 : f32 to vector<8x256xf32>
    %395 = arith.addf %394, %393 : vector<8x256xf32>
    %396 = arith.divf %394, %395 : vector<8x256xf32>
    %397 = math.tanh %391 : vector<8x256xf32>
    %398 = vector.extract_strided_slice %396 {offsets = [0, 0], sizes = [8, 64], strides = [1, 1]} : vector<8x256xf32> to vector<8x64xf32>
    %399 = vector.extract_strided_slice %396 {offsets = [0, 64], sizes = [8, 64], strides = [1, 1]} : vector<8x256xf32> to vector<8x64xf32>
    %400 = vector.extract_strided_slice %397 {offsets = [0, 128], sizes = [8, 64], strides = [1, 1]} : vector<8x256xf32> to vector<8x64xf32>
    %401 = vector.extract_strided_slice %396 {offsets = [0, 192], sizes = [8, 64], strides = [1, 1]} : vector<8x256xf32> to vector<8x64xf32>
    %402 = arith.mulf %399, %386 : vector<8x64xf32>
    %403 = arith.mulf %398, %400 : vector<8x64xf32>
    %404 = arith.addf %402, %403 : vector<8x64xf32>
    %405 = math.tanh %404 : vector<8x64xf32>
    %406 = arith.mulf %401, %405 : vector<8x64xf32>
    %407 = vector.extract_strided_slice %313 {offsets = [40, 0], sizes = [8, 256], strides = [1, 1]} : vector<64x256xf32> to vector<8x256xf32>
    %cst_68 = arith.constant dense<0.000000e+00> : vector<8x256xf32>
    %408 = tpu.matmul %406, %314, %cst_68 {dimension_numbers = #tpu.dot_dimension_numbers<[1], [0], [0], [1], [0, 0, 1, 1], [], []>} : vector<8x64xf32>, vector<64x256xf32>, vector<8x256xf32> -> vector<8x256xf32>
    %409 = arith.addf %407, %408 : vector<8x256xf32>
    %410 = arith.negf %409 : vector<8x256xf32>
    %411 = math.exp %410 : vector<8x256xf32>
    %cst_69 = arith.constant 1.000000e+00 : f32
    %412 = vector.broadcast %cst_69 : f32 to vector<8x256xf32>
    %413 = arith.addf %412, %411 : vector<8x256xf32>
    %414 = arith.divf %412, %413 : vector<8x256xf32>
    %415 = math.tanh %409 : vector<8x256xf32>
    %416 = vector.extract_strided_slice %414 {offsets = [0, 0], sizes = [8, 64], strides = [1, 1]} : vector<8x256xf32> to vector<8x64xf32>
    %417 = vector.extract_strided_slice %414 {offsets = [0, 64], sizes = [8, 64], strides = [1, 1]} : vector<8x256xf32> to vector<8x64xf32>
    %418 = vector.extract_strided_slice %415 {offsets = [0, 128], sizes = [8, 64], strides = [1, 1]} : vector<8x256xf32> to vector<8x64xf32>
    %419 = vector.extract_strided_slice %414 {offsets = [0, 192], sizes = [8, 64], strides = [1, 1]} : vector<8x256xf32> to vector<8x64xf32>
    %420 = arith.mulf %417, %404 : vector<8x64xf32>
    %421 = arith.mulf %416, %418 : vector<8x64xf32>
    %422 = arith.addf %420, %421 : vector<8x64xf32>
    %423 = math.tanh %422 : vector<8x64xf32>
    %424 = arith.mulf %419, %423 : vector<8x64xf32>
    %425 = vector.extract_strided_slice %313 {offsets = [48, 0], sizes = [8, 256], strides = [1, 1]} : vector<64x256xf32> to vector<8x256xf32>
    %cst_70 = arith.constant dense<0.000000e+00> : vector<8x256xf32>
    %426 = tpu.matmul %424, %314, %cst_70 {dimension_numbers = #tpu.dot_dimension_numbers<[1], [0], [0], [1], [0, 0, 1, 1], [], []>} : vector<8x64xf32>, vector<64x256xf32>, vector<8x256xf32> -> vector<8x256xf32>
    %427 = arith.addf %425, %426 : vector<8x256xf32>
    %428 = arith.negf %427 : vector<8x256xf32>
    %429 = math.exp %428 : vector<8x256xf32>
    %cst_71 = arith.constant 1.000000e+00 : f32
    %430 = vector.broadcast %cst_71 : f32 to vector<8x256xf32>
    %431 = arith.addf %430, %429 : vector<8x256xf32>
    %432 = arith.divf %430, %431 : vector<8x256xf32>
    %433 = math.tanh %427 : vector<8x256xf32>
    %434 = vector.extract_strided_slice %432 {offsets = [0, 0], sizes = [8, 64], strides = [1, 1]} : vector<8x256xf32> to vector<8x64xf32>
    %435 = vector.extract_strided_slice %432 {offsets = [0, 64], sizes = [8, 64], strides = [1, 1]} : vector<8x256xf32> to vector<8x64xf32>
    %436 = vector.extract_strided_slice %433 {offsets = [0, 128], sizes = [8, 64], strides = [1, 1]} : vector<8x256xf32> to vector<8x64xf32>
    %437 = vector.extract_strided_slice %432 {offsets = [0, 192], sizes = [8, 64], strides = [1, 1]} : vector<8x256xf32> to vector<8x64xf32>
    %438 = arith.mulf %435, %422 : vector<8x64xf32>
    %439 = arith.mulf %434, %436 : vector<8x64xf32>
    %440 = arith.addf %438, %439 : vector<8x64xf32>
    %441 = math.tanh %440 : vector<8x64xf32>
    %442 = arith.mulf %437, %441 : vector<8x64xf32>
    %443 = vector.extract_strided_slice %313 {offsets = [56, 0], sizes = [8, 256], strides = [1, 1]} : vector<64x256xf32> to vector<8x256xf32>
    %cst_72 = arith.constant dense<0.000000e+00> : vector<8x256xf32>
    %444 = tpu.matmul %442, %314, %cst_72 {dimension_numbers = #tpu.dot_dimension_numbers<[1], [0], [0], [1], [0, 0, 1, 1], [], []>} : vector<8x64xf32>, vector<64x256xf32>, vector<8x256xf32> -> vector<8x256xf32>
    %445 = arith.addf %443, %444 : vector<8x256xf32>
    %446 = arith.negf %445 : vector<8x256xf32>
    %447 = math.exp %446 : vector<8x256xf32>
    %cst_73 = arith.constant 1.000000e+00 : f32
    %448 = vector.broadcast %cst_73 : f32 to vector<8x256xf32>
    %449 = arith.addf %448, %447 : vector<8x256xf32>
    %450 = arith.divf %448, %449 : vector<8x256xf32>
    %451 = math.tanh %445 : vector<8x256xf32>
    %452 = vector.extract_strided_slice %450 {offsets = [0, 0], sizes = [8, 64], strides = [1, 1]} : vector<8x256xf32> to vector<8x64xf32>
    %453 = vector.extract_strided_slice %450 {offsets = [0, 64], sizes = [8, 64], strides = [1, 1]} : vector<8x256xf32> to vector<8x64xf32>
    %454 = vector.extract_strided_slice %451 {offsets = [0, 128], sizes = [8, 64], strides = [1, 1]} : vector<8x256xf32> to vector<8x64xf32>
    %455 = vector.extract_strided_slice %450 {offsets = [0, 192], sizes = [8, 64], strides = [1, 1]} : vector<8x256xf32> to vector<8x64xf32>
    %456 = arith.mulf %453, %440 : vector<8x64xf32>
    %457 = arith.mulf %452, %454 : vector<8x64xf32>
    %458 = arith.addf %456, %457 : vector<8x64xf32>
    %459 = math.tanh %458 : vector<8x64xf32>
    %460 = arith.mulf %455, %459 : vector<8x64xf32>
    %c0_74 = arith.constant 0 : index
    %c0_75 = arith.constant 0 : index
    %461 = vector.load %arg10[%c0_74, %c0_75] : memref<64x32xf32, #tpu.memory_space<vmem>>, vector<64x32xf32>
    %cst_76 = arith.constant dense<0.000000e+00> : vector<8x32xf32>
    %462 = tpu.matmul %460, %461, %cst_76 {dimension_numbers = #tpu.dot_dimension_numbers<[1], [0], [0], [1], [0, 0, 1, 1], [], []>} : vector<8x64xf32>, vector<64x32xf32>, vector<8x32xf32> -> vector<8x32xf32>
    %c0_77 = arith.constant 0 : index
    %c0_78 = arith.constant 0 : index
    %463 = vector.load %arg11[%c0_77, %c0_78] : memref<1x32xf32, #tpu.memory_space<vmem>>, vector<1x32xf32>
    %464 = vector.broadcast %463 : vector<1x32xf32> to vector<8x32xf32>
    %465 = arith.addf %462, %464 : vector<8x32xf32>
    %cst_79 = arith.constant 0.000000e+00 : f32
    %466 = vector.broadcast %cst_79 : f32 to vector<8x32xf32>
    %467 = arith.maximumf %465, %466 : vector<8x32xf32>
    %c0_80 = arith.constant 0 : index
    %c0_81 = arith.constant 0 : index
    %468 = vector.load %arg12[%c0_80, %c0_81] : memref<32x1xf32, #tpu.memory_space<vmem>>, vector<32x1xf32>
    %cst_82 = arith.constant dense<0.000000e+00> : vector<8x1xf32>
    %469 = tpu.matmul %467, %468, %cst_82 {dimension_numbers = #tpu.dot_dimension_numbers<[1], [0], [0], [1], [0, 0, 1, 1], [], []>} : vector<8x32xf32>, vector<32x1xf32>, vector<8x1xf32> -> vector<8x1xf32>
    %c0_83 = arith.constant 0 : index
    %c0_84 = arith.constant 0 : index
    %470 = vector.load %arg13[%c0_83, %c0_84] : memref<1x1xf32, #tpu.memory_space<vmem>>, vector<1x1xf32>
    %471 = vector.broadcast %470 : vector<1x1xf32> to vector<8x1xf32>
    %472 = arith.addf %469, %471 : vector<8x1xf32>
    %c0_85 = arith.constant 0 : index
    %c0_86 = arith.constant 0 : index
    %473 = vector.load %arg14[%c0_85, %c0_86] : memref<8x1xf32, #tpu.memory_space<vmem>>, vector<8x1xf32>
    tpu.vector_store %arg14[%c0_85, %c0_86], %472 {strides = array<i32>} : memref<8x1xf32, #tpu.memory_space<vmem>>, vector<8x1xf32>,
    return
  }
}

</mosaic_0001>

<llo_original>
// kernel: lstm_predictor_forward.1
$region0: #{lstm_predictor_forward.1}
  #allocation0 [shape = 'u32[]', space=smem, size = 0x4, offset = 0x4, fixed_abs, tag = 'smem constant byte address 0x4 - core index']
  #allocation1 [shape = 'u32[144,128]{1,0:T(1,128)}', space=vmem, size = 0x12000, scoped, tag = 'internal scratch']
  #allocation2 [shape = 'f32[1,1]{1,0:T(1,128)S(1)}', space=vmem, size = 0x200, scoped, tag = 'scoped memory for lstm_predictor_forward.1']
  %s0 = inlined_call_operand.vmem [shape: f32[64,1], index: 0, kind: input, shape index: {}]
  %s1 = inlined_call_operand.vmem [shape: f32[1,256], index: 1, kind: input, shape index: {}]
  %s2 = inlined_call_operand.vmem [shape: f32[64,256], index: 2, kind: input, shape index: {}]
  %s3 = inlined_call_operand.hbm [shape: f32[1,256], index: 3, kind: input, shape index: {}]
  %s4 = inlined_call_operand.vmem [shape: f32[64,256], index: 4, kind: input, shape index: {}]
  %s5 = inlined_call_operand.hbm [shape: f32[64,256], index: 5, kind: input, shape index: {}]
  %s6 = inlined_call_operand.hbm [shape: f32[1,256], index: 6, kind: input, shape index: {}]
  %s7 = inlined_call_operand.hbm [shape: f32[64,256], index: 7, kind: input, shape index: {}]
  %s8 = inlined_call_operand.hbm [shape: f32[64,256], index: 8, kind: input, shape index: {}]
  %s9 = inlined_call_operand.hbm [shape: f32[1,256], index: 9, kind: input, shape index: {}]
  %s10 = inlined_call_operand.vmem [shape: f32[64,32], index: 10, kind: input, shape index: {}]
  %s11 = inlined_call_operand.hbm [shape: f32[1,32], index: 11, kind: input, shape index: {}]
  %s12 = inlined_call_operand.vmem [shape: f32[32,1], index: 12, kind: input, shape index: {}]
  %s13 = inlined_call_operand.<no memory space> [shape: f32[1,1], index: 13, kind: input, shape index: {}]
  %s14 = inlined_call_operand.vmem [shape: f32[8,1], index: 14, kind: output, shape index: {}]
  %s15 = sld [smem:[#allocation0]]
  $region94: #{lstm_predictor_forward.1} parent=0
    _
  %s17 = ssub.s32 1, %s15
  %s18 = scalar_select 0, %s17, %s15
  %v19 = vstv %s13
  %20 = vst [vmem:[#allocation2] sm:$0x1] %v19
  $region1: #{lstm_predictor_forward.1} parent=0
    #allocation3 [shape = 'u8[1024]{0}', space=vmem, size = 0x400, scoped, tag = 'input window, operand 3, single buffered']
    #allocation4 [shape = 's32[1]{0}', space=sflag, size = 0x4, scoped, tag = 'scoped memory for lstm_predictor_forward.1']
    #allocation5 [shape = 'u8[65536]{0}', space=vmem, size = 0x10000, scoped, tag = 'input window, operand 5, single buffered']
    #allocation6 [shape = 's32[1]{0}', space=sflag, size = 0x4, scoped, tag = 'scoped memory for lstm_predictor_forward.1']
    #allocation7 [shape = 'u8[1024]{0}', space=vmem, size = 0x400, scoped, tag = 'input window, operand 6, single buffered']
    #allocation8 [shape = 'u8[65536]{0}', space=vmem, size = 0x10000, scoped, tag = 'input window, operand 7, single buffered']
    #allocation9 [shape = 's32[1]{0}', space=sflag, size = 0x4, scoped, tag = 'scoped memory for lstm_predictor_forward.1']
    #allocation10 [shape = 'u8[65536]{0}', space=vmem, size = 0x10000, scoped, tag = 'input window, operand 8, single buffered']
    #allocation11 [shape = 'u8[1024]{0}', space=vmem, size = 0x400, scoped, tag = 'input window, operand 9, single buffered']
    #allocation12 [shape = 's32[1]{0}', space=sflag, size = 0x4, scoped, tag = 'scoped memory for lstm_predictor_forward.1']
    #allocation13 [shape = 'u8[512]{0}', space=vmem, size = 0x400, scoped, tag = 'input window, operand 11, single buffered']
    %21 = vsyncpa [#allocation4], 0
    %22 = vsyncpa [#allocation6], 0
    %23 = vsyncpa [#allocation9], 0
    %24 = vsyncpa [#allocation12], 0
    // Predicated region
    $region2: #{lstm_predictor_forward.1} parent=1 // pred_check
      _
    $region3: #{lstm_predictor_forward.1} parent=1 // pred_check_branch
      %26 = sbr.rel (0) target = $region5
    $region4: #{lstm_predictor_forward.1} parent=1 // pred_region
      _
    $region5: #{lstm_predictor_forward.1} parent=1 // pred_fallthru
      _
    // Predicated region
    $region6: #{lstm_predictor_forward.1} parent=1 // pred_check
      _
    $region7: #{lstm_predictor_forward.1} parent=1 // pred_check_branch
      %28 = sbr.rel (0) target = $region9
    $region8: #{lstm_predictor_forward.1} parent=1 // pred_region
      _
    $region9: #{lstm_predictor_forward.1} parent=1 // pred_fallthru
      _
    // Predicated region
    $region10: #{lstm_predictor_forward.1} parent=1 // pred_check
      _
    $region11: #{lstm_predictor_forward.1} parent=1 // pred_check_branch
      %30 = sbr.rel (0) target = $region13
    $region12: #{lstm_predictor_forward.1} parent=1 // pred_region
      _
    $region13: #{lstm_predictor_forward.1} parent=1 // pred_fallthru
      _
    // Predicated region
    $region14: #{lstm_predictor_forward.1} parent=1 // pred_check
      _
    $region15: #{lstm_predictor_forward.1} parent=1 // pred_check_branch
      %32 = sbr.rel (0) target = $region17
    $region16: #{lstm_predictor_forward.1} parent=1 // pred_region
      %s34 = ssub.s32 32, 32
      %35 = vsyncadd [#allocation4], %s34
      %s37 = sshll.u32 [#allocation3], 4
      %s38 = int_to_ptr.vmem [resolvable:$true] %s37
      %40 = dma.hbm_to_vmem [thread:$0]  %s3, 32, %s38, [#allocation4]
    $region17: #{lstm_predictor_forward.1} parent=1 // pred_fallthru
      _
    // Predicated region
    $region18: #{lstm_predictor_forward.1} parent=1 // pred_check
      _
    $region19: #{lstm_predictor_forward.1} parent=1 // pred_check_branch
      %42 = sbr.rel (0) target = $region21
    $region20: #{lstm_predictor_forward.1} parent=1 // pred_region
      _
    $region21: #{lstm_predictor_forward.1} parent=1 // pred_fallthru
      _
    // Predicated region
    $region22: #{lstm_predictor_forward.1} parent=1 // pred_check
      _
    $region23: #{lstm_predictor_forward.1} parent=1 // pred_check_branch
      %44 = sbr.rel (0) target = $region25
    $region24: #{lstm_predictor_forward.1} parent=1 // pred_region
      %s46 = ssub.s32 2048, 2048
      %47 = vsyncadd [#allocation6], %s46
      %s48 = sshll.u32 [#allocation5], 4
      %s49 = int_to_ptr.vmem [resolvable:$true] %s48
      %54 = dma.hbm_to_vmem [thread:$0]  %s5, 2048, %s49, [#allocation6], 256, 256, 16
    $region25: #{lstm_predictor_forward.1} parent=1 // pred_fallthru
      _
    // Predicated region
    $region26: #{lstm_predictor_forward.1} parent=1 // pred_check
      _
    $region27: #{lstm_predictor_forward.1} parent=1 // pred_check_branch
      %56 = sbr.rel (0) target = $region29
    $region28: #{lstm_predictor_forward.1} parent=1 // pred_region
      %s58 = ssub.s32 32, 32
      %59 = vsyncadd [#allocation6], %s58
      %s61 = sshll.u32 [#allocation7], 4
      %s62 = int_to_ptr.vmem [resolvable:$true] %s61
      %64 = dma.hbm_to_vmem [thread:$0]  %s6, 32, %s62, [#allocation6]
    $region29: #{lstm_predictor_forward.1} parent=1 // pred_fallthru
      _
    // Predicated region
    $region30: #{lstm_predictor_forward.1} parent=1 // pred_check
      _
    $region31: #{lstm_predictor_forward.1} parent=1 // pred_check_branch
      %66 = sbr.rel (0) target = $region33
    $region32: #{lstm_predictor_forward.1} parent=1 // pred_region
      %s68 = ssub.s32 2048, 2048
      %69 = vsyncadd [#allocation9], %s68
      %s70 = sshll.u32 [#allocation8], 4
      %s71 = int_to_ptr.vmem [resolvable:$true] %s70
      %76 = dma.hbm_to_vmem [thread:$0]  %s7, 2048, %s71, [#allocation9], 256, 256, 16
    $region33: #{lstm_predictor_forward.1} parent=1 // pred_fallthru
      _
    // Predicated region
    $region34: #{lstm_predictor_forward.1} parent=1 // pred_check
      _
    $region35: #{lstm_predictor_forward.1} parent=1 // pred_check_branch
      %78 = sbr.rel (0) target = $region37
    $region36: #{lstm_predictor_forward.1} parent=1 // pred_region
      %s80 = ssub.s32 2048, 2048
      %81 = vsyncadd [#allocation9], %s80
      %s82 = sshll.u32 [#allocation10], 4
      %s83 = int_to_ptr.vmem [resolvable:$true] %s82
      %88 = dma.hbm_to_vmem [thread:$0]  %s8, 2048, %s83, [#allocation9], 256, 256, 16
    $region37: #{lstm_predictor_forward.1} parent=1 // pred_fallthru
      _
    // Predicated region
    $region38: #{lstm_predictor_forward.1} parent=1 // pred_check
      _
    $region39: #{lstm_predictor_forward.1} parent=1 // pred_check_branch
      %90 = sbr.rel (0) target = $region41
    $region40: #{lstm_predictor_forward.1} parent=1 // pred_region
      %s92 = ssub.s32 32, 32
      %93 = vsyncadd [#allocation12], %s92
      %s95 = sshll.u32 [#allocation11], 4
      %s96 = int_to_ptr.vmem [resolvable:$true] %s95
      %98 = dma.hbm_to_vmem [thread:$0]  %s9, 32, %s96, [#allocation12]
    $region41: #{lstm_predictor_forward.1} parent=1 // pred_fallthru
      _
    // Predicated region
    $region42: #{lstm_predictor_forward.1} parent=1 // pred_check
      _
    $region43: #{lstm_predictor_forward.1} parent=1 // pred_check_branch
      %100 = sbr.rel (0) target = $region45
    $region44: #{lstm_predictor_forward.1} parent=1 // pred_region
      _
    $region45: #{lstm_predictor_forward.1} parent=1 // pred_fallthru
      _
    // Predicated region
    $region46: #{lstm_predictor_forward.1} parent=1 // pred_check
      _
    $region47: #{lstm_predictor_forward.1} parent=1 // pred_check_branch
      %102 = sbr.rel (0) target = $region49
    $region48: #{lstm_predictor_forward.1} parent=1 // pred_region
      %s104 = ssub.s32 16, 16
      %105 = vsyncadd [#allocation12], %s104
      %s107 = sshll.u32 [#allocation13], 4
      %s108 = int_to_ptr.vmem [resolvable:$true] %s107
      %110 = dma.hbm_to_vmem [thread:$0]  %s11, 16, %s108, [#allocation12]
    $region49: #{lstm_predictor_forward.1} parent=1 // pred_fallthru
      _
    // Predicated region
    $region50: #{lstm_predictor_forward.1} parent=1 // pred_check
      _
    $region51: #{lstm_predictor_forward.1} parent=1 // pred_check_branch
      %112 = sbr.rel (0) target = $region53
    $region52: #{lstm_predictor_forward.1} parent=1 // pred_region
      _
    $region53: #{lstm_predictor_forward.1} parent=1 // pred_fallthru
      _
    // Predicated region
    $region54: #{lstm_predictor_forward.1} parent=1 // pred_check
      _
    $region55: #{lstm_predictor_forward.1} parent=1 // pred_check_branch
      %114 = sbr.rel (0) target = $region57
    $region56: #{lstm_predictor_forward.1} parent=1 // pred_region
      _
    $region57: #{lstm_predictor_forward.1} parent=1 // pred_fallthru
      _
    // Predicated region
    $region58: #{lstm_predictor_forward.1} parent=1 // pred_check
      _
    $region59: #{lstm_predictor_forward.1} parent=1 // pred_check_branch
      %116 = sbr.rel (0) target = $region61
    $region60: #{lstm_predictor_forward.1} parent=1 // pred_region
      %117 = dma.done [#allocation4], 32
    $region61: #{lstm_predictor_forward.1} parent=1 // pred_fallthru
      _
    // Predicated region
    $region62: #{lstm_predictor_forward.1} parent=1 // pred_check
      _
    $region63: #{lstm_predictor_forward.1} parent=1 // pred_check_branch
      %119 = sbr.rel (0) target = $region65
    $region64: #{lstm_predictor_forward.1} parent=1 // pred_region
      %120 = dma.done [#allocation6], 2048
    $region65: #{lstm_predictor_forward.1} parent=1 // pred_fallthru
      _
    // Predicated region
    $region66: #{lstm_predictor_forward.1} parent=1 // pred_check
      _
    $region67: #{lstm_predictor_forward.1} parent=1 // pred_check_branch
      %122 = sbr.rel (0) target = $region69
    $region68: #{lstm_predictor_forward.1} parent=1 // pred_region
      %123 = dma.done [#allocation6], 32
    $region69: #{lstm_predictor_forward.1} parent=1 // pred_fallthru
      _
    // Predicated region
    $region70: #{lstm_predictor_forward.1} parent=1 // pred_check
      _
    $region71: #{lstm_predictor_forward.1} parent=1 // pred_check_branch
      %125 = sbr.rel (0) target = $region73
    $region72: #{lstm_predictor_forward.1} parent=1 // pred_region
      %126 = dma.done [#allocation9], 2048
    $region73: #{lstm_predictor_forward.1} parent=1 // pred_fallthru
      _
    // Predicated region
    $region74: #{lstm_predictor_forward.1} parent=1 // pred_check
      _
    $region75: #{lstm_predictor_forward.1} parent=1 // pred_check_branch
      %128 = sbr.rel (0) target = $region77
    $region76: #{lstm_predictor_forward.1} parent=1 // pred_region
      %129 = dma.done [#allocation9], 2048
    $region77: #{lstm_predictor_forward.1} parent=1 // pred_fallthru
      _
    // Predicated region
    $region78: #{lstm_predictor_forward.1} parent=1 // pred_check
      _
    $region79: #{lstm_predictor_forward.1} parent=1 // pred_check_branch
      %131 = sbr.rel (0) target = $region81
    $region80: #{lstm_predictor_forward.1} parent=1 // pred_region
      %132 = dma.done [#allocation12], 32
    $region81: #{lstm_predictor_forward.1} parent=1 // pred_fallthru
      _
    // Predicated region
    $region82: #{lstm_predictor_forward.1} parent=1 // pred_check
      _
    $region83: #{lstm_predictor_forward.1} parent=1 // pred_check_branch
      %134 = sbr.rel (0) target = $region85
    $region84: #{lstm_predictor_forward.1} parent=1 // pred_region
      %135 = dma.done [#allocation12], 16
    $region85: #{lstm_predictor_forward.1} parent=1 // pred_fallthru
      _
    %v136 = vld [vmem:[%s0] sm:$0xff]
    %v137 = vld [vmem:[%s0 + $0x8] sm:$0xff]
    %v138 = vld [vmem:[%s0 + $0x10] sm:$0xff]
    %v139 = vld [vmem:[%s0 + $0x18] sm:$0xff]
    %v140 = vld [vmem:[%s0 + $0x20] sm:$0xff]
    %v141 = vld [vmem:[%s0 + $0x28] sm:$0xff]
    %v142 = vld [vmem:[%s0 + $0x30] sm:$0xff]
    %v143 = vld [vmem:[%s0 + $0x38] sm:$0xff]
    %v144 = vld [vmem:[%s1] sm:$0x3]
    %146 = vset.pattern.permute.xlu0 0
    %147 = vperm.xlu0 %146, %v136
    %v148 = vpop.permute.xlu0 %147
    %151 = vset.pattern.permute.xlu0 0
    %152 = vperm.xlu0 %151, %v137
    %v153 = vpop.permute.xlu0 %152
    %156 = vset.pattern.permute.xlu0 0
    %157 = vperm.xlu0 %156, %v138
    %v158 = vpop.permute.xlu0 %157
    %161 = vset.pattern.permute.xlu0 0
    %162 = vperm.xlu0 %161, %v139
    %v163 = vpop.permute.xlu0 %162
    %166 = vset.pattern.permute.xlu0 0
    %167 = vperm.xlu0 %166, %v140
    %v168 = vpop.permute.xlu0 %167
    %171 = vset.pattern.permute.xlu0 0
    %172 = vperm.xlu0 %171, %v141
    %v173 = vpop.permute.xlu0 %172
    %176 = vset.pattern.permute.xlu0 0
    %177 = vperm.xlu0 %176, %v142
    %v178 = vpop.permute.xlu0 %177
    %181 = vset.pattern.permute.xlu0 0
    %182 = vperm.xlu0 %181, %v143
    %v183 = vpop.permute.xlu0 %182
    %v186 = vlaneseq
    %v187 = vshrl.u32 %v186, 7
    %v188 = vsub.s32 0, %v187
    %v189 = vrot.slane %v144, %v188
    %v190 = vlaneseq
    %v191 = vshrl.u32 %v190, 7
    %v192 = vsub.s32 1, %v191
    %v193 = vrot.slane %v144, %v192
    %v196 = vmul.f32 %v148, %v189
    %v197 = vmul.f32 %v148, %v193
    %v198 = vmul.f32 %v153, %v189
    %v199 = vmul.f32 %v153, %v193
    %v200 = vmul.f32 %v158, %v189
    %v201 = vmul.f32 %v158, %v193
    %v202 = vmul.f32 %v163, %v189
    %v203 = vmul.f32 %v163, %v193
    %v204 = vmul.f32 %v168, %v189
    %v205 = vmul.f32 %v168, %v193
    %v206 = vmul.f32 %v173, %v189
    %v207 = vmul.f32 %v173, %v193
    %v208 = vmul.f32 %v178, %v189
    %v209 = vmul.f32 %v178, %v193
    %v210 = vmul.f32 %v183, %v189
    %v211 = vmul.f32 %v183, %v193
    %v212 = vld [vmem:[#allocation3] sm:$0x3]
    %v214 = vlaneseq
    %v215 = vshrl.u32 %v214, 7
    %v216 = vsub.s32 0, %v215
    %v217 = vrot.slane %v212, %v216
    %v218 = vlaneseq
    %v219 = vshrl.u32 %v218, 7
    %v220 = vsub.s32 1, %v219
    %v221 = vrot.slane %v212, %v220
    %v224 = vadd.f32 %v196, %v217
    %v225 = vadd.f32 %v197, %v221
    %v226 = vadd.f32 %v198, %v217
    %v227 = vadd.f32 %v199, %v221
    %v228 = vadd.f32 %v200, %v217
    %v229 = vadd.f32 %v201, %v221
    %v230 = vadd.f32 %v202, %v217
    %v231 = vadd.f32 %v203, %v221
    %v232 = vadd.f32 %v204, %v217
    %v233 = vadd.f32 %v205, %v221
    %v234 = vadd.f32 %v206, %v217
    %v235 = vadd.f32 %v207, %v221
    %v236 = vadd.f32 %v208, %v217
    %v237 = vadd.f32 %v209, %v221
    %v238 = vadd.f32 %v210, %v217
    %v239 = vadd.f32 %v211, %v221
    %v240 = vld [vmem:[%s2] sm:$0xff]
    %v241 = vld [vmem:[%s2 + $0x8] sm:$0xff]
    %v242 = vld [vmem:[%s2 + $0x10] sm:$0xff]
    %v243 = vld [vmem:[%s2 + $0x18] sm:$0xff]
    %v244 = vld [vmem:[%s2 + $0x20] sm:$0xff]
    %v245 = vld [vmem:[%s2 + $0x28] sm:$0xff]
    %v246 = vld [vmem:[%s2 + $0x30] sm:$0xff]
    %v247 = vld [vmem:[%s2 + $0x38] sm:$0xff]
    %v248 = vld [vmem:[%s2 + $0x40] sm:$0xff]
    %v249 = vld [vmem:[%s2 + $0x48] sm:$0xff]
    %v250 = vld [vmem:[%s2 + $0x50] sm:$0xff]
    %v251 = vld [vmem:[%s2 + $0x58] sm:$0xff]
    %v252 = vld [vmem:[%s2 + $0x60] sm:$0xff]
    %v253 = vld [vmem:[%s2 + $0x68] sm:$0xff]
    %v254 = vld [vmem:[%s2 + $0x70] sm:$0xff]
    %v255 = vld [vmem:[%s2 + $0x78] sm:$0xff]
    %vm256 = vcmask 523264
    %v258 = vsel %vm256, 0.0, 0
    %260 = vmatprep.subr.mxu0 %v241
    %261 = vmatpush1.msra.mxu0 %v240
    %262 = vmatprep.subr.mxu0 %v243
    %263 = vmatpush1.msra.mxu0 %v242
    %264 = vmatprep.subr.mxu0 %v245
    %265 = vmatpush1.msra.mxu0 %v244
    %266 = vmatprep.subr.mxu0 %v247
    %267 = vmatpush1.msra.mxu0 %v246
    %268 = vmatprep.subr.mxu0 %v249
    %269 = vmatpush1.msra.mxu0 %v248
    %270 = vmatprep.subr.mxu0 %v251
    %271 = vmatpush1.msra.mxu0 %v250
    %272 = vmatprep.subr.mxu0 %v253
    %273 = vmatpush1.msra.mxu0 %v252
    %274 = vmatprep.subr.mxu0 %v255
    %275 = vmatpush1.msra.mxu0 %v254
    %276 = vmatprep.subr.mxu0 0.0
    %277 = vmatpush1.msra.mxu0 0.0
    %278 = vmatprep.subr.mxu0 0.0
    %279 = vmatpush1.msra.mxu0 0.0
    %280 = vmatprep.subr.mxu0 0.0
    %281 = vmatpush1.msra.mxu0 0.0
    %282 = vmatprep.subr.mxu0 0.0
    %283 = vmatpush1.msra.mxu0 0.0
    %284 = vmatprep.subr.mxu0 0.0
    %285 = vmatpush1.msra.mxu0 0.0
    %286 = vmatprep.subr.mxu0 0.0
    %287 = vmatpush1.msra.mxu0 0.0
    %288 = vmatprep.subr.mxu0 0.0
    %289 = vmatpush1.msra.mxu0 0.0
    %290 = vmatprep.subr.mxu0 0.0
    %291 = vmatpush1.msra.mxu0 0.0
    %292 = vmatprep.subr.mxu0 0.0
    %293 = vmatpush1.msra.mxu0 0.0
    %294 = vmatprep.subr.mxu0 0.0
    %295 = vmatpush1.msra.mxu0 0.0
    %296 = vmatprep.subr.mxu0 0.0
    %297 = vmatpush1.msra.mxu0 0.0
    %298 = vmatprep.subr.mxu0 0.0
    %299 = vmatpush1.msra.mxu0 0.0
    %300 = vmatprep.subr.mxu0 0.0
    %301 = vmatpush1.msra.mxu0 0.0
    %302 = vmatprep.subr.mxu0 0.0
    %303 = vmatpush1.msra.mxu0 0.0
    %304 = vmatprep.subr.mxu0 0.0
    %305 = vmatpush1.msra.mxu0 0.0
    %306 = vmatprep.subr.mxu0 0.0
    %307 = vmatpush1.msra.mxu0 0.0
    %308 = vmatprep.subr.mxu0 0.0
    %309 = vmatpush1.msra.mxu0 0.0
    %310 = vmatprep.subr.mxu0 0.0
    %311 = vmatpush1.msra.mxu0 0.0
    %312 = vmatprep.subr.mxu0 0.0
    %313 = vmatpush1.msra.mxu0 0.0
    %314 = vmatprep.subr.mxu0 0.0
    %315 = vmatpush1.msra.mxu0 0.0
    %316 = vmatprep.subr.mxu0 0.0
    %317 = vmatpush1.msra.mxu0 0.0
    %318 = vmatprep.subr.mxu0 0.0
    %319 = vmatpush1.msra.mxu0 0.0
    %320 = vmatprep.subr.mxu0 0.0
    %321 = vmatpush1.msra.mxu0 0.0
    %322 = vmatprep.subr.mxu0 0.0
    %323 = vmatpush1.msra.mxu0 0.0
    %324 = vmatprep.mubr.f32.mxu0 0.0
    %325 = vmatmul.mubr.f32.gmra.mrb[0].mxu0 %v258
    %v326 = vpop.f32.mrb[0].mxu0
    %v327 = vadd.f32 0.0, %v326
    %v328 = vpop.f32.mrb[0].mxu0
    %v329 = vadd.f32 0.0, %v328
    %330 = vdwg.mxu0
    %v331 = vadd.f32 %v224, %v327
    %v332 = vadd.f32 %v225, %v329
    %v333 = vxor.u32 %v331, 2147483648
    %v334 = vxor.u32 %v332, 2147483648
    %v335 = vmul.f32 %v333, 1.442695
    %v336 = vpow.pop %v335
    %v337 = vmul.f32 %v334, 1.442695
    %v338 = vpow.pop %v337
    %v339 = vadd.f32 %v336, 1.0
    %v340 = vadd.f32 %v338, 1.0
    %v341 = vrcp.pop %v339
    %v342 = vmul.f32 1.0, %v341
    %v343 = vrcp.pop %v340
    %v344 = vmul.f32 1.0, %v343
    %v345 = vtanh.pop %v332
    %v346 = vmul.f32 %v342, 0.0
    %v347 = vmul.f32 %v342, %v345
    %349 = vrot.lane.b32.xlu0 %v347, 64
    %v350 = vpop.permute.xlu0 %349
    %v352 = vadd.f32 %v346, %v350
    %v353 = vtanh.pop %v352
    %v354 = vmul.f32 %v344, %v353
    %356 = vrot.lane.b32.xlu0 %v354, 64
    %v357 = vpop.permute.xlu0 %356
    %v358 = vsel %vm256, %v357, 0
    %360 = vmatprep.subr.mxu0 %v241
    %361 = vmatpush1.msra.mxu0 %v240
    %362 = vmatprep.subr.mxu0 %v243
    %363 = vmatpush1.msra.mxu0 %v242
    %364 = vmatprep.subr.mxu0 %v245
    %365 = vmatpush1.msra.mxu0 %v244
    %366 = vmatprep.subr.mxu0 %v247
    %367 = vmatpush1.msra.mxu0 %v246
    %368 = vmatprep.subr.mxu0 %v249
    %369 = vmatpush1.msra.mxu0 %v248
    %370 = vmatprep.subr.mxu0 %v251
    %371 = vmatpush1.msra.mxu0 %v250
    %372 = vmatprep.subr.mxu0 %v253
    %373 = vmatpush1.msra.mxu0 %v252
    %374 = vmatprep.subr.mxu0 %v255
    %375 = vmatpush1.msra.mxu0 %v254
    %376 = vmatprep.subr.mxu0 0.0
    %377 = vmatpush1.msra.mxu0 0.0
    %378 = vmatprep.subr.mxu0 0.0
    %379 = vmatpush1.msra.mxu0 0.0
    %380 = vmatprep.subr.mxu0 0.0
    %381 = vmatpush1.msra.mxu0 0.0
    %382 = vmatprep.subr.mxu0 0.0
    %383 = vmatpush1.msra.mxu0 0.0
    %384 = vmatprep.subr.mxu0 0.0
    %385 = vmatpush1.msra.mxu0 0.0
    %386 = vmatprep.subr.mxu0 0.0
    %387 = vmatpush1.msra.mxu0 0.0
    %388 = vmatprep.subr.mxu0 0.0
    %389 = vmatpush1.msra.mxu0 0.0
    %390 = vmatprep.subr.mxu0 0.0
    %391 = vmatpush1.msra.mxu0 0.0
    %392 = vmatprep.subr.mxu0 0.0
    %393 = vmatpush1.msra.mxu0 0.0
    %394 = vmatprep.subr.mxu0 0.0
    %395 = vmatpush1.msra.mxu0 0.0
    %396 = vmatprep.subr.mxu0 0.0
    %397 = vmatpush1.msra.mxu0 0.0
    %398 = vmatprep.subr.mxu0 0.0
    %399 = vmatpush1.msra.mxu0 0.0
    %400 = vmatprep.subr.mxu0 0.0
    %401 = vmatpush1.msra.mxu0 0.0
    %402 = vmatprep.subr.mxu0 0.0
    %403 = vmatpush1.msra.mxu0 0.0
    %404 = vmatprep.subr.mxu0 0.0
    %405 = vmatpush1.msra.mxu0 0.0
    %406 = vmatprep.subr.mxu0 0.0
    %407 = vmatpush1.msra.mxu0 0.0
    %408 = vmatprep.subr.mxu0 0.0
    %409 = vmatpush1.msra.mxu0 0.0
    %410 = vmatprep.subr.mxu0 0.0
    %411 = vmatpush1.msra.mxu0 0.0
    %412 = vmatprep.subr.mxu0 0.0
    %413 = vmatpush1.msra.mxu0 0.0
    %414 = vmatprep.subr.mxu0 0.0
    %415 = vmatpush1.msra.mxu0 0.0
    %416 = vmatprep.subr.mxu0 0.0
    %417 = vmatpush1.msra.mxu0 0.0
    %418 = vmatprep.subr.mxu0 0.0
    %419 = vmatpush1.msra.mxu0 0.0
    %420 = vmatprep.subr.mxu0 0.0
    %421 = vmatpush1.msra.mxu0 0.0
    %422 = vmatprep.subr.mxu0 0.0
    %423 = vmatpush1.msra.mxu0 0.0
    %424 = vmatprep.mubr.f32.mxu0 0.0
    %425 = vmatmul.mubr.f32.gmra.mrb[0].mxu0 %v358
    %v426 = vpop.f32.mrb[0].mxu0
    %v427 = vadd.f32 0.0, %v426
    %v428 = vpop.f32.mrb[0].mxu0
    %v429 = vadd.f32 0.0, %v428
    %430 = vdwg.mxu0
    %v431 = vadd.f32 %v226, %v427
    %v432 = vadd.f32 %v227, %v429
    %v433 = vxor.u32 %v431, 2147483648
    %v434 = vxor.u32 %v432, 2147483648
    %v435 = vmul.f32 %v433, 1.442695
    %v436 = vpow.pop %v435
    %v437 = vmul.f32 %v434, 1.442695
    %v438 = vpow.pop %v437
    %v439 = vadd.f32 %v436, 1.0
    %v440 = vadd.f32 %v438, 1.0
    %v441 = vrcp.pop %v439
    %v442 = vmul.f32 1.0, %v441
    %v443 = vrcp.pop %v440
    %v444 = vmul.f32 1.0, %v443
    %v445 = vtanh.pop %v432
    %v446 = vmul.f32 %v442, %v352
    %v447 = vmul.f32 %v442, %v445
    %449 = vrot.lane.b32.xlu0 %v447, 64
    %v450 = vpop.permute.xlu0 %449
    %v452 = vadd.f32 %v446, %v450
    %v453 = vtanh.pop %v452
    %v454 = vmul.f32 %v444, %v453
    %456 = vrot.lane.b32.xlu0 %v454, 64
    %v457 = vpop.permute.xlu0 %456
    %v458 = vsel %vm256, %v457, 0
    %460 = vmatprep.subr.mxu0 %v241
    %461 = vmatpush1.msra.mxu0 %v240
    %462 = vmatprep.subr.mxu0 %v243
    %463 = vmatpush1.msra.mxu0 %v242
    %464 = vmatprep.subr.mxu0 %v245
    %465 = vmatpush1.msra.mxu0 %v244
    %466 = vmatprep.subr.mxu0 %v247
    %467 = vmatpush1.msra.mxu0 %v246
    %468 = vmatprep.subr.mxu0 %v249
    %469 = vmatpush1.msra.mxu0 %v248
    %470 = vmatprep.subr.mxu0 %v251
    %471 = vmatpush1.msra.mxu0 %v250
    %472 = vmatprep.subr.mxu0 %v253
    %473 = vmatpush1.msra.mxu0 %v252
    %474 = vmatprep.subr.mxu0 %v255
    %475 = vmatpush1.msra.mxu0 %v254
    %476 = vmatprep.subr.mxu0 0.0
    %477 = vmatpush1.msra.mxu0 0.0
    %478 = vmatprep.subr.mxu0 0.0
    %479 = vmatpush1.msra.mxu0 0.0
    %480 = vmatprep.subr.mxu0 0.0
    %481 = vmatpush1.msra.mxu0 0.0
    %482 = vmatprep.subr.mxu0 0.0
    %483 = vmatpush1.msra.mxu0 0.0
    %484 = vmatprep.subr.mxu0 0.0
    %485 = vmatpush1.msra.mxu0 0.0
    %486 = vmatprep.subr.mxu0 0.0
    %487 = vmatpush1.msra.mxu0 0.0
    %488 = vmatprep.subr.mxu0 0.0
    %489 = vmatpush1.msra.mxu0 0.0
    %490 = vmatprep.subr.mxu0 0.0
    %491 = vmatpush1.msra.mxu0 0.0
    %492 = vmatprep.subr.mxu0 0.0
    %493 = vmatpush1.msra.mxu0 0.0
    %494 = vmatprep.subr.mxu0 0.0
    %495 = vmatpush1.msra.mxu0 0.0
    %496 = vmatprep.subr.mxu0 0.0
    %497 = vmatpush1.msra.mxu0 0.0
    %498 = vmatprep.subr.mxu0 0.0
    %499 = vmatpush1.msra.mxu0 0.0
    %500 = vmatprep.subr.mxu0 0.0
    %501 = vmatpush1.msra.mxu0 0.0
    %502 = vmatprep.subr.mxu0 0.0
    %503 = vmatpush1.msra.mxu0 0.0
    %504 = vmatprep.subr.mxu0 0.0
    %505 = vmatpush1.msra.mxu0 0.0
    %506 = vmatprep.subr.mxu0 0.0
    %507 = vmatpush1.msra.mxu0 0.0
    %508 = vmatprep.subr.mxu0 0.0
    %509 = vmatpush1.msra.mxu0 0.0
    %510 = vmatprep.subr.mxu0 0.0
    %511 = vmatpush1.msra.mxu0 0.0
    %512 = vmatprep.subr.mxu0 0.0
    %513 = vmatpush1.msra.mxu0 0.0
    %514 = vmatprep.subr.mxu0 0.0
    %515 = vmatpush1.msra.mxu0 0.0
    %516 = vmatprep.subr.mxu0 0.0
    %517 = vmatpush1.msra.mxu0 0.0
    %518 = vmatprep.subr.mxu0 0.0
    %519 = vmatpush1.msra.mxu0 0.0
    %520 = vmatprep.subr.mxu0 0.0
    %521 = vmatpush1.msra.mxu0 0.0
    %522 = vmatprep.subr.mxu0 0.0
    %523 = vmatpush1.msra.mxu0 0.0
    %524 = vmatprep.mubr.f32.mxu0 0.0
    %525 = vmatmul.mubr.f32.gmra.mrb[0].mxu0 %v458
    %v526 = vpop.f32.mrb[0].mxu0
    %v527 = vadd.f32 0.0, %v526
    %v528 = vpop.f32.mrb[0].mxu0
    %v529 = vadd.f32 0.0, %v528
    %530 = vdwg.mxu0
    %v531 = vadd.f32 %v228, %v527
    %v532 = vadd.f32 %v229, %v529
    %v533 = vxor.u32 %v531, 2147483648
    %v534 = vxor.u32 %v532, 2147483648
    %v535 = vmul.f32 %v533, 1.442695
    %v536 = vpow.pop %v535
    %v537 = vmul.f32 %v534, 1.442695
    %v538 = vpow.pop %v537
    %v539 = vadd.f32 %v536, 1.0
    %v540 = vadd.f32 %v538, 1.0
    %v541 = vrcp.pop %v539
    %v542 = vmul.f32 1.0, %v541
    %v543 = vrcp.pop %v540
    %v544 = vmul.f32 1.0, %v543
    %v545 = vtanh.pop %v532
    %v546 = vmul.f32 %v542, %v452
    %v547 = vmul.f32 %v542, %v545
    %549 = vrot.lane.b32.xlu0 %v547, 64
    %v550 = vpop.permute.xlu0 %549
    %v552 = vadd.f32 %v546, %v550
    %v553 = vtanh.pop %v552
    %v554 = vmul.f32 %v544, %v553
    %556 = vrot.lane.b32.xlu0 %v554, 64
    %v557 = vpop.permute.xlu0 %556
    %v558 = vsel %vm256, %v557, 0
    %560 = vmatprep.subr.mxu0 %v241
    %561 = vmatpush1.msra.mxu0 %v240
    %562 = vmatprep.subr.mxu0 %v243
    %563 = vmatpush1.msra.mxu0 %v242
    %564 = vmatprep.subr.mxu0 %v245
    %565 = vmatpush1.msra.mxu0 %v244
    %566 = vmatprep.subr.mxu0 %v247
    %567 = vmatpush1.msra.mxu0 %v246
    %568 = vmatprep.subr.mxu0 %v249
    %569 = vmatpush1.msra.mxu0 %v248
    %570 = vmatprep.subr.mxu0 %v251
    %571 = vmatpush1.msra.mxu0 %v250
    %572 = vmatprep.subr.mxu0 %v253
    %573 = vmatpush1.msra.mxu0 %v252
    %574 = vmatprep.subr.mxu0 %v255
    %575 = vmatpush1.msra.mxu0 %v254
    %576 = vmatprep.subr.mxu0 0.0
    %577 = vmatpush1.msra.mxu0 0.0
    %578 = vmatprep.subr.mxu0 0.0
    %579 = vmatpush1.msra.mxu0 0.0
    %580 = vmatprep.subr.mxu0 0.0
    %581 = vmatpush1.msra.mxu0 0.0
    %582 = vmatprep.subr.mxu0 0.0
    %583 = vmatpush1.msra.mxu0 0.0
    %584 = vmatprep.subr.mxu0 0.0
    %585 = vmatpush1.msra.mxu0 0.0
    %586 = vmatprep.subr.mxu0 0.0
    %587 = vmatpush1.msra.mxu0 0.0
    %588 = vmatprep.subr.mxu0 0.0
    %589 = vmatpush1.msra.mxu0 0.0
    %590 = vmatprep.subr.mxu0 0.0
    %591 = vmatpush1.msra.mxu0 0.0
    %592 = vmatprep.subr.mxu0 0.0
    %593 = vmatpush1.msra.mxu0 0.0
    %594 = vmatprep.subr.mxu0 0.0
    %595 = vmatpush1.msra.mxu0 0.0
    %596 = vmatprep.subr.mxu0 0.0
    %597 = vmatpush1.msra.mxu0 0.0
    %598 = vmatprep.subr.mxu0 0.0
    %599 = vmatpush1.msra.mxu0 0.0
    %600 = vmatprep.subr.mxu0 0.0
    %601 = vmatpush1.msra.mxu0 0.0
    %602 = vmatprep.subr.mxu0 0.0
    %603 = vmatpush1.msra.mxu0 0.0
    %604 = vmatprep.subr.mxu0 0.0
    %605 = vmatpush1.msra.mxu0 0.0
    %606 = vmatprep.subr.mxu0 0.0
    %607 = vmatpush1.msra.mxu0 0.0
    %608 = vmatprep.subr.mxu0 0.0
    %609 = vmatpush1.msra.mxu0 0.0
    %610 = vmatprep.subr.mxu0 0.0
    %611 = vmatpush1.msra.mxu0 0.0
    %612 = vmatprep.subr.mxu0 0.0
    %613 = vmatpush1.msra.mxu0 0.0
    %614 = vmatprep.subr.mxu0 0.0
    %615 = vmatpush1.msra.mxu0 0.0
    %616 = vmatprep.subr.mxu0 0.0
    %617 = vmatpush1.msra.mxu0 0.0
    %618 = vmatprep.subr.mxu0 0.0
    %619 = vmatpush1.msra.mxu0 0.0
    %620 = vmatprep.subr.mxu0 0.0
    %621 = vmatpush1.msra.mxu0 0.0
    %622 = vmatprep.subr.mxu0 0.0
    %623 = vmatpush1.msra.mxu0 0.0
    %624 = vmatprep.mubr.f32.mxu0 0.0
    %625 = vmatmul.mubr.f32.gmra.mrb[0].mxu0 %v558
    %v626 = vpop.f32.mrb[0].mxu0
    %v627 = vadd.f32 0.0, %v626
    %v628 = vpop.f32.mrb[0].mxu0
    %v629 = vadd.f32 0.0, %v628
    %630 = vdwg.mxu0
    %v631 = vadd.f32 %v230, %v627
    %v632 = vadd.f32 %v231, %v629
    %v633 = vxor.u32 %v631, 2147483648
    %v634 = vxor.u32 %v632, 2147483648
    %v635 = vmul.f32 %v633, 1.442695
    %v636 = vpow.pop %v635
    %v637 = vmul.f32 %v634, 1.442695
    %v638 = vpow.pop %v637
    %v639 = vadd.f32 %v636, 1.0
    %v640 = vadd.f32 %v638, 1.0
    %v641 = vrcp.pop %v639
    %v642 = vmul.f32 1.0, %v641
    %v643 = vrcp.pop %v640
    %v644 = vmul.f32 1.0, %v643
    %v645 = vtanh.pop %v632
    %v646 = vmul.f32 %v642, %v552
    %v647 = vmul.f32 %v642, %v645
    %649 = vrot.lane.b32.xlu0 %v647, 64
    %v650 = vpop.permute.xlu0 %649
    %v652 = vadd.f32 %v646, %v650
    %v653 = vtanh.pop %v652
    %v654 = vmul.f32 %v644, %v653
    %656 = vrot.lane.b32.xlu0 %v654, 64
    %v657 = vpop.permute.xlu0 %656
    %v658 = vsel %vm256, %v657, 0
    %660 = vmatprep.subr.mxu0 %v241
    %661 = vmatpush1.msra.mxu0 %v240
    %662 = vmatprep.subr.mxu0 %v243
    %663 = vmatpush1.msra.mxu0 %v242
    %664 = vmatprep.subr.mxu0 %v245
    %665 = vmatpush1.msra.mxu0 %v244
    %666 = vmatprep.subr.mxu0 %v247
    %667 = vmatpush1.msra.mxu0 %v246
    %668 = vmatprep.subr.mxu0 %v249
    %669 = vmatpush1.msra.mxu0 %v248
    %670 = vmatprep.subr.mxu0 %v251
    %671 = vmatpush1.msra.mxu0 %v250
    %672 = vmatprep.subr.mxu0 %v253
    %673 = vmatpush1.msra.mxu0 %v252
    %674 = vmatprep.subr.mxu0 %v255
    %675 = vmatpush1.msra.mxu0 %v254
    %676 = vmatprep.subr.mxu0 0.0
    %677 = vmatpush1.msra.mxu0 0.0
    %678 = vmatprep.subr.mxu0 0.0
    %679 = vmatpush1.msra.mxu0 0.0
    %680 = vmatprep.subr.mxu0 0.0
    %681 = vmatpush1.msra.mxu0 0.0
    %682 = vmatprep.subr.mxu0 0.0
    %683 = vmatpush1.msra.mxu0 0.0
    %684 = vmatprep.subr.mxu0 0.0
    %685 = vmatpush1.msra.mxu0 0.0
    %686 = vmatprep.subr.mxu0 0.0
    %687 = vmatpush1.msra.mxu0 0.0
    %688 = vmatprep.subr.mxu0 0.0
    %689 = vmatpush1.msra.mxu0 0.0
    %690 = vmatprep.subr.mxu0 0.0
    %691 = vmatpush1.msra.mxu0 0.0
    %692 = vmatprep.subr.mxu0 0.0
    %693 = vmatpush1.msra.mxu0 0.0
    %694 = vmatprep.subr.mxu0 0.0
    %695 = vmatpush1.msra.mxu0 0.0
    %696 = vmatprep.subr.mxu0 0.0
    %697 = vmatpush1.msra.mxu0 0.0
    %698 = vmatprep.subr.mxu0 0.0
    %699 = vmatpush1.msra.mxu0 0.0
    %700 = vmatprep.subr.mxu0 0.0
    %701 = vmatpush1.msra.mxu0 0.0
    %702 = vmatprep.subr.mxu0 0.0
    %703 = vmatpush1.msra.mxu0 0.0
    %704 = vmatprep.subr.mxu0 0.0
    %705 = vmatpush1.msra.mxu0 0.0
    %706 = vmatprep.subr.mxu0 0.0
    %707 = vmatpush1.msra.mxu0 0.0
    %708 = vmatprep.subr.mxu0 0.0
    %709 = vmatpush1.msra.mxu0 0.0
    %710 = vmatprep.subr.mxu0 0.0
    %711 = vmatpush1.msra.mxu0 0.0
    %712 = vmatprep.subr.mxu0 0.0
    %713 = vmatpush1.msra.mxu0 0.0
    %714 = vmatprep.subr.mxu0 0.0
    %715 = vmatpush1.msra.mxu0 0.0
    %716 = vmatprep.subr.mxu0 0.0
    %717 = vmatpush1.msra.mxu0 0.0
    %718 = vmatprep.subr.mxu0 0.0
    %719 = vmatpush1.msra.mxu0 0.0
    %720 = vmatprep.subr.mxu0 0.0
    %721 = vmatpush1.msra.mxu0 0.0
    %722 = vmatprep.subr.mxu0 0.0
    %723 = vmatpush1.msra.mxu0 0.0
    %724 = vmatprep.mubr.f32.mxu0 0.0
    %725 = vmatmul.mubr.f32.gmra.mrb[0].mxu0 %v658
    %v726 = vpop.f32.mrb[0].mxu0
    %v727 = vadd.f32 0.0, %v726
    %v728 = vpop.f32.mrb[0].mxu0
    %v729 = vadd.f32 0.0, %v728
    %730 = vdwg.mxu0
    %v731 = vadd.f32 %v232, %v727
    %v732 = vadd.f32 %v233, %v729
    %v733 = vxor.u32 %v731, 2147483648
    %v734 = vxor.u32 %v732, 2147483648
    %v735 = vmul.f32 %v733, 1.442695
    %v736 = vpow.pop %v735
    %v737 = vmul.f32 %v734, 1.442695
    %v738 = vpow.pop %v737
    %v739 = vadd.f32 %v736, 1.0
    %v740 = vadd.f32 %v738, 1.0
    %v741 = vrcp.pop %v739
    %v742 = vmul.f32 1.0, %v741
    %v743 = vrcp.pop %v740
    %v744 = vmul.f32 1.0, %v743
    %v745 = vtanh.pop %v732
    %v746 = vmul.f32 %v742, %v652
    %v747 = vmul.f32 %v742, %v745
    %749 = vrot.lane.b32.xlu0 %v747, 64
    %v750 = vpop.permute.xlu0 %749
    %v752 = vadd.f32 %v746, %v750
    %v753 = vtanh.pop %v752
    %v754 = vmul.f32 %v744, %v753
    %756 = vrot.lane.b32.xlu0 %v754, 64
    %v757 = vpop.permute.xlu0 %756
    %v758 = vsel %vm256, %v757, 0
    %760 = vmatprep.subr.mxu0 %v241
    %761 = vmatpush1.msra.mxu0 %v240
    %762 = vmatprep.subr.mxu0 %v243
    %763 = vmatpush1.msra.mxu0 %v242
    %764 = vmatprep.subr.mxu0 %v245
    %765 = vmatpush1.msra.mxu0 %v244
    %766 = vmatprep.subr.mxu0 %v247
    %767 = vmatpush1.msra.mxu0 %v246
    %768 = vmatprep.subr.mxu0 %v249
    %769 = vmatpush1.msra.mxu0 %v248
    %770 = vmatprep.subr.mxu0 %v251
    %771 = vmatpush1.msra.mxu0 %v250
    %772 = vmatprep.subr.mxu0 %v253
    %773 = vmatpush1.msra.mxu0 %v252
    %774 = vmatprep.subr.mxu0 %v255
    %775 = vmatpush1.msra.mxu0 %v254
    %776 = vmatprep.subr.mxu0 0.0
    %777 = vmatpush1.msra.mxu0 0.0
    %778 = vmatprep.subr.mxu0 0.0
    %779 = vmatpush1.msra.mxu0 0.0
    %780 = vmatprep.subr.mxu0 0.0
    %781 = vmatpush1.msra.mxu0 0.0
    %782 = vmatprep.subr.mxu0 0.0
    %783 = vmatpush1.msra.mxu0 0.0
    %784 = vmatprep.subr.mxu0 0.0
    %785 = vmatpush1.msra.mxu0 0.0
    %786 = vmatprep.subr.mxu0 0.0
    %787 = vmatpush1.msra.mxu0 0.0
    %788 = vmatprep.subr.mxu0 0.0
    %789 = vmatpush1.msra.mxu0 0.0
    %790 = vmatprep.subr.mxu0 0.0
    %791 = vmatpush1.msra.mxu0 0.0
    %792 = vmatprep.subr.mxu0 0.0
    %793 = vmatpush1.msra.mxu0 0.0
    %794 = vmatprep.subr.mxu0 0.0
    %795 = vmatpush1.msra.mxu0 0.0
    %796 = vmatprep.subr.mxu0 0.0
    %797 = vmatpush1.msra.mxu0 0.0
    %798 = vmatprep.subr.mxu0 0.0
    %799 = vmatpush1.msra.mxu0 0.0
    %800 = vmatprep.subr.mxu0 0.0
    %801 = vmatpush1.msra.mxu0 0.0
    %802 = vmatprep.subr.mxu0 0.0
    %803 = vmatpush1.msra.mxu0 0.0
    %804 = vmatprep.subr.mxu0 0.0
    %805 = vmatpush1.msra.mxu0 0.0
    %806 = vmatprep.subr.mxu0 0.0
    %807 = vmatpush1.msra.mxu0 0.0
    %808 = vmatprep.subr.mxu0 0.0
    %809 = vmatpush1.msra.mxu0 0.0
    %810 = vmatprep.subr.mxu0 0.0
    %811 = vmatpush1.msra.mxu0 0.0
    %812 = vmatprep.subr.mxu0 0.0
    %813 = vmatpush1.msra.mxu0 0.0
    %814 = vmatprep.subr.mxu0 0.0
    %815 = vmatpush1.msra.mxu0 0.0
    %816 = vmatprep.subr.mxu0 0.0
    %817 = vmatpush1.msra.mxu0 0.0
    %818 = vmatprep.subr.mxu0 0.0
    %819 = vmatpush1.msra.mxu0 0.0
    %820 = vmatprep.subr.mxu0 0.0
    %821 = vmatpush1.msra.mxu0 0.0
    %822 = vmatprep.subr.mxu0 0.0
    %823 = vmatpush1.msra.mxu0 0.0
    %824 = vmatprep.mubr.f32.mxu0 0.0
    %825 = vmatmul.mubr.f32.gmra.mrb[0].mxu0 %v758
    %v826 = vpop.f32.mrb[0].mxu0
    %v827 = vadd.f32 0.0, %v826
    %v828 = vpop.f32.mrb[0].mxu0
    %v829 = vadd.f32 0.0, %v828
    %830 = vdwg.mxu0
    %v831 = vadd.f32 %v234, %v827
    %v832 = vadd.f32 %v235, %v829
    %v833 = vxor.u32 %v831, 2147483648
    %v834 = vxor.u32 %v832, 2147483648
    %v835 = vmul.f32 %v833, 1.442695
    %v836 = vpow.pop %v835
    %v837 = vmul.f32 %v834, 1.442695
    %v838 = vpow.pop %v837
    %v839 = vadd.f32 %v836, 1.0
    %v840 = vadd.f32 %v838, 1.0
    %v841 = vrcp.pop %v839
    %v842 = vmul.f32 1.0, %v841
    %v843 = vrcp.pop %v840
    %v844 = vmul.f32 1.0, %v843
    %v845 = vtanh.pop %v832
    %v846 = vmul.f32 %v842, %v752
    %v847 = vmul.f32 %v842, %v845
    %849 = vrot.lane.b32.xlu0 %v847, 64
    %v850 = vpop.permute.xlu0 %849
    %v852 = vadd.f32 %v846, %v850
    %v853 = vtanh.pop %v852
    %v854 = vmul.f32 %v844, %v853
    %856 = vrot.lane.b32.xlu0 %v854, 64
    %v857 = vpop.permute.xlu0 %856
    %v858 = vsel %vm256, %v857, 0
    %860 = vmatprep.subr.mxu0 %v241
    %861 = vmatpush1.msra.mxu0 %v240
    %862 = vmatprep.subr.mxu0 %v243
    %863 = vmatpush1.msra.mxu0 %v242
    %864 = vmatprep.subr.mxu0 %v245
    %865 = vmatpush1.msra.mxu0 %v244
    %866 = vmatprep.subr.mxu0 %v247
    %867 = vmatpush1.msra.mxu0 %v246
    %868 = vmatprep.subr.mxu0 %v249
    %869 = vmatpush1.msra.mxu0 %v248
    %870 = vmatprep.subr.mxu0 %v251
    %871 = vmatpush1.msra.mxu0 %v250
    %872 = vmatprep.subr.mxu0 %v253
    %873 = vmatpush1.msra.mxu0 %v252
    %874 = vmatprep.subr.mxu0 %v255
    %875 = vmatpush1.msra.mxu0 %v254
    %876 = vmatprep.subr.mxu0 0.0
    %877 = vmatpush1.msra.mxu0 0.0
    %878 = vmatprep.subr.mxu0 0.0
    %879 = vmatpush1.msra.mxu0 0.0
    %880 = vmatprep.subr.mxu0 0.0
    %881 = vmatpush1.msra.mxu0 0.0
    %882 = vmatprep.subr.mxu0 0.0
    %883 = vmatpush1.msra.mxu0 0.0
    %884 = vmatprep.subr.mxu0 0.0
    %885 = vmatpush1.msra.mxu0 0.0
    %886 = vmatprep.subr.mxu0 0.0
    %887 = vmatpush1.msra.mxu0 0.0
    %888 = vmatprep.subr.mxu0 0.0
    %889 = vmatpush1.msra.mxu0 0.0
    %890 = vmatprep.subr.mxu0 0.0
    %891 = vmatpush1.msra.mxu0 0.0
    %892 = vmatprep.subr.mxu0 0.0
    %893 = vmatpush1.msra.mxu0 0.0
    %894 = vmatprep.subr.mxu0 0.0
    %895 = vmatpush1.msra.mxu0 0.0
    %896 = vmatprep.subr.mxu0 0.0
    %897 = vmatpush1.msra.mxu0 0.0
    %898 = vmatprep.subr.mxu0 0.0
    %899 = vmatpush1.msra.mxu0 0.0
    %900 = vmatprep.subr.mxu0 0.0
    %901 = vmatpush1.msra.mxu0 0.0
    %902 = vmatprep.subr.mxu0 0.0
    %903 = vmatpush1.msra.mxu0 0.0
    %904 = vmatprep.subr.mxu0 0.0
    %905 = vmatpush1.msra.mxu0 0.0
    %906 = vmatprep.subr.mxu0 0.0
    %907 = vmatpush1.msra.mxu0 0.0
    %908 = vmatprep.subr.mxu0 0.0
    %909 = vmatpush1.msra.mxu0 0.0
    %910 = vmatprep.subr.mxu0 0.0
    %911 = vmatpush1.msra.mxu0 0.0
    %912 = vmatprep.subr.mxu0 0.0
    %913 = vmatpush1.msra.mxu0 0.0
    %914 = vmatprep.subr.mxu0 0.0
    %915 = vmatpush1.msra.mxu0 0.0
    %916 = vmatprep.subr.mxu0 0.0
    %917 = vmatpush1.msra.mxu0 0.0
    %918 = vmatprep.subr.mxu0 0.0
    %919 = vmatpush1.msra.mxu0 0.0
    %920 = vmatprep.subr.mxu0 0.0
    %921 = vmatpush1.msra.mxu0 0.0
    %922 = vmatprep.subr.mxu0 0.0
    %923 = vmatpush1.msra.mxu0 0.0
    %924 = vmatprep.mubr.f32.mxu0 0.0
    %925 = vmatmul.mubr.f32.gmra.mrb[0].mxu0 %v858
    %v926 = vpop.f32.mrb[0].mxu0
    %v927 = vadd.f32 0.0, %v926
    %v928 = vpop.f32.mrb[0].mxu0
    %v929 = vadd.f32 0.0, %v928
    %930 = vdwg.mxu0
    %v931 = vadd.f32 %v236, %v927
    %v932 = vadd.f32 %v237, %v929
    %v933 = vxor.u32 %v931, 2147483648
    %v934 = vxor.u32 %v932, 2147483648
    %v935 = vmul.f32 %v933, 1.442695
    %v936 = vpow.pop %v935
    %v937 = vmul.f32 %v934, 1.442695
    %v938 = vpow.pop %v937
    %v939 = vadd.f32 %v936, 1.0
    %v940 = vadd.f32 %v938, 1.0
    %v941 = vrcp.pop %v939
    %v942 = vmul.f32 1.0, %v941
    %v943 = vrcp.pop %v940
    %v944 = vmul.f32 1.0, %v943
    %v945 = vtanh.pop %v932
    %v946 = vmul.f32 %v942, %v852
    %v947 = vmul.f32 %v942, %v945
    %949 = vrot.lane.b32.xlu0 %v947, 64
    %v950 = vpop.permute.xlu0 %949
    %v952 = vadd.f32 %v946, %v950
    %v953 = vtanh.pop %v952
    %v954 = vmul.f32 %v944, %v953
    %956 = vrot.lane.b32.xlu0 %v954, 64
    %v957 = vpop.permute.xlu0 %956
    %v958 = vsel %vm256, %v957, 0
    %960 = vmatprep.subr.mxu0 %v241
    %961 = vmatpush1.msra.mxu0 %v240
    %962 = vmatprep.subr.mxu0 %v243
    %963 = vmatpush1.msra.mxu0 %v242
    %964 = vmatprep.subr.mxu0 %v245
    %965 = vmatpush1.msra.mxu0 %v244
    %966 = vmatprep.subr.mxu0 %v247
    %967 = vmatpush1.msra.mxu0 %v246
    %968 = vmatprep.subr.mxu0 %v249
    %969 = vmatpush1.msra.mxu0 %v248
    %970 = vmatprep.subr.mxu0 %v251
    %971 = vmatpush1.msra.mxu0 %v250
    %972 = vmatprep.subr.mxu0 %v253
    %973 = vmatpush1.msra.mxu0 %v252
    %974 = vmatprep.subr.mxu0 %v255
    %975 = vmatpush1.msra.mxu0 %v254
    %976 = vmatprep.subr.mxu0 0.0
    %977 = vmatpush1.msra.mxu0 0.0
    %978 = vmatprep.subr.mxu0 0.0
    %979 = vmatpush1.msra.mxu0 0.0
    %980 = vmatprep.subr.mxu0 0.0
    %981 = vmatpush1.msra.mxu0 0.0
    %982 = vmatprep.subr.mxu0 0.0
    %983 = vmatpush1.msra.mxu0 0.0
    %984 = vmatprep.subr.mxu0 0.0
    %985 = vmatpush1.msra.mxu0 0.0
    %986 = vmatprep.subr.mxu0 0.0
    %987 = vmatpush1.msra.mxu0 0.0
    %988 = vmatprep.subr.mxu0 0.0
    %989 = vmatpush1.msra.mxu0 0.0
    %990 = vmatprep.subr.mxu0 0.0
    %991 = vmatpush1.msra.mxu0 0.0
    %992 = vmatprep.subr.mxu0 0.0
    %993 = vmatpush1.msra.mxu0 0.0
    %994 = vmatprep.subr.mxu0 0.0
    %995 = vmatpush1.msra.mxu0 0.0
    %996 = vmatprep.subr.mxu0 0.0
    %997 = vmatpush1.msra.mxu0 0.0
    %998 = vmatprep.subr.mxu0 0.0
    %999 = vmatpush1.msra.mxu0 0.0
    %1000 = vmatprep.subr.mxu0 0.0
    %1001 = vmatpush1.msra.mxu0 0.0
    %1002 = vmatprep.subr.mxu0 0.0
    %1003 = vmatpush1.msra.mxu0 0.0
    %1004 = vmatprep.subr.mxu0 0.0
    %1005 = vmatpush1.msra.mxu0 0.0
    %1006 = vmatprep.subr.mxu0 0.0
    %1007 = vmatpush1.msra.mxu0 0.0
    %1008 = vmatprep.subr.mxu0 0.0
    %1009 = vmatpush1.msra.mxu0 0.0
    %1010 = vmatprep.subr.mxu0 0.0
    %1011 = vmatpush1.msra.mxu0 0.0
    %1012 = vmatprep.subr.mxu0 0.0
    %1013 = vmatpush1.msra.mxu0 0.0
    %1014 = vmatprep.subr.mxu0 0.0
    %1015 = vmatpush1.msra.mxu0 0.0
    %1016 = vmatprep.subr.mxu0 0.0
    %1017 = vmatpush1.msra.mxu0 0.0
    %1018 = vmatprep.subr.mxu0 0.0
    %1019 = vmatpush1.msra.mxu0 0.0
    %1020 = vmatprep.subr.mxu0 0.0
    %1021 = vmatpush1.msra.mxu0 0.0
    %1022 = vmatprep.subr.mxu0 0.0
    %1023 = vmatpush1.msra.mxu0 0.0
    %1024 = vmatprep.mubr.f32.mxu0 0.0
    %1025 = vmatmul.mubr.f32.gmra.mrb[0].mxu0 %v958
    %v1026 = vpop.f32.mrb[0].mxu0
    %v1027 = vadd.f32 0.0, %v1026
    %v1028 = vpop.f32.mrb[0].mxu0
    %v1029 = vadd.f32 0.0, %v1028
    %1030 = vdwg.mxu0
    %v1031 = vadd.f32 %v238, %v1027
    %v1032 = vadd.f32 %v239, %v1029
    %v1033 = vxor.u32 %v1031, 2147483648
    %v1034 = vxor.u32 %v1032, 2147483648
    %v1035 = vmul.f32 %v1033, 1.442695
    %v1036 = vpow.pop %v1035
    %v1037 = vmul.f32 %v1034, 1.442695
    %v1038 = vpow.pop %v1037
    %v1039 = vadd.f32 %v1036, 1.0
    %v1040 = vadd.f32 %v1038, 1.0
    %v1041 = vrcp.pop %v1039
    %v1042 = vmul.f32 1.0, %v1041
    %v1043 = vrcp.pop %v1040
    %v1044 = vmul.f32 1.0, %v1043
    %v1045 = vtanh.pop %v1032
    %v1046 = vmul.f32 %v1042, %v952
    %v1047 = vmul.f32 %v1042, %v1045
    %1049 = vrot.lane.b32.xlu0 %v1047, 64
    %v1050 = vpop.permute.xlu0 %1049
    %v1052 = vadd.f32 %v1046, %v1050
    %v1053 = vtanh.pop %v1052
    %v1054 = vmul.f32 %v1044, %v1053
    %v1055 = vld [vmem:[%s4] sm:$0xff]
    %v1056 = vld [vmem:[%s4 + $0x8] sm:$0xff]
    %v1057 = vld [vmem:[%s4 + $0x10] sm:$0xff]
    %v1058 = vld [vmem:[%s4 + $0x18] sm:$0xff]
    %v1059 = vld [vmem:[%s4 + $0x20] sm:$0xff]
    %v1060 = vld [vmem:[%s4 + $0x28] sm:$0xff]
    %v1061 = vld [vmem:[%s4 + $0x30] sm:$0xff]
    %v1062 = vld [vmem:[%s4 + $0x38] sm:$0xff]
    %v1063 = vld [vmem:[%s4 + $0x40] sm:$0xff]
    %v1064 = vld [vmem:[%s4 + $0x48] sm:$0xff]
    %v1065 = vld [vmem:[%s4 + $0x50] sm:$0xff]
    %v1066 = vld [vmem:[%s4 + $0x58] sm:$0xff]
    %v1067 = vld [vmem:[%s4 + $0x60] sm:$0xff]
    %v1068 = vld [vmem:[%s4 + $0x68] sm:$0xff]
    %v1069 = vld [vmem:[%s4 + $0x70] sm:$0xff]
    %v1070 = vld [vmem:[%s4 + $0x78] sm:$0xff]
    %v1071 = vld [vmem:[#allocation7] sm:$0x3]
    %v1073 = vlaneseq
    %v1074 = vshrl.u32 %v1073, 7
    %v1075 = vsub.s32 0, %v1074
    %v1076 = vrot.slane %v1071, %v1075
    %v1077 = vlaneseq
    %v1078 = vshrl.u32 %v1077, 7
    %v1079 = vsub.s32 1, %v1078
    %v1080 = vrot.slane %v1071, %v1079
    %1084 = vrot.lane.b32.xlu0 %v1054, 64
    %v1085 = vpop.permute.xlu0 %1084
    %v1086 = vsel %vm256, %v1085, 0
    %1088 = vmatprep.subr.mxu0 %v1056
    %1089 = vmatpush1.msra.mxu0 %v1055
    %1090 = vmatprep.subr.mxu0 %v1058
    %1091 = vmatpush1.msra.mxu0 %v1057
    %1092 = vmatprep.subr.mxu0 %v1060
    %1093 = vmatpush1.msra.mxu0 %v1059
    %1094 = vmatprep.subr.mxu0 %v1062
    %1095 = vmatpush1.msra.mxu0 %v1061
    %1096 = vmatprep.subr.mxu0 %v1064
    %1097 = vmatpush1.msra.mxu0 %v1063
    %1098 = vmatprep.subr.mxu0 %v1066
    %1099 = vmatpush1.msra.mxu0 %v1065
    %1100 = vmatprep.subr.mxu0 %v1068
    %1101 = vmatpush1.msra.mxu0 %v1067
    %1102 = vmatprep.subr.mxu0 %v1070
    %1103 = vmatpush1.msra.mxu0 %v1069
    %1104 = vmatprep.subr.mxu0 0.0
    %1105 = vmatpush1.msra.mxu0 0.0
    %1106 = vmatprep.subr.mxu0 0.0
    %1107 = vmatpush1.msra.mxu0 0.0
    %1108 = vmatprep.subr.mxu0 0.0
    %1109 = vmatpush1.msra.mxu0 0.0
    %1110 = vmatprep.subr.mxu0 0.0
    %1111 = vmatpush1.msra.mxu0 0.0
    %1112 = vmatprep.subr.mxu0 0.0
    %1113 = vmatpush1.msra.mxu0 0.0
    %1114 = vmatprep.subr.mxu0 0.0
    %1115 = vmatpush1.msra.mxu0 0.0
    %1116 = vmatprep.subr.mxu0 0.0
    %1117 = vmatpush1.msra.mxu0 0.0
    %1118 = vmatprep.subr.mxu0 0.0
    %1119 = vmatpush1.msra.mxu0 0.0
    %1120 = vmatprep.subr.mxu0 0.0
    %1121 = vmatpush1.msra.mxu0 0.0
    %1122 = vmatprep.subr.mxu0 0.0
    %1123 = vmatpush1.msra.mxu0 0.0
    %1124 = vmatprep.subr.mxu0 0.0
    %1125 = vmatpush1.msra.mxu0 0.0
    %1126 = vmatprep.subr.mxu0 0.0
    %1127 = vmatpush1.msra.mxu0 0.0
    %1128 = vmatprep.subr.mxu0 0.0
    %1129 = vmatpush1.msra.mxu0 0.0
    %1130 = vmatprep.subr.mxu0 0.0
    %1131 = vmatpush1.msra.mxu0 0.0
    %1132 = vmatprep.subr.mxu0 0.0
    %1133 = vmatpush1.msra.mxu0 0.0
    %1134 = vmatprep.subr.mxu0 0.0
    %1135 = vmatpush1.msra.mxu0 0.0
    %1136 = vmatprep.subr.mxu0 0.0
    %1137 = vmatpush1.msra.mxu0 0.0
    %1138 = vmatprep.subr.mxu0 0.0
    %1139 = vmatpush1.msra.mxu0 0.0
    %1140 = vmatprep.subr.mxu0 0.0
    %1141 = vmatpush1.msra.mxu0 0.0
    %1142 = vmatprep.subr.mxu0 0.0
    %1143 = vmatpush1.msra.mxu0 0.0
    %1144 = vmatprep.subr.mxu0 0.0
    %1145 = vmatpush1.msra.mxu0 0.0
    %1146 = vmatprep.subr.mxu0 0.0
    %1147 = vmatpush1.msra.mxu0 0.0
    %1148 = vmatprep.subr.mxu0 0.0
    %1149 = vmatpush1.msra.mxu0 0.0
    %1150 = vmatprep.subr.mxu0 0.0
    %1151 = vmatpush1.msra.mxu0 0.0
    %1152 = vmatprep.mubr.f32.mxu0 0.0
    %1153 = vmatmul.mubr.f32.gmra.mrb[0].mxu0 %v358
    %v1154 = vpop.f32.mrb[0].mxu0
    %v1155 = vadd.f32 %v1076, %v1154
    %v1156 = vpop.f32.mrb[0].mxu0
    %v1157 = vadd.f32 %v1080, %v1156
    %1158 = vmatprep.mubr.f32.mxu0 0.0
    %1159 = vmatmul.mubr.f32.gmra.mrb[0].mxu0 %v458
    %v1160 = vpop.f32.mrb[0].mxu0
    %v1161 = vadd.f32 %v1076, %v1160
    %v1162 = vpop.f32.mrb[0].mxu0
    %v1163 = vadd.f32 %v1080, %v1162
    %1164 = vmatprep.mubr.f32.mxu0 0.0
    %1165 = vmatmul.mubr.f32.gmra.mrb[0].mxu0 %v558
    %v1166 = vpop.f32.mrb[0].mxu0
    %v1167 = vadd.f32 %v1076, %v1166
    %v1168 = vpop.f32.mrb[0].mxu0
    %v1169 = vadd.f32 %v1080, %v1168
    %1170 = vmatprep.mubr.f32.mxu0 0.0
    %1171 = vmatmul.mubr.f32.gmra.mrb[0].mxu0 %v658
    %v1172 = vpop.f32.mrb[0].mxu0
    %v1173 = vadd.f32 %v1076, %v1172
    %v1174 = vpop.f32.mrb[0].mxu0
    %v1175 = vadd.f32 %v1080, %v1174
    %1176 = vmatprep.mubr.f32.mxu0 0.0
    %1177 = vmatmul.mubr.f32.gmra.mrb[0].mxu0 %v758
    %v1178 = vpop.f32.mrb[0].mxu0
    %v1179 = vadd.f32 %v1076, %v1178
    %v1180 = vpop.f32.mrb[0].mxu0
    %v1181 = vadd.f32 %v1080, %v1180
    %1182 = vmatprep.mubr.f32.mxu0 0.0
    %1183 = vmatmul.mubr.f32.gmra.mrb[0].mxu0 %v858
    %v1184 = vpop.f32.mrb[0].mxu0
    %v1185 = vadd.f32 %v1076, %v1184
    %v1186 = vpop.f32.mrb[0].mxu0
    %v1187 = vadd.f32 %v1080, %v1186
    %1188 = vmatprep.mubr.f32.mxu0 0.0
    %1189 = vmatmul.mubr.f32.gmra.mrb[0].mxu0 %v958
    %v1190 = vpop.f32.mrb[0].mxu0
    %v1191 = vadd.f32 %v1076, %v1190
    %v1192 = vpop.f32.mrb[0].mxu0
    %v1193 = vadd.f32 %v1080, %v1192
    %1194 = vmatprep.mubr.f32.mxu0 0.0
    %1195 = vmatmul.mubr.f32.gmra.mrb[0].mxu0 %v1086
    %v1196 = vpop.f32.mrb[0].mxu0
    %v1197 = vadd.f32 %v1076, %v1196
    %v1198 = vpop.f32.mrb[0].mxu0
    %v1199 = vadd.f32 %v1080, %v1198
    %1200 = vdwg.mxu0
    %v1201 = vld [vmem:[#allocation5] sm:$0xff]
    %v1202 = vld [vmem:[#allocation5 + $0x8] sm:$0xff]
    %v1203 = vld [vmem:[#allocation5 + $0x10] sm:$0xff]
    %v1204 = vld [vmem:[#allocation5 + $0x18] sm:$0xff]
    %v1205 = vld [vmem:[#allocation5 + $0x20] sm:$0xff]
    %v1206 = vld [vmem:[#allocation5 + $0x28] sm:$0xff]
    %v1207 = vld [vmem:[#allocation5 + $0x30] sm:$0xff]
    %v1208 = vld [vmem:[#allocation5 + $0x38] sm:$0xff]
    %v1209 = vld [vmem:[#allocation5 + $0x40] sm:$0xff]
    %v1210 = vld [vmem:[#allocation5 + $0x48] sm:$0xff]
    %v1211 = vld [vmem:[#allocation5 + $0x50] sm:$0xff]
    %v1212 = vld [vmem:[#allocation5 + $0x58] sm:$0xff]
    %v1213 = vld [vmem:[#allocation5 + $0x60] sm:$0xff]
    %v1214 = vld [vmem:[#allocation5 + $0x68] sm:$0xff]
    %v1215 = vld [vmem:[#allocation5 + $0x70] sm:$0xff]
    %v1216 = vld [vmem:[#allocation5 + $0x78] sm:$0xff]
    %1217 = vmatprep.subr.mxu0 %v1202
    %1218 = vmatpush1.msra.mxu0 %v1201
    %1219 = vmatprep.subr.mxu0 %v1204
    %1220 = vmatpush1.msra.mxu0 %v1203
    %1221 = vmatprep.subr.mxu0 %v1206
    %1222 = vmatpush1.msra.mxu0 %v1205
    %1223 = vmatprep.subr.mxu0 %v1208
    %1224 = vmatpush1.msra.mxu0 %v1207
    %1225 = vmatprep.subr.mxu0 %v1210
    %1226 = vmatpush1.msra.mxu0 %v1209
    %1227 = vmatprep.subr.mxu0 %v1212
    %1228 = vmatpush1.msra.mxu0 %v1211
    %1229 = vmatprep.subr.mxu0 %v1214
    %1230 = vmatpush1.msra.mxu0 %v1213
    %1231 = vmatprep.subr.mxu0 %v1216
    %1232 = vmatpush1.msra.mxu0 %v1215
    %1233 = vmatprep.subr.mxu0 0.0
    %1234 = vmatpush1.msra.mxu0 0.0
    %1235 = vmatprep.subr.mxu0 0.0
    %1236 = vmatpush1.msra.mxu0 0.0
    %1237 = vmatprep.subr.mxu0 0.0
    %1238 = vmatpush1.msra.mxu0 0.0
    %1239 = vmatprep.subr.mxu0 0.0
    %1240 = vmatpush1.msra.mxu0 0.0
    %1241 = vmatprep.subr.mxu0 0.0
    %1242 = vmatpush1.msra.mxu0 0.0
    %1243 = vmatprep.subr.mxu0 0.0
    %1244 = vmatpush1.msra.mxu0 0.0
    %1245 = vmatprep.subr.mxu0 0.0
    %1246 = vmatpush1.msra.mxu0 0.0
    %1247 = vmatprep.subr.mxu0 0.0
    %1248 = vmatpush1.msra.mxu0 0.0
    %1249 = vmatprep.subr.mxu0 0.0
    %1250 = vmatpush1.msra.mxu0 0.0
    %1251 = vmatprep.subr.mxu0 0.0
    %1252 = vmatpush1.msra.mxu0 0.0
    %1253 = vmatprep.subr.mxu0 0.0
    %1254 = vmatpush1.msra.mxu0 0.0
    %1255 = vmatprep.subr.mxu0 0.0
    %1256 = vmatpush1.msra.mxu0 0.0
    %1257 = vmatprep.subr.mxu0 0.0
    %1258 = vmatpush1.msra.mxu0 0.0
    %1259 = vmatprep.subr.mxu0 0.0
    %1260 = vmatpush1.msra.mxu0 0.0
    %1261 = vmatprep.subr.mxu0 0.0
    %1262 = vmatpush1.msra.mxu0 0.0
    %1263 = vmatprep.subr.mxu0 0.0
    %1264 = vmatpush1.msra.mxu0 0.0
    %1265 = vmatprep.subr.mxu0 0.0
    %1266 = vmatpush1.msra.mxu0 0.0
    %1267 = vmatprep.subr.mxu0 0.0
    %1268 = vmatpush1.msra.mxu0 0.0
    %1269 = vmatprep.subr.mxu0 0.0
    %1270 = vmatpush1.msra.mxu0 0.0
    %1271 = vmatprep.subr.mxu0 0.0
    %1272 = vmatpush1.msra.mxu0 0.0
    %1273 = vmatprep.subr.mxu0 0.0
    %1274 = vmatpush1.msra.mxu0 0.0
    %1275 = vmatprep.subr.mxu0 0.0
    %1276 = vmatpush1.msra.mxu0 0.0
    %1277 = vmatprep.subr.mxu0 0.0
    %1278 = vmatpush1.msra.mxu0 0.0
    %1279 = vmatprep.subr.mxu0 0.0
    %1280 = vmatpush1.msra.mxu0 0.0
    %1281 = vmatprep.mubr.f32.mxu0 0.0
    %1282 = vmatmul.mubr.f32.gmra.mrb[0].mxu0 %v258
    %v1283 = vpop.f32.mrb[0].mxu0
    %v1284 = vadd.f32 0.0, %v1283
    %v1285 = vpop.f32.mrb[0].mxu0
    %v1286 = vadd.f32 0.0, %v1285
    %1287 = vdwg.mxu0
    %v1288 = vadd.f32 %v1155, %v1284
    %v1289 = vadd.f32 %v1157, %v1286
    %v1290 = vxor.u32 %v1288, 2147483648
    %v1291 = vxor.u32 %v1289, 2147483648
    %v1292 = vmul.f32 %v1290, 1.442695
    %v1293 = vpow.pop %v1292
    %v1294 = vmul.f32 %v1291, 1.442695
    %v1295 = vpow.pop %v1294
    %v1296 = vadd.f32 %v1293, 1.0
    %v1297 = vadd.f32 %v1295, 1.0
    %v1298 = vrcp.pop %v1296
    %v1299 = vmul.f32 1.0, %v1298
    %v1300 = vrcp.pop %v1297
    %v1301 = vmul.f32 1.0, %v1300
    %v1302 = vtanh.pop %v1289
    %v1303 = vmul.f32 %v1299, 0.0
    %v1304 = vmul.f32 %v1299, %v1302
    %1306 = vrot.lane.b32.xlu0 %v1304, 64
    %v1307 = vpop.permute.xlu0 %1306
    %v1309 = vadd.f32 %v1303, %v1307
    %v1310 = vtanh.pop %v1309
    %v1311 = vmul.f32 %v1301, %v1310
    %1313 = vrot.lane.b32.xlu0 %v1311, 64
    %v1314 = vpop.permute.xlu0 %1313
    %v1315 = vsel %vm256, %v1314, 0
    %1317 = vmatprep.subr.mxu0 %v1202
    %1318 = vmatpush1.msra.mxu0 %v1201
    %1319 = vmatprep.subr.mxu0 %v1204
    %1320 = vmatpush1.msra.mxu0 %v1203
    %1321 = vmatprep.subr.mxu0 %v1206
    %1322 = vmatpush1.msra.mxu0 %v1205
    %1323 = vmatprep.subr.mxu0 %v1208
    %1324 = vmatpush1.msra.mxu0 %v1207
    %1325 = vmatprep.subr.mxu0 %v1210
    %1326 = vmatpush1.msra.mxu0 %v1209
    %1327 = vmatprep.subr.mxu0 %v1212
    %1328 = vmatpush1.msra.mxu0 %v1211
    %1329 = vmatprep.subr.mxu0 %v1214
    %1330 = vmatpush1.msra.mxu0 %v1213
    %1331 = vmatprep.subr.mxu0 %v1216
    %1332 = vmatpush1.msra.mxu0 %v1215
    %1333 = vmatprep.subr.mxu0 0.0
    %1334 = vmatpush1.msra.mxu0 0.0
    %1335 = vmatprep.subr.mxu0 0.0
    %1336 = vmatpush1.msra.mxu0 0.0
    %1337 = vmatprep.subr.mxu0 0.0
    %1338 = vmatpush1.msra.mxu0 0.0
    %1339 = vmatprep.subr.mxu0 0.0
    %1340 = vmatpush1.msra.mxu0 0.0
    %1341 = vmatprep.subr.mxu0 0.0
    %1342 = vmatpush1.msra.mxu0 0.0
    %1343 = vmatprep.subr.mxu0 0.0
    %1344 = vmatpush1.msra.mxu0 0.0
    %1345 = vmatprep.subr.mxu0 0.0
    %1346 = vmatpush1.msra.mxu0 0.0
    %1347 = vmatprep.subr.mxu0 0.0
    %1348 = vmatpush1.msra.mxu0 0.0
    %1349 = vmatprep.subr.mxu0 0.0
    %1350 = vmatpush1.msra.mxu0 0.0
    %1351 = vmatprep.subr.mxu0 0.0
    %1352 = vmatpush1.msra.mxu0 0.0
    %1353 = vmatprep.subr.mxu0 0.0
    %1354 = vmatpush1.msra.mxu0 0.0
    %1355 = vmatprep.subr.mxu0 0.0
    %1356 = vmatpush1.msra.mxu0 0.0
    %1357 = vmatprep.subr.mxu0 0.0
    %1358 = vmatpush1.msra.mxu0 0.0
    %1359 = vmatprep.subr.mxu0 0.0
    %1360 = vmatpush1.msra.mxu0 0.0
    %1361 = vmatprep.subr.mxu0 0.0
    %1362 = vmatpush1.msra.mxu0 0.0
    %1363 = vmatprep.subr.mxu0 0.0
    %1364 = vmatpush1.msra.mxu0 0.0
    %1365 = vmatprep.subr.mxu0 0.0
    %1366 = vmatpush1.msra.mxu0 0.0
    %1367 = vmatprep.subr.mxu0 0.0
    %1368 = vmatpush1.msra.mxu0 0.0
    %1369 = vmatprep.subr.mxu0 0.0
    %1370 = vmatpush1.msra.mxu0 0.0
    %1371 = vmatprep.subr.mxu0 0.0
    %1372 = vmatpush1.msra.mxu0 0.0
    %1373 = vmatprep.subr.mxu0 0.0
    %1374 = vmatpush1.msra.mxu0 0.0
    %1375 = vmatprep.subr.mxu0 0.0
    %1376 = vmatpush1.msra.mxu0 0.0
    %1377 = vmatprep.subr.mxu0 0.0
    %1378 = vmatpush1.msra.mxu0 0.0
    %1379 = vmatprep.subr.mxu0 0.0
    %1380 = vmatpush1.msra.mxu0 0.0
    %1381 = vmatprep.mubr.f32.mxu0 0.0
    %1382 = vmatmul.mubr.f32.gmra.mrb[0].mxu0 %v1315
    %v1383 = vpop.f32.mrb[0].mxu0
    %v1384 = vadd.f32 0.0, %v1383
    %v1385 = vpop.f32.mrb[0].mxu0
    %v1386 = vadd.f32 0.0, %v1385
    %1387 = vdwg.mxu0
    %v1388 = vadd.f32 %v1161, %v1384
    %v1389 = vadd.f32 %v1163, %v1386
    %v1390 = vxor.u32 %v1388, 2147483648
    %v1391 = vxor.u32 %v1389, 2147483648
    %v1392 = vmul.f32 %v1390, 1.442695
    %v1393 = vpow.pop %v1392
    %v1394 = vmul.f32 %v1391, 1.442695
    %v1395 = vpow.pop %v1394
    %v1396 = vadd.f32 %v1393, 1.0
    %v1397 = vadd.f32 %v1395, 1.0
    %v1398 = vrcp.pop %v1396
    %v1399 = vmul.f32 1.0, %v1398
    %v1400 = vrcp.pop %v1397
    %v1401 = vmul.f32 1.0, %v1400
    %v1402 = vtanh.pop %v1389
    %v1403 = vmul.f32 %v1399, %v1309
    %v1404 = vmul.f32 %v1399, %v1402
    %1406 = vrot.lane.b32.xlu0 %v1404, 64
    %v1407 = vpop.permute.xlu0 %1406
    %v1409 = vadd.f32 %v1403, %v1407
    %v1410 = vtanh.pop %v1409
    %v1411 = vmul.f32 %v1401, %v1410
    %1413 = vrot.lane.b32.xlu0 %v1411, 64
    %v1414 = vpop.permute.xlu0 %1413
    %v1415 = vsel %vm256, %v1414, 0
    %1417 = vmatprep.subr.mxu0 %v1202
    %1418 = vmatpush1.msra.mxu0 %v1201
    %1419 = vmatprep.subr.mxu0 %v1204
    %1420 = vmatpush1.msra.mxu0 %v1203
    %1421 = vmatprep.subr.mxu0 %v1206
    %1422 = vmatpush1.msra.mxu0 %v1205
    %1423 = vmatprep.subr.mxu0 %v1208
    %1424 = vmatpush1.msra.mxu0 %v1207
    %1425 = vmatprep.subr.mxu0 %v1210
    %1426 = vmatpush1.msra.mxu0 %v1209
    %1427 = vmatprep.subr.mxu0 %v1212
    %1428 = vmatpush1.msra.mxu0 %v1211
    %1429 = vmatprep.subr.mxu0 %v1214
    %1430 = vmatpush1.msra.mxu0 %v1213
    %1431 = vmatprep.subr.mxu0 %v1216
    %1432 = vmatpush1.msra.mxu0 %v1215
    %1433 = vmatprep.subr.mxu0 0.0
    %1434 = vmatpush1.msra.mxu0 0.0
    %1435 = vmatprep.subr.mxu0 0.0
    %1436 = vmatpush1.msra.mxu0 0.0
    %1437 = vmatprep.subr.mxu0 0.0
    %1438 = vmatpush1.msra.mxu0 0.0
    %1439 = vmatprep.subr.mxu0 0.0
    %1440 = vmatpush1.msra.mxu0 0.0
    %1441 = vmatprep.subr.mxu0 0.0
    %1442 = vmatpush1.msra.mxu0 0.0
    %1443 = vmatprep.subr.mxu0 0.0
    %1444 = vmatpush1.msra.mxu0 0.0
    %1445 = vmatprep.subr.mxu0 0.0
    %1446 = vmatpush1.msra.mxu0 0.0
    %1447 = vmatprep.subr.mxu0 0.0
    %1448 = vmatpush1.msra.mxu0 0.0
    %1449 = vmatprep.subr.mxu0 0.0
    %1450 = vmatpush1.msra.mxu0 0.0
    %1451 = vmatprep.subr.mxu0 0.0
    %1452 = vmatpush1.msra.mxu0 0.0
    %1453 = vmatprep.subr.mxu0 0.0
    %1454 = vmatpush1.msra.mxu0 0.0
    %1455 = vmatprep.subr.mxu0 0.0
    %1456 = vmatpush1.msra.mxu0 0.0
    %1457 = vmatprep.subr.mxu0 0.0
    %1458 = vmatpush1.msra.mxu0 0.0
    %1459 = vmatprep.subr.mxu0 0.0
    %1460 = vmatpush1.msra.mxu0 0.0
    %1461 = vmatprep.subr.mxu0 0.0
    %1462 = vmatpush1.msra.mxu0 0.0
    %1463 = vmatprep.subr.mxu0 0.0
    %1464 = vmatpush1.msra.mxu0 0.0
    %1465 = vmatprep.subr.mxu0 0.0
    %1466 = vmatpush1.msra.mxu0 0.0
    %1467 = vmatprep.subr.mxu0 0.0
    %1468 = vmatpush1.msra.mxu0 0.0
    %1469 = vmatprep.subr.mxu0 0.0
    %1470 = vmatpush1.msra.mxu0 0.0
    %1471 = vmatprep.subr.mxu0 0.0
    %1472 = vmatpush1.msra.mxu0 0.0
    %1473 = vmatprep.subr.mxu0 0.0
    %1474 = vmatpush1.msra.mxu0 0.0
    %1475 = vmatprep.subr.mxu0 0.0
    %1476 = vmatpush1.msra.mxu0 0.0
    %1477 = vmatprep.subr.mxu0 0.0
    %1478 = vmatpush1.msra.mxu0 0.0
    %1479 = vmatprep.subr.mxu0 0.0
    %1480 = vmatpush1.msra.mxu0 0.0
    %1481 = vmatprep.mubr.f32.mxu0 0.0
    %1482 = vmatmul.mubr.f32.gmra.mrb[0].mxu0 %v1415
    %v1483 = vpop.f32.mrb[0].mxu0
    %v1484 = vadd.f32 0.0, %v1483
    %v1485 = vpop.f32.mrb[0].mxu0
    %v1486 = vadd.f32 0.0, %v1485
    %1487 = vdwg.mxu0
    %v1488 = vadd.f32 %v1167, %v1484
    %v1489 = vadd.f32 %v1169, %v1486
    %v1490 = vxor.u32 %v1488, 2147483648
    %v1491 = vxor.u32 %v1489, 2147483648
    %v1492 = vmul.f32 %v1490, 1.442695
    %v1493 = vpow.pop %v1492
    %v1494 = vmul.f32 %v1491, 1.442695
    %v1495 = vpow.pop %v1494
    %v1496 = vadd.f32 %v1493, 1.0
    %v1497 = vadd.f32 %v1495, 1.0
    %v1498 = vrcp.pop %v1496
    %v1499 = vmul.f32 1.0, %v1498
    %v1500 = vrcp.pop %v1497
    %v1501 = vmul.f32 1.0, %v1500
    %v1502 = vtanh.pop %v1489
    %v1503 = vmul.f32 %v1499, %v1409
    %v1504 = vmul.f32 %v1499, %v1502
    %1506 = vrot.lane.b32.xlu0 %v1504, 64
    %v1507 = vpop.permute.xlu0 %1506
    %v1509 = vadd.f32 %v1503, %v1507
    %v1510 = vtanh.pop %v1509
    %v1511 = vmul.f32 %v1501, %v1510
    %1513 = vrot.lane.b32.xlu0 %v1511, 64
    %v1514 = vpop.permute.xlu0 %1513
    %v1515 = vsel %vm256, %v1514, 0
    %1517 = vmatprep.subr.mxu0 %v1202
    %1518 = vmatpush1.msra.mxu0 %v1201
    %1519 = vmatprep.subr.mxu0 %v1204
    %1520 = vmatpush1.msra.mxu0 %v1203
    %1521 = vmatprep.subr.mxu0 %v1206
    %1522 = vmatpush1.msra.mxu0 %v1205
    %1523 = vmatprep.subr.mxu0 %v1208
    %1524 = vmatpush1.msra.mxu0 %v1207
    %1525 = vmatprep.subr.mxu0 %v1210
    %1526 = vmatpush1.msra.mxu0 %v1209
    %1527 = vmatprep.subr.mxu0 %v1212
    %1528 = vmatpush1.msra.mxu0 %v1211
    %1529 = vmatprep.subr.mxu0 %v1214
    %1530 = vmatpush1.msra.mxu0 %v1213
    %1531 = vmatprep.subr.mxu0 %v1216
    %1532 = vmatpush1.msra.mxu0 %v1215
    %1533 = vmatprep.subr.mxu0 0.0
    %1534 = vmatpush1.msra.mxu0 0.0
    %1535 = vmatprep.subr.mxu0 0.0
    %1536 = vmatpush1.msra.mxu0 0.0
    %1537 = vmatprep.subr.mxu0 0.0
    %1538 = vmatpush1.msra.mxu0 0.0
    %1539 = vmatprep.subr.mxu0 0.0
    %1540 = vmatpush1.msra.mxu0 0.0
    %1541 = vmatprep.subr.mxu0 0.0
    %1542 = vmatpush1.msra.mxu0 0.0
    %1543 = vmatprep.subr.mxu0 0.0
    %1544 = vmatpush1.msra.mxu0 0.0
    %1545 = vmatprep.subr.mxu0 0.0
    %1546 = vmatpush1.msra.mxu0 0.0
    %1547 = vmatprep.subr.mxu0 0.0
    %1548 = vmatpush1.msra.mxu0 0.0
    %1549 = vmatprep.subr.mxu0 0.0
    %1550 = vmatpush1.msra.mxu0 0.0
    %1551 = vmatprep.subr.mxu0 0.0
    %1552 = vmatpush1.msra.mxu0 0.0
    %1553 = vmatprep.subr.mxu0 0.0
    %1554 = vmatpush1.msra.mxu0 0.0
    %1555 = vmatprep.subr.mxu0 0.0
    %1556 = vmatpush1.msra.mxu0 0.0
    %1557 = vmatprep.subr.mxu0 0.0
    %1558 = vmatpush1.msra.mxu0 0.0
    %1559 = vmatprep.subr.mxu0 0.0
    %1560 = vmatpush1.msra.mxu0 0.0
    %1561 = vmatprep.subr.mxu0 0.0
    %1562 = vmatpush1.msra.mxu0 0.0
    %1563 = vmatprep.subr.mxu0 0.0
    %1564 = vmatpush1.msra.mxu0 0.0
    %1565 = vmatprep.subr.mxu0 0.0
    %1566 = vmatpush1.msra.mxu0 0.0
    %1567 = vmatprep.subr.mxu0 0.0
    %1568 = vmatpush1.msra.mxu0 0.0
    %1569 = vmatprep.subr.mxu0 0.0
    %1570 = vmatpush1.msra.mxu0 0.0
    %1571 = vmatprep.subr.mxu0 0.0
    %1572 = vmatpush1.msra.mxu0 0.0
    %1573 = vmatprep.subr.mxu0 0.0
    %1574 = vmatpush1.msra.mxu0 0.0
    %1575 = vmatprep.subr.mxu0 0.0
    %1576 = vmatpush1.msra.mxu0 0.0
    %1577 = vmatprep.subr.mxu0 0.0
    %1578 = vmatpush1.msra.mxu0 0.0
    %1579 = vmatprep.subr.mxu0 0.0
    %1580 = vmatpush1.msra.mxu0 0.0
    %1581 = vmatprep.mubr.f32.mxu0 0.0
    %1582 = vmatmul.mubr.f32.gmra.mrb[0].mxu0 %v1515
    %v1583 = vpop.f32.mrb[0].mxu0
    %v1584 = vadd.f32 0.0, %v1583
    %v1585 = vpop.f32.mrb[0].mxu0
    %v1586 = vadd.f32 0.0, %v1585
    %1587 = vdwg.mxu0
    %v1588 = vadd.f32 %v1173, %v1584
    %v1589 = vadd.f32 %v1175, %v1586
    %v1590 = vxor.u32 %v1588, 2147483648
    %v1591 = vxor.u32 %v1589, 2147483648
    %v1592 = vmul.f32 %v1590, 1.442695
    %v1593 = vpow.pop %v1592
    %v1594 = vmul.f32 %v1591, 1.442695
    %v1595 = vpow.pop %v1594
    %v1596 = vadd.f32 %v1593, 1.0
    %v1597 = vadd.f32 %v1595, 1.0
    %v1598 = vrcp.pop %v1596
    %v1599 = vmul.f32 1.0, %v1598
    %v1600 = vrcp.pop %v1597
    %v1601 = vmul.f32 1.0, %v1600
    %v1602 = vtanh.pop %v1589
    %v1603 = vmul.f32 %v1599, %v1509
    %v1604 = vmul.f32 %v1599, %v1602
    %1606 = vrot.lane.b32.xlu0 %v1604, 64
    %v1607 = vpop.permute.xlu0 %1606
    %v1609 = vadd.f32 %v1603, %v1607
    %v1610 = vtanh.pop %v1609
    %v1611 = vmul.f32 %v1601, %v1610
    %1613 = vrot.lane.b32.xlu0 %v1611, 64
    %v1614 = vpop.permute.xlu0 %1613
    %v1615 = vsel %vm256, %v1614, 0
    %1617 = vmatprep.subr.mxu0 %v1202
    %1618 = vmatpush1.msra.mxu0 %v1201
    %1619 = vmatprep.subr.mxu0 %v1204
    %1620 = vmatpush1.msra.mxu0 %v1203
    %1621 = vmatprep.subr.mxu0 %v1206
    %1622 = vmatpush1.msra.mxu0 %v1205
    %1623 = vmatprep.subr.mxu0 %v1208
    %1624 = vmatpush1.msra.mxu0 %v1207
    %1625 = vmatprep.subr.mxu0 %v1210
    %1626 = vmatpush1.msra.mxu0 %v1209
    %1627 = vmatprep.subr.mxu0 %v1212
    %1628 = vmatpush1.msra.mxu0 %v1211
    %1629 = vmatprep.subr.mxu0 %v1214
    %1630 = vmatpush1.msra.mxu0 %v1213
    %1631 = vmatprep.subr.mxu0 %v1216
    %1632 = vmatpush1.msra.mxu0 %v1215
    %1633 = vmatprep.subr.mxu0 0.0
    %1634 = vmatpush1.msra.mxu0 0.0
    %1635 = vmatprep.subr.mxu0 0.0
    %1636 = vmatpush1.msra.mxu0 0.0
    %1637 = vmatprep.subr.mxu0 0.0
    %1638 = vmatpush1.msra.mxu0 0.0
    %1639 = vmatprep.subr.mxu0 0.0
    %1640 = vmatpush1.msra.mxu0 0.0
    %1641 = vmatprep.subr.mxu0 0.0
    %1642 = vmatpush1.msra.mxu0 0.0
    %1643 = vmatprep.subr.mxu0 0.0
    %1644 = vmatpush1.msra.mxu0 0.0
    %1645 = vmatprep.subr.mxu0 0.0
    %1646 = vmatpush1.msra.mxu0 0.0
    %1647 = vmatprep.subr.mxu0 0.0
    %1648 = vmatpush1.msra.mxu0 0.0
    %1649 = vmatprep.subr.mxu0 0.0
    %1650 = vmatpush1.msra.mxu0 0.0
    %1651 = vmatprep.subr.mxu0 0.0
    %1652 = vmatpush1.msra.mxu0 0.0
    %1653 = vmatprep.subr.mxu0 0.0
    %1654 = vmatpush1.msra.mxu0 0.0
    %1655 = vmatprep.subr.mxu0 0.0
    %1656 = vmatpush1.msra.mxu0 0.0
    %1657 = vmatprep.subr.mxu0 0.0
    %1658 = vmatpush1.msra.mxu0 0.0
    %1659 = vmatprep.subr.mxu0 0.0
    %1660 = vmatpush1.msra.mxu0 0.0
    %1661 = vmatprep.subr.mxu0 0.0
    %1662 = vmatpush1.msra.mxu0 0.0
    %1663 = vmatprep.subr.mxu0 0.0
    %1664 = vmatpush1.msra.mxu0 0.0
    %1665 = vmatprep.subr.mxu0 0.0
    %1666 = vmatpush1.msra.mxu0 0.0
    %1667 = vmatprep.subr.mxu0 0.0
    %1668 = vmatpush1.msra.mxu0 0.0
    %1669 = vmatprep.subr.mxu0 0.0
    %1670 = vmatpush1.msra.mxu0 0.0
    %1671 = vmatprep.subr.mxu0 0.0
    %1672 = vmatpush1.msra.mxu0 0.0
    %1673 = vmatprep.subr.mxu0 0.0
    %1674 = vmatpush1.msra.mxu0 0.0
    %1675 = vmatprep.subr.mxu0 0.0
    %1676 = vmatpush1.msra.mxu0 0.0
    %1677 = vmatprep.subr.mxu0 0.0
    %1678 = vmatpush1.msra.mxu0 0.0
    %1679 = vmatprep.subr.mxu0 0.0
    %1680 = vmatpush1.msra.mxu0 0.0
    %1681 = vmatprep.mubr.f32.mxu0 0.0
    %1682 = vmatmul.mubr.f32.gmra.mrb[0].mxu0 %v1615
    %v1683 = vpop.f32.mrb[0].mxu0
    %v1684 = vadd.f32 0.0, %v1683
    %v1685 = vpop.f32.mrb[0].mxu0
    %v1686 = vadd.f32 0.0, %v1685
    %1687 = vdwg.mxu0
    %v1688 = vadd.f32 %v1179, %v1684
    %v1689 = vadd.f32 %v1181, %v1686
    %v1690 = vxor.u32 %v1688, 2147483648
    %v1691 = vxor.u32 %v1689, 2147483648
    %v1692 = vmul.f32 %v1690, 1.442695
    %v1693 = vpow.pop %v1692
    %v1694 = vmul.f32 %v1691, 1.442695
    %v1695 = vpow.pop %v1694
    %v1696 = vadd.f32 %v1693, 1.0
    %v1697 = vadd.f32 %v1695, 1.0
    %v1698 = vrcp.pop %v1696
    %v1699 = vmul.f32 1.0, %v1698
    %v1700 = vrcp.pop %v1697
    %v1701 = vmul.f32 1.0, %v1700
    %v1702 = vtanh.pop %v1689
    %v1703 = vmul.f32 %v1699, %v1609
    %v1704 = vmul.f32 %v1699, %v1702
    %1706 = vrot.lane.b32.xlu0 %v1704, 64
    %v1707 = vpop.permute.xlu0 %1706
    %v1709 = vadd.f32 %v1703, %v1707
    %v1710 = vtanh.pop %v1709
    %v1711 = vmul.f32 %v1701, %v1710
    %1713 = vrot.lane.b32.xlu0 %v1711, 64
    %v1714 = vpop.permute.xlu0 %1713
    %v1715 = vsel %vm256, %v1714, 0
    %1717 = vmatprep.subr.mxu0 %v1202
    %1718 = vmatpush1.msra.mxu0 %v1201
    %1719 = vmatprep.subr.mxu0 %v1204
    %1720 = vmatpush1.msra.mxu0 %v1203
    %1721 = vmatprep.subr.mxu0 %v1206
    %1722 = vmatpush1.msra.mxu0 %v1205
    %1723 = vmatprep.subr.mxu0 %v1208
    %1724 = vmatpush1.msra.mxu0 %v1207
    %1725 = vmatprep.subr.mxu0 %v1210
    %1726 = vmatpush1.msra.mxu0 %v1209
    %1727 = vmatprep.subr.mxu0 %v1212
    %1728 = vmatpush1.msra.mxu0 %v1211
    %1729 = vmatprep.subr.mxu0 %v1214
    %1730 = vmatpush1.msra.mxu0 %v1213
    %1731 = vmatprep.subr.mxu0 %v1216
    %1732 = vmatpush1.msra.mxu0 %v1215
    %1733 = vmatprep.subr.mxu0 0.0
    %1734 = vmatpush1.msra.mxu0 0.0
    %1735 = vmatprep.subr.mxu0 0.0
    %1736 = vmatpush1.msra.mxu0 0.0
    %1737 = vmatprep.subr.mxu0 0.0
    %1738 = vmatpush1.msra.mxu0 0.0
    %1739 = vmatprep.subr.mxu0 0.0
    %1740 = vmatpush1.msra.mxu0 0.0
    %1741 = vmatprep.subr.mxu0 0.0
    %1742 = vmatpush1.msra.mxu0 0.0
    %1743 = vmatprep.subr.mxu0 0.0
    %1744 = vmatpush1.msra.mxu0 0.0
    %1745 = vmatprep.subr.mxu0 0.0
    %1746 = vmatpush1.msra.mxu0 0.0
    %1747 = vmatprep.subr.mxu0 0.0
    %1748 = vmatpush1.msra.mxu0 0.0
    %1749 = vmatprep.subr.mxu0 0.0
    %1750 = vmatpush1.msra.mxu0 0.0
    %1751 = vmatprep.subr.mxu0 0.0
    %1752 = vmatpush1.msra.mxu0 0.0
    %1753 = vmatprep.subr.mxu0 0.0
    %1754 = vmatpush1.msra.mxu0 0.0
    %1755 = vmatprep.subr.mxu0 0.0
    %1756 = vmatpush1.msra.mxu0 0.0
    %1757 = vmatprep.subr.mxu0 0.0
    %1758 = vmatpush1.msra.mxu0 0.0
    %1759 = vmatprep.subr.mxu0 0.0
    %1760 = vmatpush1.msra.mxu0 0.0
    %1761 = vmatprep.subr.mxu0 0.0
    %1762 = vmatpush1.msra.mxu0 0.0
    %1763 = vmatprep.subr.mxu0 0.0
    %1764 = vmatpush1.msra.mxu0 0.0
    %1765 = vmatprep.subr.mxu0 0.0
    %1766 = vmatpush1.msra.mxu0 0.0
    %1767 = vmatprep.subr.mxu0 0.0
    %1768 = vmatpush1.msra.mxu0 0.0
    %1769 = vmatprep.subr.mxu0 0.0
    %1770 = vmatpush1.msra.mxu0 0.0
    %1771 = vmatprep.subr.mxu0 0.0
    %1772 = vmatpush1.msra.mxu0 0.0
    %1773 = vmatprep.subr.mxu0 0.0
    %1774 = vmatpush1.msra.mxu0 0.0
    %1775 = vmatprep.subr.mxu0 0.0
    %1776 = vmatpush1.msra.mxu0 0.0
    %1777 = vmatprep.subr.mxu0 0.0
    %1778 = vmatpush1.msra.mxu0 0.0
    %1779 = vmatprep.subr.mxu0 0.0
    %1780 = vmatpush1.msra.mxu0 0.0
    %1781 = vmatprep.mubr.f32.mxu0 0.0
    %1782 = vmatmul.mubr.f32.gmra.mrb[0].mxu0 %v1715
    %v1783 = vpop.f32.mrb[0].mxu0
    %v1784 = vadd.f32 0.0, %v1783
    %v1785 = vpop.f32.mrb[0].mxu0
    %v1786 = vadd.f32 0.0, %v1785
    %1787 = vdwg.mxu0
    %v1788 = vadd.f32 %v1185, %v1784
    %v1789 = vadd.f32 %v1187, %v1786
    %v1790 = vxor.u32 %v1788, 2147483648
    %v1791 = vxor.u32 %v1789, 2147483648
    %v1792 = vmul.f32 %v1790, 1.442695
    %v1793 = vpow.pop %v1792
    %v1794 = vmul.f32 %v1791, 1.442695
    %v1795 = vpow.pop %v1794
    %v1796 = vadd.f32 %v1793, 1.0
    %v1797 = vadd.f32 %v1795, 1.0
    %v1798 = vrcp.pop %v1796
    %v1799 = vmul.f32 1.0, %v1798
    %v1800 = vrcp.pop %v1797
    %v1801 = vmul.f32 1.0, %v1800
    %v1802 = vtanh.pop %v1789
    %v1803 = vmul.f32 %v1799, %v1709
    %v1804 = vmul.f32 %v1799, %v1802
    %1806 = vrot.lane.b32.xlu0 %v1804, 64
    %v1807 = vpop.permute.xlu0 %1806
    %v1809 = vadd.f32 %v1803, %v1807
    %v1810 = vtanh.pop %v1809
    %v1811 = vmul.f32 %v1801, %v1810
    %1813 = vrot.lane.b32.xlu0 %v1811, 64
    %v1814 = vpop.permute.xlu0 %1813
    %v1815 = vsel %vm256, %v1814, 0
    %1817 = vmatprep.subr.mxu0 %v1202
    %1818 = vmatpush1.msra.mxu0 %v1201
    %1819 = vmatprep.subr.mxu0 %v1204
    %1820 = vmatpush1.msra.mxu0 %v1203
    %1821 = vmatprep.subr.mxu0 %v1206
    %1822 = vmatpush1.msra.mxu0 %v1205
    %1823 = vmatprep.subr.mxu0 %v1208
    %1824 = vmatpush1.msra.mxu0 %v1207
    %1825 = vmatprep.subr.mxu0 %v1210
    %1826 = vmatpush1.msra.mxu0 %v1209
    %1827 = vmatprep.subr.mxu0 %v1212
    %1828 = vmatpush1.msra.mxu0 %v1211
    %1829 = vmatprep.subr.mxu0 %v1214
    %1830 = vmatpush1.msra.mxu0 %v1213
    %1831 = vmatprep.subr.mxu0 %v1216
    %1832 = vmatpush1.msra.mxu0 %v1215
    %1833 = vmatprep.subr.mxu0 0.0
    %1834 = vmatpush1.msra.mxu0 0.0
    %1835 = vmatprep.subr.mxu0 0.0
    %1836 = vmatpush1.msra.mxu0 0.0
    %1837 = vmatprep.subr.mxu0 0.0
    %1838 = vmatpush1.msra.mxu0 0.0
    %1839 = vmatprep.subr.mxu0 0.0
    %1840 = vmatpush1.msra.mxu0 0.0
    %1841 = vmatprep.subr.mxu0 0.0
    %1842 = vmatpush1.msra.mxu0 0.0
    %1843 = vmatprep.subr.mxu0 0.0
    %1844 = vmatpush1.msra.mxu0 0.0
    %1845 = vmatprep.subr.mxu0 0.0
    %1846 = vmatpush1.msra.mxu0 0.0
    %1847 = vmatprep.subr.mxu0 0.0
    %1848 = vmatpush1.msra.mxu0 0.0
    %1849 = vmatprep.subr.mxu0 0.0
    %1850 = vmatpush1.msra.mxu0 0.0
    %1851 = vmatprep.subr.mxu0 0.0
    %1852 = vmatpush1.msra.mxu0 0.0
    %1853 = vmatprep.subr.mxu0 0.0
    %1854 = vmatpush1.msra.mxu0 0.0
    %1855 = vmatprep.subr.mxu0 0.0
    %1856 = vmatpush1.msra.mxu0 0.0
    %1857 = vmatprep.subr.mxu0 0.0
    %1858 = vmatpush1.msra.mxu0 0.0
    %1859 = vmatprep.subr.mxu0 0.0
    %1860 = vmatpush1.msra.mxu0 0.0
    %1861 = vmatprep.subr.mxu0 0.0
    %1862 = vmatpush1.msra.mxu0 0.0
    %1863 = vmatprep.subr.mxu0 0.0
    %1864 = vmatpush1.msra.mxu0 0.0
    %1865 = vmatprep.subr.mxu0 0.0
    %1866 = vmatpush1.msra.mxu0 0.0
    %1867 = vmatprep.subr.mxu0 0.0
    %1868 = vmatpush1.msra.mxu0 0.0
    %1869 = vmatprep.subr.mxu0 0.0
    %1870 = vmatpush1.msra.mxu0 0.0
    %1871 = vmatprep.subr.mxu0 0.0
    %1872 = vmatpush1.msra.mxu0 0.0
    %1873 = vmatprep.subr.mxu0 0.0
    %1874 = vmatpush1.msra.mxu0 0.0
    %1875 = vmatprep.subr.mxu0 0.0
    %1876 = vmatpush1.msra.mxu0 0.0
    %1877 = vmatprep.subr.mxu0 0.0
    %1878 = vmatpush1.msra.mxu0 0.0
    %1879 = vmatprep.subr.mxu0 0.0
    %1880 = vmatpush1.msra.mxu0 0.0
    %1881 = vmatprep.mubr.f32.mxu0 0.0
    %1882 = vmatmul.mubr.f32.gmra.mrb[0].mxu0 %v1815
    %v1883 = vpop.f32.mrb[0].mxu0
    %v1884 = vadd.f32 0.0, %v1883
    %v1885 = vpop.f32.mrb[0].mxu0
    %v1886 = vadd.f32 0.0, %v1885
    %1887 = vdwg.mxu0
    %v1888 = vadd.f32 %v1191, %v1884
    %v1889 = vadd.f32 %v1193, %v1886
    %v1890 = vxor.u32 %v1888, 2147483648
    %v1891 = vxor.u32 %v1889, 2147483648
    %v1892 = vmul.f32 %v1890, 1.442695
    %v1893 = vpow.pop %v1892
    %v1894 = vmul.f32 %v1891, 1.442695
    %v1895 = vpow.pop %v1894
    %v1896 = vadd.f32 %v1893, 1.0
    %v1897 = vadd.f32 %v1895, 1.0
    %v1898 = vrcp.pop %v1896
    %v1899 = vmul.f32 1.0, %v1898
    %v1900 = vrcp.pop %v1897
    %v1901 = vmul.f32 1.0, %v1900
    %v1902 = vtanh.pop %v1889
    %v1903 = vmul.f32 %v1899, %v1809
    %v1904 = vmul.f32 %v1899, %v1902
    %1906 = vrot.lane.b32.xlu0 %v1904, 64
    %v1907 = vpop.permute.xlu0 %1906
    %v1909 = vadd.f32 %v1903, %v1907
    %v1910 = vtanh.pop %v1909
    %v1911 = vmul.f32 %v1901, %v1910
    %1913 = vrot.lane.b32.xlu0 %v1911, 64
    %v1914 = vpop.permute.xlu0 %1913
    %v1915 = vsel %vm256, %v1914, 0
    %1917 = vmatprep.subr.mxu0 %v1202
    %1918 = vmatpush1.msra.mxu0 %v1201
    %1919 = vmatprep.subr.mxu0 %v1204
    %1920 = vmatpush1.msra.mxu0 %v1203
    %1921 = vmatprep.subr.mxu0 %v1206
    %1922 = vmatpush1.msra.mxu0 %v1205
    %1923 = vmatprep.subr.mxu0 %v1208
    %1924 = vmatpush1.msra.mxu0 %v1207
    %1925 = vmatprep.subr.mxu0 %v1210
    %1926 = vmatpush1.msra.mxu0 %v1209
    %1927 = vmatprep.subr.mxu0 %v1212
    %1928 = vmatpush1.msra.mxu0 %v1211
    %1929 = vmatprep.subr.mxu0 %v1214
    %1930 = vmatpush1.msra.mxu0 %v1213
    %1931 = vmatprep.subr.mxu0 %v1216
    %1932 = vmatpush1.msra.mxu0 %v1215
    %1933 = vmatprep.subr.mxu0 0.0
    %1934 = vmatpush1.msra.mxu0 0.0
    %1935 = vmatprep.subr.mxu0 0.0
    %1936 = vmatpush1.msra.mxu0 0.0
    %1937 = vmatprep.subr.mxu0 0.0
    %1938 = vmatpush1.msra.mxu0 0.0
    %1939 = vmatprep.subr.mxu0 0.0
    %1940 = vmatpush1.msra.mxu0 0.0
    %1941 = vmatprep.subr.mxu0 0.0
    %1942 = vmatpush1.msra.mxu0 0.0
    %1943 = vmatprep.subr.mxu0 0.0
    %1944 = vmatpush1.msra.mxu0 0.0
    %1945 = vmatprep.subr.mxu0 0.0
    %1946 = vmatpush1.msra.mxu0 0.0
    %1947 = vmatprep.subr.mxu0 0.0
    %1948 = vmatpush1.msra.mxu0 0.0
    %1949 = vmatprep.subr.mxu0 0.0
    %1950 = vmatpush1.msra.mxu0 0.0
    %1951 = vmatprep.subr.mxu0 0.0
    %1952 = vmatpush1.msra.mxu0 0.0
    %1953 = vmatprep.subr.mxu0 0.0
    %1954 = vmatpush1.msra.mxu0 0.0
    %1955 = vmatprep.subr.mxu0 0.0
    %1956 = vmatpush1.msra.mxu0 0.0
    %1957 = vmatprep.subr.mxu0 0.0
    %1958 = vmatpush1.msra.mxu0 0.0
    %1959 = vmatprep.subr.mxu0 0.0
    %1960 = vmatpush1.msra.mxu0 0.0
    %1961 = vmatprep.subr.mxu0 0.0
    %1962 = vmatpush1.msra.mxu0 0.0
    %1963 = vmatprep.subr.mxu0 0.0
    %1964 = vmatpush1.msra.mxu0 0.0
    %1965 = vmatprep.subr.mxu0 0.0
    %1966 = vmatpush1.msra.mxu0 0.0
    %1967 = vmatprep.subr.mxu0 0.0
    %1968 = vmatpush1.msra.mxu0 0.0
    %1969 = vmatprep.subr.mxu0 0.0
    %1970 = vmatpush1.msra.mxu0 0.0
    %1971 = vmatprep.subr.mxu0 0.0
    %1972 = vmatpush1.msra.mxu0 0.0
    %1973 = vmatprep.subr.mxu0 0.0
    %1974 = vmatpush1.msra.mxu0 0.0
    %1975 = vmatprep.subr.mxu0 0.0
    %1976 = vmatpush1.msra.mxu0 0.0
    %1977 = vmatprep.subr.mxu0 0.0
    %1978 = vmatpush1.msra.mxu0 0.0
    %1979 = vmatprep.subr.mxu0 0.0
    %1980 = vmatpush1.msra.mxu0 0.0
    %1981 = vmatprep.mubr.f32.mxu0 0.0
    %1982 = vmatmul.mubr.f32.gmra.mrb[0].mxu0 %v1915
    %v1983 = vpop.f32.mrb[0].mxu0
    %v1984 = vadd.f32 0.0, %v1983
    %v1985 = vpop.f32.mrb[0].mxu0
    %v1986 = vadd.f32 0.0, %v1985
    %1987 = vdwg.mxu0
    %v1988 = vadd.f32 %v1197, %v1984
    %v1989 = vadd.f32 %v1199, %v1986
    %v1990 = vxor.u32 %v1988, 2147483648
    %v1991 = vxor.u32 %v1989, 2147483648
    %v1992 = vmul.f32 %v1990, 1.442695
    %v1993 = vpow.pop %v1992
    %v1994 = vmul.f32 %v1991, 1.442695
    %v1995 = vpow.pop %v1994
    %v1996 = vadd.f32 %v1993, 1.0
    %v1997 = vadd.f32 %v1995, 1.0
    %v1998 = vrcp.pop %v1996
    %v1999 = vmul.f32 1.0, %v1998
    %v2000 = vrcp.pop %v1997
    %v2001 = vmul.f32 1.0, %v2000
    %v2002 = vtanh.pop %v1989
    %v2003 = vmul.f32 %v1999, %v1909
    %v2004 = vmul.f32 %v1999, %v2002
    %2006 = vrot.lane.b32.xlu0 %v2004, 64
    %v2007 = vpop.permute.xlu0 %2006
    %v2009 = vadd.f32 %v2003, %v2007
    %v2010 = vtanh.pop %v2009
    %v2011 = vmul.f32 %v2001, %v2010
    %v2012 = vld [vmem:[#allocation8] sm:$0xff]
    %v2013 = vld [vmem:[#allocation8 + $0x8] sm:$0xff]
    %v2014 = vld [vmem:[#allocation8 + $0x10] sm:$0xff]
    %v2015 = vld [vmem:[#allocation8 + $0x18] sm:$0xff]
    %v2016 = vld [vmem:[#allocation8 + $0x20] sm:$0xff]
    %v2017 = vld [vmem:[#allocation8 + $0x28] sm:$0xff]
    %v2018 = vld [vmem:[#allocation8 + $0x30] sm:$0xff]
    %v2019 = vld [vmem:[#allocation8 + $0x38] sm:$0xff]
    %v2020 = vld [vmem:[#allocation8 + $0x40] sm:$0xff]
    %v2021 = vld [vmem:[#allocation8 + $0x48] sm:$0xff]
    %v2022 = vld [vmem:[#allocation8 + $0x50] sm:$0xff]
    %v2023 = vld [vmem:[#allocation8 + $0x58] sm:$0xff]
    %v2024 = vld [vmem:[#allocation8 + $0x60] sm:$0xff]
    %v2025 = vld [vmem:[#allocation8 + $0x68] sm:$0xff]
    %v2026 = vld [vmem:[#allocation8 + $0x70] sm:$0xff]
    %v2027 = vld [vmem:[#allocation8 + $0x78] sm:$0xff]
    %v2028 = vld [vmem:[#allocation11] sm:$0x3]
    %v2030 = vlaneseq
    %v2031 = vshrl.u32 %v2030, 7
    %v2032 = vsub.s32 0, %v2031
    %v2033 = vrot.slane %v2028, %v2032
    %v2034 = vlaneseq
    %v2035 = vshrl.u32 %v2034, 7
    %v2036 = vsub.s32 1, %v2035
    %v2037 = vrot.slane %v2028, %v2036
    %2041 = vrot.lane.b32.xlu0 %v2011, 64
    %v2042 = vpop.permute.xlu0 %2041
    %v2043 = vsel %vm256, %v2042, 0
    %2045 = vmatprep.subr.mxu0 %v2013
    %2046 = vmatpush1.msra.mxu0 %v2012
    %2047 = vmatprep.subr.mxu0 %v2015
    %2048 = vmatpush1.msra.mxu0 %v2014
    %2049 = vmatprep.subr.mxu0 %v2017
    %2050 = vmatpush1.msra.mxu0 %v2016
    %2051 = vmatprep.subr.mxu0 %v2019
    %2052 = vmatpush1.msra.mxu0 %v2018
    %2053 = vmatprep.subr.mxu0 %v2021
    %2054 = vmatpush1.msra.mxu0 %v2020
    %2055 = vmatprep.subr.mxu0 %v2023
    %2056 = vmatpush1.msra.mxu0 %v2022
    %2057 = vmatprep.subr.mxu0 %v2025
    %2058 = vmatpush1.msra.mxu0 %v2024
    %2059 = vmatprep.subr.mxu0 %v2027
    %2060 = vmatpush1.msra.mxu0 %v2026
    %2061 = vmatprep.subr.mxu0 0.0
    %2062 = vmatpush1.msra.mxu0 0.0
    %2063 = vmatprep.subr.mxu0 0.0
    %2064 = vmatpush1.msra.mxu0 0.0
    %2065 = vmatprep.subr.mxu0 0.0
    %2066 = vmatpush1.msra.mxu0 0.0
    %2067 = vmatprep.subr.mxu0 0.0
    %2068 = vmatpush1.msra.mxu0 0.0
    %2069 = vmatprep.subr.mxu0 0.0
    %2070 = vmatpush1.msra.mxu0 0.0
    %2071 = vmatprep.subr.mxu0 0.0
    %2072 = vmatpush1.msra.mxu0 0.0
    %2073 = vmatprep.subr.mxu0 0.0
    %2074 = vmatpush1.msra.mxu0 0.0
    %2075 = vmatprep.subr.mxu0 0.0
    %2076 = vmatpush1.msra.mxu0 0.0
    %2077 = vmatprep.subr.mxu0 0.0
    %2078 = vmatpush1.msra.mxu0 0.0
    %2079 = vmatprep.subr.mxu0 0.0
    %2080 = vmatpush1.msra.mxu0 0.0
    %2081 = vmatprep.subr.mxu0 0.0
    %2082 = vmatpush1.msra.mxu0 0.0
    %2083 = vmatprep.subr.mxu0 0.0
    %2084 = vmatpush1.msra.mxu0 0.0
    %2085 = vmatprep.subr.mxu0 0.0
    %2086 = vmatpush1.msra.mxu0 0.0
    %2087 = vmatprep.subr.mxu0 0.0
    %2088 = vmatpush1.msra.mxu0 0.0
    %2089 = vmatprep.subr.mxu0 0.0
    %2090 = vmatpush1.msra.mxu0 0.0
    %2091 = vmatprep.subr.mxu0 0.0
    %2092 = vmatpush1.msra.mxu0 0.0
    %2093 = vmatprep.subr.mxu0 0.0
    %2094 = vmatpush1.msra.mxu0 0.0
    %2095 = vmatprep.subr.mxu0 0.0
    %2096 = vmatpush1.msra.mxu0 0.0
    %2097 = vmatprep.subr.mxu0 0.0
    %2098 = vmatpush1.msra.mxu0 0.0
    %2099 = vmatprep.subr.mxu0 0.0
    %2100 = vmatpush1.msra.mxu0 0.0
    %2101 = vmatprep.subr.mxu0 0.0
    %2102 = vmatpush1.msra.mxu0 0.0
    %2103 = vmatprep.subr.mxu0 0.0
    %2104 = vmatpush1.msra.mxu0 0.0
    %2105 = vmatprep.subr.mxu0 0.0
    %2106 = vmatpush1.msra.mxu0 0.0
    %2107 = vmatprep.subr.mxu0 0.0
    %2108 = vmatpush1.msra.mxu0 0.0
    %2109 = vmatprep.mubr.f32.mxu0 0.0
    %2110 = vmatmul.mubr.f32.gmra.mrb[0].mxu0 %v1315
    %v2111 = vpop.f32.mrb[0].mxu0
    %v2112 = vadd.f32 %v2033, %v2111
    %v2113 = vpop.f32.mrb[0].mxu0
    %v2114 = vadd.f32 %v2037, %v2113
    %2115 = vmatprep.mubr.f32.mxu0 0.0
    %2116 = vmatmul.mubr.f32.gmra.mrb[0].mxu0 %v1415
    %v2117 = vpop.f32.mrb[0].mxu0
    %v2118 = vadd.f32 %v2033, %v2117
    %v2119 = vpop.f32.mrb[0].mxu0
    %v2120 = vadd.f32 %v2037, %v2119
    %2121 = vmatprep.mubr.f32.mxu0 0.0
    %2122 = vmatmul.mubr.f32.gmra.mrb[0].mxu0 %v1515
    %v2123 = vpop.f32.mrb[0].mxu0
    %v2124 = vadd.f32 %v2033, %v2123
    %v2125 = vpop.f32.mrb[0].mxu0
    %v2126 = vadd.f32 %v2037, %v2125
    %2127 = vmatprep.mubr.f32.mxu0 0.0
    %2128 = vmatmul.mubr.f32.gmra.mrb[0].mxu0 %v1615
    %v2129 = vpop.f32.mrb[0].mxu0
    %v2130 = vadd.f32 %v2033, %v2129
    %v2131 = vpop.f32.mrb[0].mxu0
    %v2132 = vadd.f32 %v2037, %v2131
    %2133 = vmatprep.mubr.f32.mxu0 0.0
    %2134 = vmatmul.mubr.f32.gmra.mrb[0].mxu0 %v1715
    %v2135 = vpop.f32.mrb[0].mxu0
    %v2136 = vadd.f32 %v2033, %v2135
    %v2137 = vpop.f32.mrb[0].mxu0
    %v2138 = vadd.f32 %v2037, %v2137
    %2139 = vmatprep.mubr.f32.mxu0 0.0
    %2140 = vmatmul.mubr.f32.gmra.mrb[0].mxu0 %v1815
    %v2141 = vpop.f32.mrb[0].mxu0
    %v2142 = vadd.f32 %v2033, %v2141
    %v2143 = vpop.f32.mrb[0].mxu0
    %v2144 = vadd.f32 %v2037, %v2143
    %2145 = vmatprep.mubr.f32.mxu0 0.0
    %2146 = vmatmul.mubr.f32.gmra.mrb[0].mxu0 %v1915
    %v2147 = vpop.f32.mrb[0].mxu0
    %v2148 = vadd.f32 %v2033, %v2147
    %v2149 = vpop.f32.mrb[0].mxu0
    %v2150 = vadd.f32 %v2037, %v2149
    %2151 = vmatprep.mubr.f32.mxu0 0.0
    %2152 = vmatmul.mubr.f32.gmra.mrb[0].mxu0 %v2043
    %v2153 = vpop.f32.mrb[0].mxu0
    %v2154 = vadd.f32 %v2033, %v2153
    %v2155 = vpop.f32.mrb[0].mxu0
    %v2156 = vadd.f32 %v2037, %v2155
    %2157 = vdwg.mxu0
    %v2158 = vld [vmem:[#allocation10] sm:$0xff]
    %v2159 = vld [vmem:[#allocation10 + $0x8] sm:$0xff]
    %v2160 = vld [vmem:[#allocation10 + $0x10] sm:$0xff]
    %v2161 = vld [vmem:[#allocation10 + $0x18] sm:$0xff]
    %v2162 = vld [vmem:[#allocation10 + $0x20] sm:$0xff]
    %v2163 = vld [vmem:[#allocation10 + $0x28] sm:$0xff]
    %v2164 = vld [vmem:[#allocation10 + $0x30] sm:$0xff]
    %v2165 = vld [vmem:[#allocation10 + $0x38] sm:$0xff]
    %v2166 = vld [vmem:[#allocation10 + $0x40] sm:$0xff]
    %v2167 = vld [vmem:[#allocation10 + $0x48] sm:$0xff]
    %v2168 = vld [vmem:[#allocation10 + $0x50] sm:$0xff]
    %v2169 = vld [vmem:[#allocation10 + $0x58] sm:$0xff]
    %v2170 = vld [vmem:[#allocation10 + $0x60] sm:$0xff]
    %v2171 = vld [vmem:[#allocation10 + $0x68] sm:$0xff]
    %v2172 = vld [vmem:[#allocation10 + $0x70] sm:$0xff]
    %v2173 = vld [vmem:[#allocation10 + $0x78] sm:$0xff]
    %2174 = vmatprep.subr.mxu0 %v2159
    %2175 = vmatpush1.msra.mxu0 %v2158
    %2176 = vmatprep.subr.mxu0 %v2161
    %2177 = vmatpush1.msra.mxu0 %v2160
    %2178 = vmatprep.subr.mxu0 %v2163
    %2179 = vmatpush1.msra.mxu0 %v2162
    %2180 = vmatprep.subr.mxu0 %v2165
    %2181 = vmatpush1.msra.mxu0 %v2164
    %2182 = vmatprep.subr.mxu0 %v2167
    %2183 = vmatpush1.msra.mxu0 %v2166
    %2184 = vmatprep.subr.mxu0 %v2169
    %2185 = vmatpush1.msra.mxu0 %v2168
    %2186 = vmatprep.subr.mxu0 %v2171
    %2187 = vmatpush1.msra.mxu0 %v2170
    %2188 = vmatprep.subr.mxu0 %v2173
    %2189 = vmatpush1.msra.mxu0 %v2172
    %2190 = vmatprep.subr.mxu0 0.0
    %2191 = vmatpush1.msra.mxu0 0.0
    %2192 = vmatprep.subr.mxu0 0.0
    %2193 = vmatpush1.msra.mxu0 0.0
    %2194 = vmatprep.subr.mxu0 0.0
    %2195 = vmatpush1.msra.mxu0 0.0
    %2196 = vmatprep.subr.mxu0 0.0
    %2197 = vmatpush1.msra.mxu0 0.0
    %2198 = vmatprep.subr.mxu0 0.0
    %2199 = vmatpush1.msra.mxu0 0.0
    %2200 = vmatprep.subr.mxu0 0.0
    %2201 = vmatpush1.msra.mxu0 0.0
    %2202 = vmatprep.subr.mxu0 0.0
    %2203 = vmatpush1.msra.mxu0 0.0
    %2204 = vmatprep.subr.mxu0 0.0
    %2205 = vmatpush1.msra.mxu0 0.0
    %2206 = vmatprep.subr.mxu0 0.0
    %2207 = vmatpush1.msra.mxu0 0.0
    %2208 = vmatprep.subr.mxu0 0.0
    %2209 = vmatpush1.msra.mxu0 0.0
    %2210 = vmatprep.subr.mxu0 0.0
    %2211 = vmatpush1.msra.mxu0 0.0
    %2212 = vmatprep.subr.mxu0 0.0
    %2213 = vmatpush1.msra.mxu0 0.0
    %2214 = vmatprep.subr.mxu0 0.0
    %2215 = vmatpush1.msra.mxu0 0.0
    %2216 = vmatprep.subr.mxu0 0.0
    %2217 = vmatpush1.msra.mxu0 0.0
    %2218 = vmatprep.subr.mxu0 0.0
    %2219 = vmatpush1.msra.mxu0 0.0
    %2220 = vmatprep.subr.mxu0 0.0
    %2221 = vmatpush1.msra.mxu0 0.0
    %2222 = vmatprep.subr.mxu0 0.0
    %2223 = vmatpush1.msra.mxu0 0.0
    %2224 = vmatprep.subr.mxu0 0.0
    %2225 = vmatpush1.msra.mxu0 0.0
    %2226 = vmatprep.subr.mxu0 0.0
    %2227 = vmatpush1.msra.mxu0 0.0
    %2228 = vmatprep.subr.mxu0 0.0
    %2229 = vmatpush1.msra.mxu0 0.0
    %2230 = vmatprep.subr.mxu0 0.0
    %2231 = vmatpush1.msra.mxu0 0.0
    %2232 = vmatprep.subr.mxu0 0.0
    %2233 = vmatpush1.msra.mxu0 0.0
    %2234 = vmatprep.subr.mxu0 0.0
    %2235 = vmatpush1.msra.mxu0 0.0
    %2236 = vmatprep.subr.mxu0 0.0
    %2237 = vmatpush1.msra.mxu0 0.0
    %2238 = vmatprep.mubr.f32.mxu0 0.0
    %2239 = vmatmul.mubr.f32.gmra.mrb[0].mxu0 %v258
    %v2240 = vpop.f32.mrb[0].mxu0
    %v2241 = vadd.f32 0.0, %v2240
    %v2242 = vpop.f32.mrb[0].mxu0
    %v2243 = vadd.f32 0.0, %v2242
    %2244 = vdwg.mxu0
    %v2245 = vadd.f32 %v2112, %v2241
    %v2246 = vadd.f32 %v2114, %v2243
    %v2247 = vxor.u32 %v2245, 2147483648
    %v2248 = vxor.u32 %v2246, 2147483648
    %v2249 = vmul.f32 %v2247, 1.442695
    %v2250 = vpow.pop %v2249
    %v2251 = vmul.f32 %v2248, 1.442695
    %v2252 = vpow.pop %v2251
    %v2253 = vadd.f32 %v2250, 1.0
    %v2254 = vadd.f32 %v2252, 1.0
    %v2255 = vrcp.pop %v2253
    %v2256 = vmul.f32 1.0, %v2255
    %v2257 = vrcp.pop %v2254
    %v2258 = vmul.f32 1.0, %v2257
    %v2259 = vtanh.pop %v2246
    %v2260 = vmul.f32 %v2256, 0.0
    %v2261 = vmul.f32 %v2256, %v2259
    %2263 = vrot.lane.b32.xlu0 %v2261, 64
    %v2264 = vpop.permute.xlu0 %2263
    %v2266 = vadd.f32 %v2260, %v2264
    %v2267 = vtanh.pop %v2266
    %v2268 = vmul.f32 %v2258, %v2267
    %2270 = vrot.lane.b32.xlu0 %v2268, 64
    %v2271 = vpop.permute.xlu0 %2270
    %v2272 = vsel %vm256, %v2271, 0
    %2274 = vmatprep.subr.mxu0 %v2159
    %2275 = vmatpush1.msra.mxu0 %v2158
    %2276 = vmatprep.subr.mxu0 %v2161
    %2277 = vmatpush1.msra.mxu0 %v2160
    %2278 = vmatprep.subr.mxu0 %v2163
    %2279 = vmatpush1.msra.mxu0 %v2162
    %2280 = vmatprep.subr.mxu0 %v2165
    %2281 = vmatpush1.msra.mxu0 %v2164
    %2282 = vmatprep.subr.mxu0 %v2167
    %2283 = vmatpush1.msra.mxu0 %v2166
    %2284 = vmatprep.subr.mxu0 %v2169
    %2285 = vmatpush1.msra.mxu0 %v2168
    %2286 = vmatprep.subr.mxu0 %v2171
    %2287 = vmatpush1.msra.mxu0 %v2170
    %2288 = vmatprep.subr.mxu0 %v2173
    %2289 = vmatpush1.msra.mxu0 %v2172
    %2290 = vmatprep.subr.mxu0 0.0
    %2291 = vmatpush1.msra.mxu0 0.0
    %2292 = vmatprep.subr.mxu0 0.0
    %2293 = vmatpush1.msra.mxu0 0.0
    %2294 = vmatprep.subr.mxu0 0.0
    %2295 = vmatpush1.msra.mxu0 0.0
    %2296 = vmatprep.subr.mxu0 0.0
    %2297 = vmatpush1.msra.mxu0 0.0
    %2298 = vmatprep.subr.mxu0 0.0
    %2299 = vmatpush1.msra.mxu0 0.0
    %2300 = vmatprep.subr.mxu0 0.0
    %2301 = vmatpush1.msra.mxu0 0.0
    %2302 = vmatprep.subr.mxu0 0.0
    %2303 = vmatpush1.msra.mxu0 0.0
    %2304 = vmatprep.subr.mxu0 0.0
    %2305 = vmatpush1.msra.mxu0 0.0
    %2306 = vmatprep.subr.mxu0 0.0
    %2307 = vmatpush1.msra.mxu0 0.0
    %2308 = vmatprep.subr.mxu0 0.0
    %2309 = vmatpush1.msra.mxu0 0.0
    %2310 = vmatprep.subr.mxu0 0.0
    %2311 = vmatpush1.msra.mxu0 0.0
    %2312 = vmatprep.subr.mxu0 0.0
    %2313 = vmatpush1.msra.mxu0 0.0
    %2314 = vmatprep.subr.mxu0 0.0
    %2315 = vmatpush1.msra.mxu0 0.0
    %2316 = vmatprep.subr.mxu0 0.0
    %2317 = vmatpush1.msra.mxu0 0.0
    %2318 = vmatprep.subr.mxu0 0.0
    %2319 = vmatpush1.msra.mxu0 0.0
    %2320 = vmatprep.subr.mxu0 0.0
    %2321 = vmatpush1.msra.mxu0 0.0
    %2322 = vmatprep.subr.mxu0 0.0
    %2323 = vmatpush1.msra.mxu0 0.0
    %2324 = vmatprep.subr.mxu0 0.0
    %2325 = vmatpush1.msra.mxu0 0.0
    %2326 = vmatprep.subr.mxu0 0.0
    %2327 = vmatpush1.msra.mxu0 0.0
    %2328 = vmatprep.subr.mxu0 0.0
    %2329 = vmatpush1.msra.mxu0 0.0
    %2330 = vmatprep.subr.mxu0 0.0
    %2331 = vmatpush1.msra.mxu0 0.0
    %2332 = vmatprep.subr.mxu0 0.0
    %2333 = vmatpush1.msra.mxu0 0.0
    %2334 = vmatprep.subr.mxu0 0.0
    %2335 = vmatpush1.msra.mxu0 0.0
    %2336 = vmatprep.subr.mxu0 0.0
    %2337 = vmatpush1.msra.mxu0 0.0
    %2338 = vmatprep.mubr.f32.mxu0 0.0
    %2339 = vmatmul.mubr.f32.gmra.mrb[0].mxu0 %v2272
    %v2340 = vpop.f32.mrb[0].mxu0
    %v2341 = vadd.f32 0.0, %v2340
    %v2342 = vpop.f32.mrb[0].mxu0
    %v2343 = vadd.f32 0.0, %v2342
    %2344 = vdwg.mxu0
    %v2345 = vadd.f32 %v2118, %v2341
    %v2346 = vadd.f32 %v2120, %v2343
    %v2347 = vxor.u32 %v2345, 2147483648
    %v2348 = vxor.u32 %v2346, 2147483648
    %v2349 = vmul.f32 %v2347, 1.442695
    %v2350 = vpow.pop %v2349
    %v2351 = vmul.f32 %v2348, 1.442695
    %v2352 = vpow.pop %v2351
    %v2353 = vadd.f32 %v2350, 1.0
    %v2354 = vadd.f32 %v2352, 1.0
    %v2355 = vrcp.pop %v2353
    %v2356 = vmul.f32 1.0, %v2355
    %v2357 = vrcp.pop %v2354
    %v2358 = vmul.f32 1.0, %v2357
    %v2359 = vtanh.pop %v2346
    %v2360 = vmul.f32 %v2356, %v2266
    %v2361 = vmul.f32 %v2356, %v2359
    %2363 = vrot.lane.b32.xlu0 %v2361, 64
    %v2364 = vpop.permute.xlu0 %2363
    %v2366 = vadd.f32 %v2360, %v2364
    %v2367 = vtanh.pop %v2366
    %v2368 = vmul.f32 %v2358, %v2367
    %2370 = vrot.lane.b32.xlu0 %v2368, 64
    %v2371 = vpop.permute.xlu0 %2370
    %v2372 = vsel %vm256, %v2371, 0
    %2374 = vmatprep.subr.mxu0 %v2159
    %2375 = vmatpush1.msra.mxu0 %v2158
    %2376 = vmatprep.subr.mxu0 %v2161
    %2377 = vmatpush1.msra.mxu0 %v2160
    %2378 = vmatprep.subr.mxu0 %v2163
    %2379 = vmatpush1.msra.mxu0 %v2162
    %2380 = vmatprep.subr.mxu0 %v2165
    %2381 = vmatpush1.msra.mxu0 %v2164
    %2382 = vmatprep.subr.mxu0 %v2167
    %2383 = vmatpush1.msra.mxu0 %v2166
    %2384 = vmatprep.subr.mxu0 %v2169
    %2385 = vmatpush1.msra.mxu0 %v2168
    %2386 = vmatprep.subr.mxu0 %v2171
    %2387 = vmatpush1.msra.mxu0 %v2170
    %2388 = vmatprep.subr.mxu0 %v2173
    %2389 = vmatpush1.msra.mxu0 %v2172
    %2390 = vmatprep.subr.mxu0 0.0
    %2391 = vmatpush1.msra.mxu0 0.0
    %2392 = vmatprep.subr.mxu0 0.0
    %2393 = vmatpush1.msra.mxu0 0.0
    %2394 = vmatprep.subr.mxu0 0.0
    %2395 = vmatpush1.msra.mxu0 0.0
    %2396 = vmatprep.subr.mxu0 0.0
    %2397 = vmatpush1.msra.mxu0 0.0
    %2398 = vmatprep.subr.mxu0 0.0
    %2399 = vmatpush1.msra.mxu0 0.0
    %2400 = vmatprep.subr.mxu0 0.0
    %2401 = vmatpush1.msra.mxu0 0.0
    %2402 = vmatprep.subr.mxu0 0.0
    %2403 = vmatpush1.msra.mxu0 0.0
    %2404 = vmatprep.subr.mxu0 0.0
    %2405 = vmatpush1.msra.mxu0 0.0
    %2406 = vmatprep.subr.mxu0 0.0
    %2407 = vmatpush1.msra.mxu0 0.0
    %2408 = vmatprep.subr.mxu0 0.0
    %2409 = vmatpush1.msra.mxu0 0.0
    %2410 = vmatprep.subr.mxu0 0.0
    %2411 = vmatpush1.msra.mxu0 0.0
    %2412 = vmatprep.subr.mxu0 0.0
    %2413 = vmatpush1.msra.mxu0 0.0
    %2414 = vmatprep.subr.mxu0 0.0
    %2415 = vmatpush1.msra.mxu0 0.0
    %2416 = vmatprep.subr.mxu0 0.0
    %2417 = vmatpush1.msra.mxu0 0.0
    %2418 = vmatprep.subr.mxu0 0.0
    %2419 = vmatpush1.msra.mxu0 0.0
    %2420 = vmatprep.subr.mxu0 0.0
    %2421 = vmatpush1.msra.mxu0 0.0
    %2422 = vmatprep.subr.mxu0 0.0
    %2423 = vmatpush1.msra.mxu0 0.0
    %2424 = vmatprep.subr.mxu0 0.0
    %2425 = vmatpush1.msra.mxu0 0.0
    %2426 = vmatprep.subr.mxu0 0.0
    %2427 = vmatpush1.msra.mxu0 0.0
    %2428 = vmatprep.subr.mxu0 0.0
    %2429 = vmatpush1.msra.mxu0 0.0
    %2430 = vmatprep.subr.mxu0 0.0
    %2431 = vmatpush1.msra.mxu0 0.0
    %2432 = vmatprep.subr.mxu0 0.0
    %2433 = vmatpush1.msra.mxu0 0.0
    %2434 = vmatprep.subr.mxu0 0.0
    %2435 = vmatpush1.msra.mxu0 0.0
    %2436 = vmatprep.subr.mxu0 0.0
    %2437 = vmatpush1.msra.mxu0 0.0
    %2438 = vmatprep.mubr.f32.mxu0 0.0
    %2439 = vmatmul.mubr.f32.gmra.mrb[0].mxu0 %v2372
    %v2440 = vpop.f32.mrb[0].mxu0
    %v2441 = vadd.f32 0.0, %v2440
    %v2442 = vpop.f32.mrb[0].mxu0
    %v2443 = vadd.f32 0.0, %v2442
    %2444 = vdwg.mxu0
    %v2445 = vadd.f32 %v2124, %v2441
    %v2446 = vadd.f32 %v2126, %v2443
    %v2447 = vxor.u32 %v2445, 2147483648
    %v2448 = vxor.u32 %v2446, 2147483648
    %v2449 = vmul.f32 %v2447, 1.442695
    %v2450 = vpow.pop %v2449
    %v2451 = vmul.f32 %v2448, 1.442695
    %v2452 = vpow.pop %v2451
    %v2453 = vadd.f32 %v2450, 1.0
    %v2454 = vadd.f32 %v2452, 1.0
    %v2455 = vrcp.pop %v2453
    %v2456 = vmul.f32 1.0, %v2455
    %v2457 = vrcp.pop %v2454
    %v2458 = vmul.f32 1.0, %v2457
    %v2459 = vtanh.pop %v2446
    %v2460 = vmul.f32 %v2456, %v2366
    %v2461 = vmul.f32 %v2456, %v2459
    %2463 = vrot.lane.b32.xlu0 %v2461, 64
    %v2464 = vpop.permute.xlu0 %2463
    %v2466 = vadd.f32 %v2460, %v2464
    %v2467 = vtanh.pop %v2466
    %v2468 = vmul.f32 %v2458, %v2467
    %2470 = vrot.lane.b32.xlu0 %v2468, 64
    %v2471 = vpop.permute.xlu0 %2470
    %v2472 = vsel %vm256, %v2471, 0
    %2474 = vmatprep.subr.mxu0 %v2159
    %2475 = vmatpush1.msra.mxu0 %v2158
    %2476 = vmatprep.subr.mxu0 %v2161
    %2477 = vmatpush1.msra.mxu0 %v2160
    %2478 = vmatprep.subr.mxu0 %v2163
    %2479 = vmatpush1.msra.mxu0 %v2162
    %2480 = vmatprep.subr.mxu0 %v2165
    %2481 = vmatpush1.msra.mxu0 %v2164
    %2482 = vmatprep.subr.mxu0 %v2167
    %2483 = vmatpush1.msra.mxu0 %v2166
    %2484 = vmatprep.subr.mxu0 %v2169
    %2485 = vmatpush1.msra.mxu0 %v2168
    %2486 = vmatprep.subr.mxu0 %v2171
    %2487 = vmatpush1.msra.mxu0 %v2170
    %2488 = vmatprep.subr.mxu0 %v2173
    %2489 = vmatpush1.msra.mxu0 %v2172
    %2490 = vmatprep.subr.mxu0 0.0
    %2491 = vmatpush1.msra.mxu0 0.0
    %2492 = vmatprep.subr.mxu0 0.0
    %2493 = vmatpush1.msra.mxu0 0.0
    %2494 = vmatprep.subr.mxu0 0.0
    %2495 = vmatpush1.msra.mxu0 0.0
    %2496 = vmatprep.subr.mxu0 0.0
    %2497 = vmatpush1.msra.mxu0 0.0
    %2498 = vmatprep.subr.mxu0 0.0
    %2499 = vmatpush1.msra.mxu0 0.0
    %2500 = vmatprep.subr.mxu0 0.0
    %2501 = vmatpush1.msra.mxu0 0.0
    %2502 = vmatprep.subr.mxu0 0.0
    %2503 = vmatpush1.msra.mxu0 0.0
    %2504 = vmatprep.subr.mxu0 0.0
    %2505 = vmatpush1.msra.mxu0 0.0
    %2506 = vmatprep.subr.mxu0 0.0
    %2507 = vmatpush1.msra.mxu0 0.0
    %2508 = vmatprep.subr.mxu0 0.0
    %2509 = vmatpush1.msra.mxu0 0.0
    %2510 = vmatprep.subr.mxu0 0.0
    %2511 = vmatpush1.msra.mxu0 0.0
    %2512 = vmatprep.subr.mxu0 0.0
    %2513 = vmatpush1.msra.mxu0 0.0
    %2514 = vmatprep.subr.mxu0 0.0
    %2515 = vmatpush1.msra.mxu0 0.0
    %2516 = vmatprep.subr.mxu0 0.0
    %2517 = vmatpush1.msra.mxu0 0.0
    %2518 = vmatprep.subr.mxu0 0.0
    %2519 = vmatpush1.msra.mxu0 0.0
    %2520 = vmatprep.subr.mxu0 0.0
    %2521 = vmatpush1.msra.mxu0 0.0
    %2522 = vmatprep.subr.mxu0 0.0
    %2523 = vmatpush1.msra.mxu0 0.0
    %2524 = vmatprep.subr.mxu0 0.0
    %2525 = vmatpush1.msra.mxu0 0.0
    %2526 = vmatprep.subr.mxu0 0.0
    %2527 = vmatpush1.msra.mxu0 0.0
    %2528 = vmatprep.subr.mxu0 0.0
    %2529 = vmatpush1.msra.mxu0 0.0
    %2530 = vmatprep.subr.mxu0 0.0
    %2531 = vmatpush1.msra.mxu0 0.0
    %2532 = vmatprep.subr.mxu0 0.0
    %2533 = vmatpush1.msra.mxu0 0.0
    %2534 = vmatprep.subr.mxu0 0.0
    %2535 = vmatpush1.msra.mxu0 0.0
    %2536 = vmatprep.subr.mxu0 0.0
    %2537 = vmatpush1.msra.mxu0 0.0
    %2538 = vmatprep.mubr.f32.mxu0 0.0
    %2539 = vmatmul.mubr.f32.gmra.mrb[0].mxu0 %v2472
    %v2540 = vpop.f32.mrb[0].mxu0
    %v2541 = vadd.f32 0.0, %v2540
    %v2542 = vpop.f32.mrb[0].mxu0
    %v2543 = vadd.f32 0.0, %v2542
    %2544 = vdwg.mxu0
    %v2545 = vadd.f32 %v2130, %v2541
    %v2546 = vadd.f32 %v2132, %v2543
    %v2547 = vxor.u32 %v2545, 2147483648
    %v2548 = vxor.u32 %v2546, 2147483648
    %v2549 = vmul.f32 %v2547, 1.442695
    %v2550 = vpow.pop %v2549
    %v2551 = vmul.f32 %v2548, 1.442695
    %v2552 = vpow.pop %v2551
    %v2553 = vadd.f32 %v2550, 1.0
    %v2554 = vadd.f32 %v2552, 1.0
    %v2555 = vrcp.pop %v2553
    %v2556 = vmul.f32 1.0, %v2555
    %v2557 = vrcp.pop %v2554
    %v2558 = vmul.f32 1.0, %v2557
    %v2559 = vtanh.pop %v2546
    %v2560 = vmul.f32 %v2556, %v2466
    %v2561 = vmul.f32 %v2556, %v2559
    %2563 = vrot.lane.b32.xlu0 %v2561, 64
    %v2564 = vpop.permute.xlu0 %2563
    %v2566 = vadd.f32 %v2560, %v2564
    %v2567 = vtanh.pop %v2566
    %v2568 = vmul.f32 %v2558, %v2567
    %2570 = vrot.lane.b32.xlu0 %v2568, 64
    %v2571 = vpop.permute.xlu0 %2570
    %v2572 = vsel %vm256, %v2571, 0
    %2574 = vmatprep.subr.mxu0 %v2159
    %2575 = vmatpush1.msra.mxu0 %v2158
    %2576 = vmatprep.subr.mxu0 %v2161
    %2577 = vmatpush1.msra.mxu0 %v2160
    %2578 = vmatprep.subr.mxu0 %v2163
    %2579 = vmatpush1.msra.mxu0 %v2162
    %2580 = vmatprep.subr.mxu0 %v2165
    %2581 = vmatpush1.msra.mxu0 %v2164
    %2582 = vmatprep.subr.mxu0 %v2167
    %2583 = vmatpush1.msra.mxu0 %v2166
    %2584 = vmatprep.subr.mxu0 %v2169
    %2585 = vmatpush1.msra.mxu0 %v2168
    %2586 = vmatprep.subr.mxu0 %v2171
    %2587 = vmatpush1.msra.mxu0 %v2170
    %2588 = vmatprep.subr.mxu0 %v2173
    %2589 = vmatpush1.msra.mxu0 %v2172
    %2590 = vmatprep.subr.mxu0 0.0
    %2591 = vmatpush1.msra.mxu0 0.0
    %2592 = vmatprep.subr.mxu0 0.0
    %2593 = vmatpush1.msra.mxu0 0.0
    %2594 = vmatprep.subr.mxu0 0.0
    %2595 = vmatpush1.msra.mxu0 0.0
    %2596 = vmatprep.subr.mxu0 0.0
    %2597 = vmatpush1.msra.mxu0 0.0
    %2598 = vmatprep.subr.mxu0 0.0
    %2599 = vmatpush1.msra.mxu0 0.0
    %2600 = vmatprep.subr.mxu0 0.0
    %2601 = vmatpush1.msra.mxu0 0.0
    %2602 = vmatprep.subr.mxu0 0.0
    %2603 = vmatpush1.msra.mxu0 0.0
    %2604 = vmatprep.subr.mxu0 0.0
    %2605 = vmatpush1.msra.mxu0 0.0
    %2606 = vmatprep.subr.mxu0 0.0
    %2607 = vmatpush1.msra.mxu0 0.0
    %2608 = vmatprep.subr.mxu0 0.0
    %2609 = vmatpush1.msra.mxu0 0.0
    %2610 = vmatprep.subr.mxu0 0.0
    %2611 = vmatpush1.msra.mxu0 0.0
    %2612 = vmatprep.subr.mxu0 0.0
    %2613 = vmatpush1.msra.mxu0 0.0
    %2614 = vmatprep.subr.mxu0 0.0
    %2615 = vmatpush1.msra.mxu0 0.0
    %2616 = vmatprep.subr.mxu0 0.0
    %2617 = vmatpush1.msra.mxu0 0.0
    %2618 = vmatprep.subr.mxu0 0.0
    %2619 = vmatpush1.msra.mxu0 0.0
    %2620 = vmatprep.subr.mxu0 0.0
    %2621 = vmatpush1.msra.mxu0 0.0
    %2622 = vmatprep.subr.mxu0 0.0
    %2623 = vmatpush1.msra.mxu0 0.0
    %2624 = vmatprep.subr.mxu0 0.0
    %2625 = vmatpush1.msra.mxu0 0.0
    %2626 = vmatprep.subr.mxu0 0.0
    %2627 = vmatpush1.msra.mxu0 0.0
    %2628 = vmatprep.subr.mxu0 0.0
    %2629 = vmatpush1.msra.mxu0 0.0
    %2630 = vmatprep.subr.mxu0 0.0
    %2631 = vmatpush1.msra.mxu0 0.0
    %2632 = vmatprep.subr.mxu0 0.0
    %2633 = vmatpush1.msra.mxu0 0.0
    %2634 = vmatprep.subr.mxu0 0.0
    %2635 = vmatpush1.msra.mxu0 0.0
    %2636 = vmatprep.subr.mxu0 0.0
    %2637 = vmatpush1.msra.mxu0 0.0
    %2638 = vmatprep.mubr.f32.mxu0 0.0
    %2639 = vmatmul.mubr.f32.gmra.mrb[0].mxu0 %v2572
    %v2640 = vpop.f32.mrb[0].mxu0
    %v2641 = vadd.f32 0.0, %v2640
    %v2642 = vpop.f32.mrb[0].mxu0
    %v2643 = vadd.f32 0.0, %v2642
    %2644 = vdwg.mxu0
    %v2645 = vadd.f32 %v2136, %v2641
    %v2646 = vadd.f32 %v2138, %v2643
    %v2647 = vxor.u32 %v2645, 2147483648
    %v2648 = vxor.u32 %v2646, 2147483648
    %v2649 = vmul.f32 %v2647, 1.442695
    %v2650 = vpow.pop %v2649
    %v2651 = vmul.f32 %v2648, 1.442695
    %v2652 = vpow.pop %v2651
    %v2653 = vadd.f32 %v2650, 1.0
    %v2654 = vadd.f32 %v2652, 1.0
    %v2655 = vrcp.pop %v2653
    %v2656 = vmul.f32 1.0, %v2655
    %v2657 = vrcp.pop %v2654
    %v2658 = vmul.f32 1.0, %v2657
    %v2659 = vtanh.pop %v2646
    %v2660 = vmul.f32 %v2656, %v2566
    %v2661 = vmul.f32 %v2656, %v2659
    %2663 = vrot.lane.b32.xlu0 %v2661, 64
    %v2664 = vpop.permute.xlu0 %2663
    %v2666 = vadd.f32 %v2660, %v2664
    %v2667 = vtanh.pop %v2666
    %v2668 = vmul.f32 %v2658, %v2667
    %2670 = vrot.lane.b32.xlu0 %v2668, 64
    %v2671 = vpop.permute.xlu0 %2670
    %v2672 = vsel %vm256, %v2671, 0
    %2674 = vmatprep.subr.mxu0 %v2159
    %2675 = vmatpush1.msra.mxu0 %v2158
    %2676 = vmatprep.subr.mxu0 %v2161
    %2677 = vmatpush1.msra.mxu0 %v2160
    %2678 = vmatprep.subr.mxu0 %v2163
    %2679 = vmatpush1.msra.mxu0 %v2162
    %2680 = vmatprep.subr.mxu0 %v2165
    %2681 = vmatpush1.msra.mxu0 %v2164
    %2682 = vmatprep.subr.mxu0 %v2167
    %2683 = vmatpush1.msra.mxu0 %v2166
    %2684 = vmatprep.subr.mxu0 %v2169
    %2685 = vmatpush1.msra.mxu0 %v2168
    %2686 = vmatprep.subr.mxu0 %v2171
    %2687 = vmatpush1.msra.mxu0 %v2170
    %2688 = vmatprep.subr.mxu0 %v2173
    %2689 = vmatpush1.msra.mxu0 %v2172
    %2690 = vmatprep.subr.mxu0 0.0
    %2691 = vmatpush1.msra.mxu0 0.0
    %2692 = vmatprep.subr.mxu0 0.0
    %2693 = vmatpush1.msra.mxu0 0.0
    %2694 = vmatprep.subr.mxu0 0.0
    %2695 = vmatpush1.msra.mxu0 0.0
    %2696 = vmatprep.subr.mxu0 0.0
    %2697 = vmatpush1.msra.mxu0 0.0
    %2698 = vmatprep.subr.mxu0 0.0
    %2699 = vmatpush1.msra.mxu0 0.0
    %2700 = vmatprep.subr.mxu0 0.0
    %2701 = vmatpush1.msra.mxu0 0.0
    %2702 = vmatprep.subr.mxu0 0.0
    %2703 = vmatpush1.msra.mxu0 0.0
    %2704 = vmatprep.subr.mxu0 0.0
    %2705 = vmatpush1.msra.mxu0 0.0
    %2706 = vmatprep.subr.mxu0 0.0
    %2707 = vmatpush1.msra.mxu0 0.0
    %2708 = vmatprep.subr.mxu0 0.0
    %2709 = vmatpush1.msra.mxu0 0.0
    %2710 = vmatprep.subr.mxu0 0.0
    %2711 = vmatpush1.msra.mxu0 0.0
    %2712 = vmatprep.subr.mxu0 0.0
    %2713 = vmatpush1.msra.mxu0 0.0
    %2714 = vmatprep.subr.mxu0 0.0
    %2715 = vmatpush1.msra.mxu0 0.0
    %2716 = vmatprep.subr.mxu0 0.0
    %2717 = vmatpush1.msra.mxu0 0.0
    %2718 = vmatprep.subr.mxu0 0.0
    %2719 = vmatpush1.msra.mxu0 0.0
    %2720 = vmatprep.subr.mxu0 0.0
    %2721 = vmatpush1.msra.mxu0 0.0
    %2722 = vmatprep.subr.mxu0 0.0
    %2723 = vmatpush1.msra.mxu0 0.0
    %2724 = vmatprep.subr.mxu0 0.0
    %2725 = vmatpush1.msra.mxu0 0.0
    %2726 = vmatprep.subr.mxu0 0.0
    %2727 = vmatpush1.msra.mxu0 0.0
    %2728 = vmatprep.subr.mxu0 0.0
    %2729 = vmatpush1.msra.mxu0 0.0
    %2730 = vmatprep.subr.mxu0 0.0
    %2731 = vmatpush1.msra.mxu0 0.0
    %2732 = vmatprep.subr.mxu0 0.0
    %2733 = vmatpush1.msra.mxu0 0.0
    %2734 = vmatprep.subr.mxu0 0.0
    %2735 = vmatpush1.msra.mxu0 0.0
    %2736 = vmatprep.subr.mxu0 0.0
    %2737 = vmatpush1.msra.mxu0 0.0
    %2738 = vmatprep.mubr.f32.mxu0 0.0
    %2739 = vmatmul.mubr.f32.gmra.mrb[0].mxu0 %v2672
    %v2740 = vpop.f32.mrb[0].mxu0
    %v2741 = vadd.f32 0.0, %v2740
    %v2742 = vpop.f32.mrb[0].mxu0
    %v2743 = vadd.f32 0.0, %v2742
    %2744 = vdwg.mxu0
    %v2745 = vadd.f32 %v2142, %v2741
    %v2746 = vadd.f32 %v2144, %v2743
    %v2747 = vxor.u32 %v2745, 2147483648
    %v2748 = vxor.u32 %v2746, 2147483648
    %v2749 = vmul.f32 %v2747, 1.442695
    %v2750 = vpow.pop %v2749
    %v2751 = vmul.f32 %v2748, 1.442695
    %v2752 = vpow.pop %v2751
    %v2753 = vadd.f32 %v2750, 1.0
    %v2754 = vadd.f32 %v2752, 1.0
    %v2755 = vrcp.pop %v2753
    %v2756 = vmul.f32 1.0, %v2755
    %v2757 = vrcp.pop %v2754
    %v2758 = vmul.f32 1.0, %v2757
    %v2759 = vtanh.pop %v2746
    %v2760 = vmul.f32 %v2756, %v2666
    %v2761 = vmul.f32 %v2756, %v2759
    %2763 = vrot.lane.b32.xlu0 %v2761, 64
    %v2764 = vpop.permute.xlu0 %2763
    %v2766 = vadd.f32 %v2760, %v2764
    %v2767 = vtanh.pop %v2766
    %v2768 = vmul.f32 %v2758, %v2767
    %2770 = vrot.lane.b32.xlu0 %v2768, 64
    %v2771 = vpop.permute.xlu0 %2770
    %v2772 = vsel %vm256, %v2771, 0
    %2774 = vmatprep.subr.mxu0 %v2159
    %2775 = vmatpush1.msra.mxu0 %v2158
    %2776 = vmatprep.subr.mxu0 %v2161
    %2777 = vmatpush1.msra.mxu0 %v2160
    %2778 = vmatprep.subr.mxu0 %v2163
    %2779 = vmatpush1.msra.mxu0 %v2162
    %2780 = vmatprep.subr.mxu0 %v2165
    %2781 = vmatpush1.msra.mxu0 %v2164
    %2782 = vmatprep.subr.mxu0 %v2167
    %2783 = vmatpush1.msra.mxu0 %v2166
    %2784 = vmatprep.subr.mxu0 %v2169
    %2785 = vmatpush1.msra.mxu0 %v2168
    %2786 = vmatprep.subr.mxu0 %v2171
    %2787 = vmatpush1.msra.mxu0 %v2170
    %2788 = vmatprep.subr.mxu0 %v2173
    %2789 = vmatpush1.msra.mxu0 %v2172
    %2790 = vmatprep.subr.mxu0 0.0
    %2791 = vmatpush1.msra.mxu0 0.0
    %2792 = vmatprep.subr.mxu0 0.0
    %2793 = vmatpush1.msra.mxu0 0.0
    %2794 = vmatprep.subr.mxu0 0.0
    %2795 = vmatpush1.msra.mxu0 0.0
    %2796 = vmatprep.subr.mxu0 0.0
    %2797 = vmatpush1.msra.mxu0 0.0
    %2798 = vmatprep.subr.mxu0 0.0
    %2799 = vmatpush1.msra.mxu0 0.0
    %2800 = vmatprep.subr.mxu0 0.0
    %2801 = vmatpush1.msra.mxu0 0.0
    %2802 = vmatprep.subr.mxu0 0.0
    %2803 = vmatpush1.msra.mxu0 0.0
    %2804 = vmatprep.subr.mxu0 0.0
    %2805 = vmatpush1.msra.mxu0 0.0
    %2806 = vmatprep.subr.mxu0 0.0
    %2807 = vmatpush1.msra.mxu0 0.0
    %2808 = vmatprep.subr.mxu0 0.0
    %2809 = vmatpush1.msra.mxu0 0.0
    %2810 = vmatprep.subr.mxu0 0.0
    %2811 = vmatpush1.msra.mxu0 0.0
    %2812 = vmatprep.subr.mxu0 0.0
    %2813 = vmatpush1.msra.mxu0 0.0
    %2814 = vmatprep.subr.mxu0 0.0
    %2815 = vmatpush1.msra.mxu0 0.0
    %2816 = vmatprep.subr.mxu0 0.0
    %2817 = vmatpush1.msra.mxu0 0.0
    %2818 = vmatprep.subr.mxu0 0.0
    %2819 = vmatpush1.msra.mxu0 0.0
    %2820 = vmatprep.subr.mxu0 0.0
    %2821 = vmatpush1.msra.mxu0 0.0
    %2822 = vmatprep.subr.mxu0 0.0
    %2823 = vmatpush1.msra.mxu0 0.0
    %2824 = vmatprep.subr.mxu0 0.0
    %2825 = vmatpush1.msra.mxu0 0.0
    %2826 = vmatprep.subr.mxu0 0.0
    %2827 = vmatpush1.msra.mxu0 0.0
    %2828 = vmatprep.subr.mxu0 0.0
    %2829 = vmatpush1.msra.mxu0 0.0
    %2830 = vmatprep.subr.mxu0 0.0
    %2831 = vmatpush1.msra.mxu0 0.0
    %2832 = vmatprep.subr.mxu0 0.0
    %2833 = vmatpush1.msra.mxu0 0.0
    %2834 = vmatprep.subr.mxu0 0.0
    %2835 = vmatpush1.msra.mxu0 0.0
    %2836 = vmatprep.subr.mxu0 0.0
    %2837 = vmatpush1.msra.mxu0 0.0
    %2838 = vmatprep.mubr.f32.mxu0 0.0
    %2839 = vmatmul.mubr.f32.gmra.mrb[0].mxu0 %v2772
    %v2840 = vpop.f32.mrb[0].mxu0
    %v2841 = vadd.f32 0.0, %v2840
    %v2842 = vpop.f32.mrb[0].mxu0
    %v2843 = vadd.f32 0.0, %v2842
    %2844 = vdwg.mxu0
    %v2845 = vadd.f32 %v2148, %v2841
    %v2846 = vadd.f32 %v2150, %v2843
    %v2847 = vxor.u32 %v2845, 2147483648
    %v2848 = vxor.u32 %v2846, 2147483648
    %v2849 = vmul.f32 %v2847, 1.442695
    %v2850 = vpow.pop %v2849
    %v2851 = vmul.f32 %v2848, 1.442695
    %v2852 = vpow.pop %v2851
    %v2853 = vadd.f32 %v2850, 1.0
    %v2854 = vadd.f32 %v2852, 1.0
    %v2855 = vrcp.pop %v2853
    %v2856 = vmul.f32 1.0, %v2855
    %v2857 = vrcp.pop %v2854
    %v2858 = vmul.f32 1.0, %v2857
    %v2859 = vtanh.pop %v2846
    %v2860 = vmul.f32 %v2856, %v2766
    %v2861 = vmul.f32 %v2856, %v2859
    %2863 = vrot.lane.b32.xlu0 %v2861, 64
    %v2864 = vpop.permute.xlu0 %2863
    %v2866 = vadd.f32 %v2860, %v2864
    %v2867 = vtanh.pop %v2866
    %v2868 = vmul.f32 %v2858, %v2867
    %2870 = vrot.lane.b32.xlu0 %v2868, 64
    %v2871 = vpop.permute.xlu0 %2870
    %v2872 = vsel %vm256, %v2871, 0
    %2874 = vmatprep.subr.mxu0 %v2159
    %2875 = vmatpush1.msra.mxu0 %v2158
    %2876 = vmatprep.subr.mxu0 %v2161
    %2877 = vmatpush1.msra.mxu0 %v2160
    %2878 = vmatprep.subr.mxu0 %v2163
    %2879 = vmatpush1.msra.mxu0 %v2162
    %2880 = vmatprep.subr.mxu0 %v2165
    %2881 = vmatpush1.msra.mxu0 %v2164
    %2882 = vmatprep.subr.mxu0 %v2167
    %2883 = vmatpush1.msra.mxu0 %v2166
    %2884 = vmatprep.subr.mxu0 %v2169
    %2885 = vmatpush1.msra.mxu0 %v2168
    %2886 = vmatprep.subr.mxu0 %v2171
    %2887 = vmatpush1.msra.mxu0 %v2170
    %2888 = vmatprep.subr.mxu0 %v2173
    %2889 = vmatpush1.msra.mxu0 %v2172
    %2890 = vmatprep.subr.mxu0 0.0
    %2891 = vmatpush1.msra.mxu0 0.0
    %2892 = vmatprep.subr.mxu0 0.0
    %2893 = vmatpush1.msra.mxu0 0.0
    %2894 = vmatprep.subr.mxu0 0.0
    %2895 = vmatpush1.msra.mxu0 0.0
    %2896 = vmatprep.subr.mxu0 0.0
    %2897 = vmatpush1.msra.mxu0 0.0
    %2898 = vmatprep.subr.mxu0 0.0
    %2899 = vmatpush1.msra.mxu0 0.0
    %2900 = vmatprep.subr.mxu0 0.0
    %2901 = vmatpush1.msra.mxu0 0.0
    %2902 = vmatprep.subr.mxu0 0.0
    %2903 = vmatpush1.msra.mxu0 0.0
    %2904 = vmatprep.subr.mxu0 0.0
    %2905 = vmatpush1.msra.mxu0 0.0
    %2906 = vmatprep.subr.mxu0 0.0
    %2907 = vmatpush1.msra.mxu0 0.0
    %2908 = vmatprep.subr.mxu0 0.0
    %2909 = vmatpush1.msra.mxu0 0.0
    %2910 = vmatprep.subr.mxu0 0.0
    %2911 = vmatpush1.msra.mxu0 0.0
    %2912 = vmatprep.subr.mxu0 0.0
    %2913 = vmatpush1.msra.mxu0 0.0
    %2914 = vmatprep.subr.mxu0 0.0
    %2915 = vmatpush1.msra.mxu0 0.0
    %2916 = vmatprep.subr.mxu0 0.0
    %2917 = vmatpush1.msra.mxu0 0.0
    %2918 = vmatprep.subr.mxu0 0.0
    %2919 = vmatpush1.msra.mxu0 0.0
    %2920 = vmatprep.subr.mxu0 0.0
    %2921 = vmatpush1.msra.mxu0 0.0
    %2922 = vmatprep.subr.mxu0 0.0
    %2923 = vmatpush1.msra.mxu0 0.0
    %2924 = vmatprep.subr.mxu0 0.0
    %2925 = vmatpush1.msra.mxu0 0.0
    %2926 = vmatprep.subr.mxu0 0.0
    %2927 = vmatpush1.msra.mxu0 0.0
    %2928 = vmatprep.subr.mxu0 0.0
    %2929 = vmatpush1.msra.mxu0 0.0
    %2930 = vmatprep.subr.mxu0 0.0
    %2931 = vmatpush1.msra.mxu0 0.0
    %2932 = vmatprep.subr.mxu0 0.0
    %2933 = vmatpush1.msra.mxu0 0.0
    %2934 = vmatprep.subr.mxu0 0.0
    %2935 = vmatpush1.msra.mxu0 0.0
    %2936 = vmatprep.subr.mxu0 0.0
    %2937 = vmatpush1.msra.mxu0 0.0
    %2938 = vmatprep.mubr.f32.mxu0 0.0
    %2939 = vmatmul.mubr.f32.gmra.mrb[0].mxu0 %v2872
    %v2940 = vpop.f32.mrb[0].mxu0
    %v2941 = vadd.f32 0.0, %v2940
    %v2942 = vpop.f32.mrb[0].mxu0
    %v2943 = vadd.f32 0.0, %v2942
    %2944 = vdwg.mxu0
    %v2945 = vadd.f32 %v2154, %v2941
    %v2946 = vadd.f32 %v2156, %v2943
    %v2947 = vxor.u32 %v2945, 2147483648
    %v2948 = vxor.u32 %v2946, 2147483648
    %v2949 = vmul.f32 %v2947, 1.442695
    %v2950 = vpow.pop %v2949
    %v2951 = vmul.f32 %v2948, 1.442695
    %v2952 = vpow.pop %v2951
    %v2953 = vadd.f32 %v2950, 1.0
    %v2954 = vadd.f32 %v2952, 1.0
    %v2955 = vrcp.pop %v2953
    %v2956 = vmul.f32 1.0, %v2955
    %v2957 = vrcp.pop %v2954
    %v2958 = vmul.f32 1.0, %v2957
    %v2959 = vtanh.pop %v2946
    %v2960 = vmul.f32 %v2956, %v2866
    %v2961 = vmul.f32 %v2956, %v2959
    %2963 = vrot.lane.b32.xlu0 %v2961, 64
    %v2964 = vpop.permute.xlu0 %2963
    %v2966 = vadd.f32 %v2960, %v2964
    %v2967 = vtanh.pop %v2966
    %v2968 = vmul.f32 %v2958, %v2967
    %v2969 = vld [vmem:[%s10] sm:$0xff]
    %v2970 = vld [vmem:[%s10 + $0x8] sm:$0xff]
    %v2971 = vld [vmem:[%s10 + $0x10] sm:$0xff]
    %v2972 = vld [vmem:[%s10 + $0x18] sm:$0xff]
    %v2973 = vld [vmem:[%s10 + $0x20] sm:$0xff]
    %v2974 = vld [vmem:[%s10 + $0x28] sm:$0xff]
    %v2975 = vld [vmem:[%s10 + $0x30] sm:$0xff]
    %v2976 = vld [vmem:[%s10 + $0x38] sm:$0xff]
    %v2977 = vld [vmem:[#allocation13] sm:$0x1]
    %v2979 = vlaneseq
    %v2980 = vshrl.u32 %v2979, 7
    %v2981 = vsub.s32 0, %v2980
    %v2982 = vrot.slane %v2977, %v2981
    %2985 = vrot.lane.b32.xlu0 %v2968, 64
    %v2986 = vpop.permute.xlu0 %2985
    %v2987 = vsel %vm256, %v2986, 0
    %2989 = vmatprep.subr.mxu0 0.0
    %2990 = vmatpush1.msra.mxu0 %v2969
    %2991 = vmatprep.subr.mxu0 0.0
    %2992 = vmatpush1.msra.mxu0 %v2970
    %2993 = vmatprep.subr.mxu0 0.0
    %2994 = vmatpush1.msra.mxu0 %v2971
    %2995 = vmatprep.subr.mxu0 0.0
    %2996 = vmatpush1.msra.mxu0 %v2972
    %2997 = vmatprep.subr.mxu0 0.0
    %2998 = vmatpush1.msra.mxu0 %v2973
    %2999 = vmatprep.subr.mxu0 0.0
    %3000 = vmatpush1.msra.mxu0 %v2974
    %3001 = vmatprep.subr.mxu0 0.0
    %3002 = vmatpush1.msra.mxu0 %v2975
    %3003 = vmatprep.subr.mxu0 0.0
    %3004 = vmatpush1.msra.mxu0 %v2976
    %3005 = vmatprep.subr.mxu0 0.0
    %3006 = vmatpush1.msra.mxu0 0.0
    %3007 = vmatprep.subr.mxu0 0.0
    %3008 = vmatpush1.msra.mxu0 0.0
    %3009 = vmatprep.subr.mxu0 0.0
    %3010 = vmatpush1.msra.mxu0 0.0
    %3011 = vmatprep.subr.mxu0 0.0
    %3012 = vmatpush1.msra.mxu0 0.0
    %3013 = vmatprep.subr.mxu0 0.0
    %3014 = vmatpush1.msra.mxu0 0.0
    %3015 = vmatprep.subr.mxu0 0.0
    %3016 = vmatpush1.msra.mxu0 0.0
    %3017 = vmatprep.subr.mxu0 0.0
    %3018 = vmatpush1.msra.mxu0 0.0
    %3019 = vmatprep.subr.mxu0 0.0
    %3020 = vmatpush1.msra.mxu0 0.0
    %3021 = vmatprep.subr.mxu0 0.0
    %3022 = vmatpush1.msra.mxu0 0.0
    %3023 = vmatprep.subr.mxu0 0.0
    %3024 = vmatpush1.msra.mxu0 0.0
    %3025 = vmatprep.subr.mxu0 0.0
    %3026 = vmatpush1.msra.mxu0 0.0
    %3027 = vmatprep.subr.mxu0 0.0
    %3028 = vmatpush1.msra.mxu0 0.0
    %3029 = vmatprep.subr.mxu0 0.0
    %3030 = vmatpush1.msra.mxu0 0.0
    %3031 = vmatprep.subr.mxu0 0.0
    %3032 = vmatpush1.msra.mxu0 0.0
    %3033 = vmatprep.subr.mxu0 0.0
    %3034 = vmatpush1.msra.mxu0 0.0
    %3035 = vmatprep.subr.mxu0 0.0
    %3036 = vmatpush1.msra.mxu0 0.0
    %3037 = vmatprep.subr.mxu0 0.0
    %3038 = vmatpush1.msra.mxu0 0.0
    %3039 = vmatprep.subr.mxu0 0.0
    %3040 = vmatpush1.msra.mxu0 0.0
    %3041 = vmatprep.subr.mxu0 0.0
    %3042 = vmatpush1.msra.mxu0 0.0
    %3043 = vmatprep.subr.mxu0 0.0
    %3044 = vmatpush1.msra.mxu0 0.0
    %3045 = vmatprep.subr.mxu0 0.0
    %3046 = vmatpush1.msra.mxu0 0.0
    %3047 = vmatprep.subr.mxu0 0.0
    %3048 = vmatpush1.msra.mxu0 0.0
    %3049 = vmatprep.subr.mxu0 0.0
    %3050 = vmatpush1.msra.mxu0 0.0
    %3051 = vmatprep.subr.mxu0 0.0
    %3052 = vmatpush1.msra.mxu0 0.0
    %3053 = vmatprep.mubr.f32.mxu0 0.0
    %3054 = vmatmul.mubr.f32.gmra.mrb[0].mxu0 %v2987
    %v3055 = vpop.f32.mrb[0].mxu0
    %v3056 = vadd.f32 %v2982, %v3055
    %v3057 = vpop.f32.mrb[0].mxu0
    %3058 = vdwg.mxu0
    %v3059 = vmax.f32 %v3056, 0.0
    %v3060 = vld [vmem:[%s12] sm:$0xff]
    %v3061 = vld [vmem:[%s12 + $0x8] sm:$0xff]
    %v3062 = vld [vmem:[%s12 + $0x10] sm:$0xff]
    %v3063 = vld [vmem:[%s12 + $0x18] sm:$0xff]
    %v3064 = vld [vmem:[#allocation2] sm:$0x1]
    %v3066 = vlaneseq
    %v3067 = vshrl.u32 %v3066, 7
    %v3068 = vsub.s32 0, %v3067
    %v3069 = vrot.slane %v3064, %v3068
    %vm3071 = vcmask 261120
    %v3073 = vsel %vm3071, %v3059, 0
    %3075 = vmatprep.subr.mxu0 0.0
    %3076 = vmatpush1.msra.mxu0 %v3060
    %3077 = vmatprep.subr.mxu0 0.0
    %3078 = vmatpush1.msra.mxu0 %v3061
    %3079 = vmatprep.subr.mxu0 0.0
    %3080 = vmatpush1.msra.mxu0 %v3062
    %3081 = vmatprep.subr.mxu0 0.0
    %3082 = vmatpush1.msra.mxu0 %v3063
    %3083 = vmatprep.subr.mxu0 0.0
    %3084 = vmatpush1.msra.mxu0 0.0
    %3085 = vmatprep.subr.mxu0 0.0
    %3086 = vmatpush1.msra.mxu0 0.0
    %3087 = vmatprep.subr.mxu0 0.0
    %3088 = vmatpush1.msra.mxu0 0.0
    %3089 = vmatprep.subr.mxu0 0.0
    %3090 = vmatpush1.msra.mxu0 0.0
    %3091 = vmatprep.subr.mxu0 0.0
    %3092 = vmatpush1.msra.mxu0 0.0
    %3093 = vmatprep.subr.mxu0 0.0
    %3094 = vmatpush1.msra.mxu0 0.0
    %3095 = vmatprep.subr.mxu0 0.0
    %3096 = vmatpush1.msra.mxu0 0.0
    %3097 = vmatprep.subr.mxu0 0.0
    %3098 = vmatpush1.msra.mxu0 0.0
    %3099 = vmatprep.subr.mxu0 0.0
    %3100 = vmatpush1.msra.mxu0 0.0
    %3101 = vmatprep.subr.mxu0 0.0
    %3102 = vmatpush1.msra.mxu0 0.0
    %3103 = vmatprep.subr.mxu0 0.0
    %3104 = vmatpush1.msra.mxu0 0.0
    %3105 = vmatprep.subr.mxu0 0.0
    %3106 = vmatpush1.msra.mxu0 0.0
    %3107 = vmatprep.subr.mxu0 0.0
    %3108 = vmatpush1.msra.mxu0 0.0
    %3109 = vmatprep.subr.mxu0 0.0
    %3110 = vmatpush1.msra.mxu0 0.0
    %3111 = vmatprep.subr.mxu0 0.0
    %3112 = vmatpush1.msra.mxu0 0.0
    %3113 = vmatprep.subr.mxu0 0.0
    %3114 = vmatpush1.msra.mxu0 0.0
    %3115 = vmatprep.subr.mxu0 0.0
    %3116 = vmatpush1.msra.mxu0 0.0
    %3117 = vmatprep.subr.mxu0 0.0
    %3118 = vmatpush1.msra.mxu0 0.0
    %3119 = vmatprep.subr.mxu0 0.0
    %3120 = vmatpush1.msra.mxu0 0.0
    %3121 = vmatprep.subr.mxu0 0.0
    %3122 = vmatpush1.msra.mxu0 0.0
    %3123 = vmatprep.subr.mxu0 0.0
    %3124 = vmatpush1.msra.mxu0 0.0
    %3125 = vmatprep.subr.mxu0 0.0
    %3126 = vmatpush1.msra.mxu0 0.0
    %3127 = vmatprep.subr.mxu0 0.0
    %3128 = vmatpush1.msra.mxu0 0.0
    %3129 = vmatprep.subr.mxu0 0.0
    %3130 = vmatpush1.msra.mxu0 0.0
    %3131 = vmatprep.subr.mxu0 0.0
    %3132 = vmatpush1.msra.mxu0 0.0
    %3133 = vmatprep.subr.mxu0 0.0
    %3134 = vmatpush1.msra.mxu0 0.0
    %3135 = vmatprep.subr.mxu0 0.0
    %3136 = vmatpush1.msra.mxu0 0.0
    %3137 = vmatprep.subr.mxu0 0.0
    %3138 = vmatpush1.msra.mxu0 0.0
    %3139 = vmatprep.mubr.f32.mxu0 0.0
    %3140 = vmatmul.mubr.f32.gmra.mrb[0].mxu0 %v3073
    %v3141 = vpop.f32.mrb[0].mxu0
    %v3142 = vadd.f32 %v3069, %v3141
    %v3143 = vpop.f32.mrb[0].mxu0
    %3144 = vdwg.mxu0
    %vm3145 = vcmask 7168
    %3146 = vst.msk [vmem:[%s14] sm:$0xff] %vm3145, %v3142
    // Predicated region
    $region86: #{lstm_predictor_forward.1} parent=1 // pred_check
      _
    $region87: #{lstm_predictor_forward.1} parent=1 // pred_check_branch
      %3148 = sbr.rel (0) target = $region89
    $region88: #{lstm_predictor_forward.1} parent=1 // pred_region
      _
    $region89: #{lstm_predictor_forward.1} parent=1 // pred_fallthru
      _
    // Predicated region
    $region90: #{lstm_predictor_forward.1} parent=1 // pred_check
      _
    $region91: #{lstm_predictor_forward.1} parent=1 // pred_check_branch
      %3150 = sbr.rel (0) target = $region93
    $region92: #{lstm_predictor_forward.1} parent=1 // pred_region
      _
    $region93: #{lstm_predictor_forward.1} parent=1 // pred_fallthru
      _
    %3151 = vsyncpa [#allocation4], 1
    %3152 = vsyncpa [#allocation6], 1
    %3153 = vsyncpa [#allocation9], 1
    %3154 = vsyncpa [#allocation12], 1

</llo_original>
